<compile_context>
chip_gen: v7x
topology: tpu7x:2x2x1
jax: 0.10.0
libtpu: 0.0.40
codegen_flags: <defaults>
</compile_context>

<pallas_src>
import functools
import math

import jax
import jax.numpy as jnp
from jax.experimental import pallas as pl
from jax.experimental.pallas import tpu as pltpu

LN_EPS = 1e-5


# ----------------------------- per-generation knobs -------------------------

def _device_kind() -> str:
    try:
        return jax.devices()[0].device_kind.lower()
    except Exception:  # pragma: no cover
        return ""


def _vmem_limit_bytes() -> int:
    kind = _device_kind()
    if "v7" in kind:
        # 64 MiB physical per TensorCore -> leave headroom for compiler scratch.
        return 48 * 1024 * 1024
    if "v6" in kind:
        # 128 MiB physical -> let big tiles + resident weights coexist.
        return 100 * 1024 * 1024
    # v5e and anything else.
    return 64 * 1024 * 1024


def _seq_tiles(n: int):
    """(TQ, TK) sequence tiles; smaller f32 score tiles off v6e."""
    kind = _device_kind()
    if "v6" in kind:
        prefs = (512, 256, 128)
    else:  # v7x (64 MiB VMEM) and v5e (f32 softmax / HBM bound)
        prefs = (256, 128)
    tq = next((t for t in prefs if n % t == 0), n)
    tk = next((t for t in prefs if n % t == 0), n)
    return tq, tk


# ----------------------------- elementwise helpers ---------------------------

def _layernorm(x, gamma, beta):
    # x: (T, D) f32, gamma/beta: (1, D) f32
    mu = jnp.mean(x, axis=-1, keepdims=True)
    var = jnp.mean((x - mu) ** 2, axis=-1, keepdims=True)
    return (x - mu) * jax.lax.rsqrt(var + LN_EPS) * gamma + beta


def _gelu_sigmoid(x):
    # QuickGELU from the reference module: x * sigmoid(1.702 * x)
    return x * jax.nn.sigmoid(1.702 * x)


# --------- kernel 1: pre-LN + fused QKV projection (head-major out) ---------

def qkv_kernel(x_ref, ln1_g_ref, ln1_b_ref, w_qkv_ref, b_qkv_ref,
               q_ref, k_ref, v_ref, *, n_head):
    TQ, D = x_ref.shape[1], x_ref.shape[2]
    dh = D // n_head

    x = x_ref[0].astype(jnp.float32)                       # (TQ, D)
    h = _layernorm(x, ln1_g_ref[...], ln1_b_ref[...]).astype(jnp.bfloat16)
    qkv = jnp.dot(h, w_qkv_ref[...],
                  preferred_element_type=jnp.float32) + b_qkv_ref[...]

    # Fold 1/sqrt(dh) into q once (removes H*TQ*TK mults per kv step).
    q = qkv[:, :D] * (1.0 / math.sqrt(dh))
    k = qkv[:, D:2 * D]
    v = qkv[:, 2 * D:]

    # Emit head-major (H, TQ, dh): relayout happens once here, never in the
    # attention hot loop.
    def head_major(t):
        return jnp.transpose(t.reshape(TQ, n_head, dh), (1, 0, 2))

    q_ref[0] = head_major(q).astype(q_ref.dtype)
    k_ref[0] = head_major(k).astype(k_ref.dtype)
    v_ref[0] = head_major(v).astype(v_ref.dtype)


# --------------- kernel 2: flash attention (heads batched) ------------------

def attn_kernel(q_ref, k_ref, v_ref, o_ref, m_sc, l_sc, acc_sc):
    kv = pl.program_id(2)

    @pl.when(kv == 0)
    def _():
        m_sc[...] = jnp.full_like(m_sc, -jnp.inf)
        l_sc[...] = jnp.zeros_like(l_sc)
        acc_sc[...] = jnp.zeros_like(acc_sc)

    q = q_ref[0]                                           # (H, TQ, dh) bf16, pre-scaled
    k = k_ref[0]                                           # (H, TK, dh) bf16
    v = v_ref[0]                                           # (H, TK, dh) bf16

    # scores: (H, TQ, TK), f32 accumulation on the MXU; no per-step reshapes.
    s = jnp.einsum('hqd,hkd->hqk', q, k, preferred_element_type=jnp.float32)

    m_prev = m_sc[...]                                     # (H, TQ, 1)
    m_new = jnp.maximum(m_prev, jnp.max(s, axis=-1, keepdims=True))
    alpha = jnp.exp(m_prev - m_new)
    p = jnp.exp(s - m_new)                                 # (H, TQ, TK) f32
    l_sc[...] = alpha * l_sc[...] + jnp.sum(p, axis=-1, keepdims=True)
    acc_sc[...] = alpha * acc_sc[...] + jnp.einsum(
        'hqk,hkd->hqd', p.astype(jnp.bfloat16), v,
        preferred_element_type=jnp.float32)
    m_sc[...] = m_new

    @pl.when(kv == pl.num_programs(2) - 1)
    def _():
        H, TQ, dh = acc_sc.shape
        attn = acc_sc[...] / l_sc[...]                     # exact divide; cold path
        # Single head-concat relayout per Q tile (lane-dense (TQ, D) output).
        attn = jnp.transpose(attn, (1, 0, 2)).reshape(TQ, H * dh)
        o_ref[0] = attn.astype(o_ref.dtype)


# ---- kernel 3: out-proj + residual + pre-LN FFN + residual (+ final LN) ----

def epilogue_kernel(x_ref, attn_ref, wo_ref, bo_ref, ln2_g_ref, ln2_b_ref,
                    w1_ref, b1_ref, w2_ref, b2_ref, lnf_g_ref, lnf_b_ref,
                    o_ref, *, apply_final_ln):
    attn = jnp.dot(attn_ref[0], wo_ref[...],
                   preferred_element_type=jnp.float32) + bo_ref[...]
    x = x_ref[0].astype(jnp.float32) + attn                # residual 1

    h2 = _layernorm(x, ln2_g_ref[...], ln2_b_ref[...]).astype(jnp.bfloat16)
    ff = jnp.dot(h2, w1_ref[...],
                 preferred_element_type=jnp.float32) + b1_ref[...]
    ff = _gelu_sigmoid(ff)
    ff = jnp.dot(ff.astype(jnp.bfloat16), w2_ref[...],
                 preferred_element_type=jnp.float32) + b2_ref[...]

    y = x + ff                                             # residual 2
    if apply_final_ln:
        y = _layernorm(y, lnf_g_ref[...], lnf_b_ref[...])
    o_ref[0] = y.astype(o_ref.dtype)


# ------------------------------ layer wrapper --------------------------------

def run_transformer_layer(x, layer, *, n_head, final_ln=None):
    B, N, D = x.shape
    D2, D3 = 2 * D, 3 * D
    TQ, TK = _seq_tiles(N)
    nQ, nKV = N // TQ, N // TK
    dh = D // n_head
    vmem_limit = _vmem_limit_bytes()

    # ---- pass 1: pre-LN + fused QKV projection, head-major outputs ----
    c2 = lambda shp: pl.BlockSpec(shp, lambda b, qi: (0, 0))
    qkv_out = jax.ShapeDtypeStruct((B, n_head, N, dh), jnp.bfloat16)
    q, k, v = pl.pallas_call(
        functools.partial(qkv_kernel, n_head=n_head),
        out_shape=(qkv_out, qkv_out, qkv_out),
        grid_spec=pltpu.PrefetchScalarGridSpec(
            num_scalar_prefetch=0,
            grid=(B, nQ),
            in_specs=[
                pl.BlockSpec((1, TQ, D), lambda b, qi: (b, qi, 0)),   # x
                c2((1, D)), c2((1, D)),                               # ln1 g/b
                c2((D, D3)), c2((1, D3)),                             # W_qkv, b_qkv
            ],
            out_specs=[pl.BlockSpec((1, n_head, TQ, dh),
                                    lambda b, qi: (b, 0, qi, 0))] * 3,
        ),
        compiler_params=pltpu.CompilerParams(
            dimension_semantics=("parallel", "parallel"),
            vmem_limit_bytes=vmem_limit),
    )(x, layer["ln1_g"], layer["ln1_b"], layer["w_qkv"], layer["b_qkv"])

    # ---- pass 2: flash attention (only q/k/v resident in the KV loop) ----
    attn = pl.pallas_call(
        attn_kernel,
        out_shape=jax.ShapeDtypeStruct((B, N, D), jnp.bfloat16),
        grid_spec=pltpu.PrefetchScalarGridSpec(
            num_scalar_prefetch=0,
            grid=(B, nQ, nKV),
            in_specs=[
                pl.BlockSpec((1, n_head, TQ, dh), lambda b, qi, kv: (b, 0, qi, 0)),
                pl.BlockSpec((1, n_head, TK, dh), lambda b, qi, kv: (b, 0, kv, 0)),
                pl.BlockSpec((1, n_head, TK, dh), lambda b, qi, kv: (b, 0, kv, 0)),
            ],
            out_specs=pl.BlockSpec((1, TQ, D), lambda b, qi, kv: (b, qi, 0)),
            scratch_shapes=[
                pltpu.VMEM((n_head, TQ, 1), jnp.float32),    # m
                pltpu.VMEM((n_head, TQ, 1), jnp.float32),    # l
                pltpu.VMEM((n_head, TQ, dh), jnp.float32),   # acc
            ],
        ),
        compiler_params=pltpu.CompilerParams(
            dimension_semantics=("parallel", "parallel", "arbitrary"),
            vmem_limit_bytes=vmem_limit),
    )(q, k, v)

    # ---- pass 3: out-proj + FFN epilogue, row-tiled and pipelined ----
    apply_final_ln = final_ln is not None
    if apply_final_ln:
        lnf_g, lnf_b = final_ln
    else:
        lnf_g = jnp.ones((1, D), jnp.float32)
        lnf_b = jnp.zeros((1, D), jnp.float32)

    y = pl.pallas_call(
        functools.partial(epilogue_kernel, apply_final_ln=apply_final_ln),
        out_shape=jax.ShapeDtypeStruct((B, N, D), x.dtype),
        grid_spec=pltpu.PrefetchScalarGridSpec(
            num_scalar_prefetch=0,
            grid=(B, nQ),
            in_specs=[
                pl.BlockSpec((1, TQ, D), lambda b, qi: (b, qi, 0)),   # x (residual)
                pl.BlockSpec((1, TQ, D), lambda b, qi: (b, qi, 0)),   # attn ctx
                c2((D, D)), c2((1, D)),                               # Wo, bo
                c2((1, D)), c2((1, D)),                               # ln2 g/b
                c2((D, D2)), c2((1, D2)),                             # W1, b1
                c2((D2, D)), c2((1, D)),                              # W2, b2
                c2((1, D)), c2((1, D)),                               # final LN g/b
            ],
            out_specs=pl.BlockSpec((1, TQ, D), lambda b, qi: (b, qi, 0)),
        ),
        compiler_params=pltpu.CompilerParams(
            dimension_semantics=("parallel", "parallel"),
            vmem_limit_bytes=vmem_limit),
    )(x, attn, layer["wo"], layer["bo"], layer["ln2_g"], layer["ln2_b"],
      layer["w1"], layer["b1"], layer["w2"], layer["b2"], lnf_g, lnf_b)
    return y


# ------------------------------ parameters -----------------------------------

def init_params(key, *, width, n_layers, heads, vocab_size, context_length):
    D, D2 = width, 2 * width
    keys = jax.random.split(key, 2 + 4 * n_layers)
    std = 0.02
    params = {
        "token_embedding": std * jax.random.normal(keys[0], (vocab_size, D), jnp.float32),
        "positional_embedding": jax.random.normal(keys[1], (context_length, D), jnp.float32),
        "ln_out_g": jnp.ones((1, D), jnp.float32),
        "ln_out_b": jnp.zeros((1, D), jnp.float32),
        "layers": [],
    }
    for l in range(n_layers):
        k = keys[2 + 4 * l: 2 + 4 * (l + 1)]
        # Weights stored pre-transposed (kernels compute x @ W) and in bf16.
        layer = {
            "ln1_g": jnp.ones((1, D), jnp.float32),
            "ln1_b": jnp.zeros((1, D), jnp.float32),
            "w_qkv": (std * jax.random.normal(k[0], (D, 3 * D), jnp.float32)).astype(jnp.bfloat16),
            "b_qkv": jnp.zeros((1, 3 * D), jnp.float32),
            "wo": (std * jax.random.normal(k[1], (D, D), jnp.float32)).astype(jnp.bfloat16),
            "bo": jnp.zeros((1, D), jnp.float32),
            "ln2_g": jnp.ones((1, D), jnp.float32),
            "ln2_b": jnp.zeros((1, D), jnp.float32),
            "w1": (std * jax.random.normal(k[2], (D, D2), jnp.float32)).astype(jnp.bfloat16),
            "b1": jnp.zeros((1, D2), jnp.float32),
            "w2": (std * jax.random.normal(k[3], (D2, D), jnp.float32)).astype(jnp.bfloat16),
            "b2": jnp.zeros((1, D), jnp.float32),
        }
        params["layers"].append(layer)
    return params


def transformer_forward(tokens, params, *, heads):
    # tokens: (B, N) int32.  Glue: embedding gather + positional add in JAX.
    x = jnp.take(params["token_embedding"], tokens, axis=0)        # (B, N, D)
    x = x + params["positional_embedding"][None, :, :]
    n_layers = len(params["layers"])
    for i, layer in enumerate(params["layers"]):
        final_ln = (params["ln_out_g"], params["ln_out_b"]) if i == n_layers - 1 else None
        x = run_transformer_layer(x, layer, n_head=heads, final_ln=final_ln)
    return x


if __name__ == "__main__":
    # Small, shape-consistent config (attn_mask defaults to None).
    B, N, width, heads, n_layers, vocab_size = 2, 8, 32, 4, 2, 16

    key = jax.random.PRNGKey(0)
    pkey, tkey = jax.random.split(key)
    params = init_params(pkey, width=width, n_layers=n_layers, heads=heads,
                         vocab_size=vocab_size, context_length=N)
    tokens = jax.random.randint(tkey, (B, N), 0, vocab_size, dtype=jnp.int32)

    fwd = jax.jit(functools.partial(transformer_forward, heads=heads))
    out = fwd(tokens, params)
    out = jax.block_until_ready(out)
    assert out.shape == (B, N, width)
    assert bool(jnp.all(jnp.isfinite(out)))
    print("KERNEL_OK")
</pallas_src>

<mosaic_0001>
module attributes {stable_mosaic.version = 11 : i64} {
  func.func @qkv_kernel(%arg0: i32, %arg1: i32, %arg2: memref<1x8x32xf32, #tpu.memory_space<vmem>>, %arg3: memref<1x32xf32, #tpu.memory_space<vmem>>, %arg4: memref<1x32xf32, #tpu.memory_space<vmem>>, %arg5: memref<32x96xbf16, #tpu.memory_space<vmem>>, %arg6: memref<1x96xf32, #tpu.memory_space<vmem>>, %arg7: memref<1x4x8x8xbf16, #tpu.memory_space<vmem>>, %arg8: memref<1x4x8x8xbf16, #tpu.memory_space<vmem>>, %arg9: memref<1x4x8x8xbf16, #tpu.memory_space<vmem>>) attributes {dimension_semantics = [#tpu.dimension_semantics<parallel>, #tpu.dimension_semantics<parallel>], iteration_bounds = array<i64: 2, 1>, scalar_prefetch = 0 : i64, scratch_operands = 0 : i64, tpu.core_type = #tpu.core_type<tc>, window_params = [{transform_indices = @transform_0, window_bounds = array<i64: 1, 8, 32>}, {pipeline_mode = #tpu.pipeline_mode<synchronous>, transform_indices = @transform_1, window_bounds = array<i64: 1, 32>}, {pipeline_mode = #tpu.pipeline_mode<synchronous>, transform_indices = @transform_2, window_bounds = array<i64: 1, 32>}, {pipeline_mode = #tpu.pipeline_mode<synchronous>, transform_indices = @transform_3, window_bounds = array<i64: 32, 96>}, {pipeline_mode = #tpu.pipeline_mode<synchronous>, transform_indices = @transform_4, window_bounds = array<i64: 1, 96>}, {transform_indices = @transform_5, window_bounds = array<i64: 1, 4, 8, 8>}, {transform_indices = @transform_6, window_bounds = array<i64: 1, 4, 8, 8>}, {transform_indices = @transform_7, window_bounds = array<i64: 1, 4, 8, 8>}]} {
    %c0 = arith.constant 0 : index
    %c0_0 = arith.constant 0 : index
    %c0_1 = arith.constant 0 : index
    %0 = vector.load %arg2[%c0, %c0_0, %c0_1] : memref<1x8x32xf32, #tpu.memory_space<vmem>>, vector<1x8x32xf32>
    %1 = vector.shape_cast %0 : vector<1x8x32xf32> to vector<8x32xf32>
    %c0_2 = arith.constant 0 : index
    %c0_3 = arith.constant 0 : index
    %2 = vector.load %arg3[%c0_2, %c0_3] : memref<1x32xf32, #tpu.memory_space<vmem>>, vector<1x32xf32>
    %c0_4 = arith.constant 0 : index
    %c0_5 = arith.constant 0 : index
    %3 = vector.load %arg4[%c0_4, %c0_5] : memref<1x32xf32, #tpu.memory_space<vmem>>, vector<1x32xf32>
    %cst = arith.constant dense<0.000000e+00> : vector<8xf32>
    %4 = vector.multi_reduction <add>, %1, %cst [1] : vector<8x32xf32> to vector<8xf32>
    %5 = vector.shape_cast %4 : vector<8xf32> to vector<8x1xf32>
    %cst_6 = arith.constant 3.200000e+01 : f32
    %6 = vector.broadcast %cst_6 : f32 to vector<8x1xf32>
    %7 = arith.divf %5, %6 : vector<8x1xf32>
    %8 = vector.broadcast %7 : vector<8x1xf32> to vector<8x32xf32>
    %9 = arith.subf %1, %8 : vector<8x32xf32>
    %10 = arith.mulf %9, %9 : vector<8x32xf32>
    %cst_7 = arith.constant dense<0.000000e+00> : vector<8xf32>
    %11 = vector.multi_reduction <add>, %10, %cst_7 [1] : vector<8x32xf32> to vector<8xf32>
    %12 = vector.shape_cast %11 : vector<8xf32> to vector<8x1xf32>
    %cst_8 = arith.constant 3.200000e+01 : f32
    %13 = vector.broadcast %cst_8 : f32 to vector<8x1xf32>
    %14 = arith.divf %12, %13 : vector<8x1xf32>
    %15 = vector.broadcast %7 : vector<8x1xf32> to vector<8x32xf32>
    %16 = arith.subf %1, %15 : vector<8x32xf32>
    %cst_9 = arith.constant 9.99999974E-6 : f32
    %17 = vector.broadcast %cst_9 : f32 to vector<8x1xf32>
    %18 = arith.addf %14, %17 : vector<8x1xf32>
    %19 = math.rsqrt %18 : vector<8x1xf32>
    %20 = vector.broadcast %19 : vector<8x1xf32> to vector<8x32xf32>
    %21 = arith.mulf %16, %20 : vector<8x32xf32>
    %22 = vector.broadcast %2 : vector<1x32xf32> to vector<8x32xf32>
    %23 = arith.mulf %21, %22 : vector<8x32xf32>
    %24 = vector.broadcast %3 : vector<1x32xf32> to vector<8x32xf32>
    %25 = arith.addf %23, %24 : vector<8x32xf32>
    %26 = arith.truncf %25 : vector<8x32xf32> to vector<8x32xbf16>
    %c0_10 = arith.constant 0 : index
    %c0_11 = arith.constant 0 : index
    %27 = vector.load %arg5[%c0_10, %c0_11] : memref<32x96xbf16, #tpu.memory_space<vmem>>, vector<32x96xbf16>
    %cst_12 = arith.constant dense<0.000000e+00> : vector<8x96xf32>
    %28 = tpu.matmul %26, %27, %cst_12 {dimension_numbers = #tpu.dot_dimension_numbers<[1], [0], [0], [1], [0, 0, 1, 1], [], []>} : vector<8x32xbf16>, vector<32x96xbf16>, vector<8x96xf32> -> vector<8x96xf32>
    %c0_13 = arith.constant 0 : index
    %c0_14 = arith.constant 0 : index
    %29 = vector.load %arg6[%c0_13, %c0_14] : memref<1x96xf32, #tpu.memory_space<vmem>>, vector<1x96xf32>
    %30 = vector.broadcast %29 : vector<1x96xf32> to vector<8x96xf32>
    %31 = arith.addf %28, %30 : vector<8x96xf32>
    %32 = vector.extract_strided_slice %31 {offsets = [0, 0], sizes = [8, 32], strides = [1, 1]} : vector<8x96xf32> to vector<8x32xf32>
    %cst_15 = arith.constant 0.353553385 : f32
    %33 = vector.broadcast %cst_15 : f32 to vector<8x32xf32>
    %34 = arith.mulf %32, %33 : vector<8x32xf32>
    %35 = vector.extract_strided_slice %31 {offsets = [0, 32], sizes = [8, 32], strides = [1, 1]} : vector<8x96xf32> to vector<8x32xf32>
    %36 = vector.extract_strided_slice %31 {offsets = [0, 64], sizes = [8, 32], strides = [1, 1]} : vector<8x96xf32> to vector<8x32xf32>
    %37 = vector.shape_cast %34 : vector<8x32xf32> to vector<8x4x8xf32>
    %38 = tpu.transpose %37, [1, 0, 2] : vector<8x4x8xf32> -> vector<4x8x8xf32>
    %39 = arith.truncf %38 : vector<4x8x8xf32> to vector<4x8x8xbf16>
    %c0_16 = arith.constant 0 : index
    %c0_17 = arith.constant 0 : index
    %c0_18 = arith.constant 0 : index
    %c0_19 = arith.constant 0 : index
    %40 = vector.load %arg7[%c0_16, %c0_17, %c0_18, %c0_19] : memref<1x4x8x8xbf16, #tpu.memory_space<vmem>>, vector<1x4x8x8xbf16>
    %41 = vector.shape_cast %40 : vector<1x4x8x8xbf16> to vector<4x8x8xbf16>
    %42 = vector.shape_cast %39 : vector<4x8x8xbf16> to vector<1x4x8x8xbf16>
    tpu.vector_store %arg7[%c0_16, %c0_17, %c0_18, %c0_19], %42 {strides = array<i32>} : memref<1x4x8x8xbf16, #tpu.memory_space<vmem>>, vector<1x4x8x8xbf16>,
    %43 = vector.shape_cast %35 : vector<8x32xf32> to vector<8x4x8xf32>
    %44 = tpu.transpose %43, [1, 0, 2] : vector<8x4x8xf32> -> vector<4x8x8xf32>
    %45 = arith.truncf %44 : vector<4x8x8xf32> to vector<4x8x8xbf16>
    %c0_20 = arith.constant 0 : index
    %c0_21 = arith.constant 0 : index
    %c0_22 = arith.constant 0 : index
    %c0_23 = arith.constant 0 : index
    %46 = vector.load %arg8[%c0_20, %c0_21, %c0_22, %c0_23] : memref<1x4x8x8xbf16, #tpu.memory_space<vmem>>, vector<1x4x8x8xbf16>
    %47 = vector.shape_cast %46 : vector<1x4x8x8xbf16> to vector<4x8x8xbf16>
    %48 = vector.shape_cast %45 : vector<4x8x8xbf16> to vector<1x4x8x8xbf16>
    tpu.vector_store %arg8[%c0_20, %c0_21, %c0_22, %c0_23], %48 {strides = array<i32>} : memref<1x4x8x8xbf16, #tpu.memory_space<vmem>>, vector<1x4x8x8xbf16>,
    %49 = vector.shape_cast %36 : vector<8x32xf32> to vector<8x4x8xf32>
    %50 = tpu.transpose %49, [1, 0, 2] : vector<8x4x8xf32> -> vector<4x8x8xf32>
    %51 = arith.truncf %50 : vector<4x8x8xf32> to vector<4x8x8xbf16>
    %c0_24 = arith.constant 0 : index
    %c0_25 = arith.constant 0 : index
    %c0_26 = arith.constant 0 : index
    %c0_27 = arith.constant 0 : index
    %52 = vector.load %arg9[%c0_24, %c0_25, %c0_26, %c0_27] : memref<1x4x8x8xbf16, #tpu.memory_space<vmem>>, vector<1x4x8x8xbf16>
    %53 = vector.shape_cast %52 : vector<1x4x8x8xbf16> to vector<4x8x8xbf16>
    %54 = vector.shape_cast %51 : vector<4x8x8xbf16> to vector<1x4x8x8xbf16>
    tpu.vector_store %arg9[%c0_24, %c0_25, %c0_26, %c0_27], %54 {strides = array<i32>} : memref<1x4x8x8xbf16, #tpu.memory_space<vmem>>, vector<1x4x8x8xbf16>,
    return
  }
  func.func @transform_0(%arg0: i32, %arg1: i32) -> (i32, i32, i32) {
    %c0_i32 = arith.constant 0 : i32
    %c0_i32_0 = arith.constant 0 : i32
    return %arg0, %arg1, %c0_i32 : i32, i32, i32
  }
  func.func @transform_1(%arg0: i32, %arg1: i32) -> (i32, i32) {
    %c0_i32 = arith.constant 0 : i32
    %c0_i32_0 = arith.constant 0 : i32
    %c0_i32_1 = arith.constant 0 : i32
    return %c0_i32, %c0_i32_0 : i32, i32
  }
  func.func @transform_2(%arg0: i32, %arg1: i32) -> (i32, i32) {
    %c0_i32 = arith.constant 0 : i32
    %c0_i32_0 = arith.constant 0 : i32
    %c0_i32_1 = arith.constant 0 : i32
    return %c0_i32, %c0_i32_0 : i32, i32
  }
  func.func @transform_3(%arg0: i32, %arg1: i32) -> (i32, i32) {
    %c0_i32 = arith.constant 0 : i32
    %c0_i32_0 = arith.constant 0 : i32
    %c0_i32_1 = arith.constant 0 : i32
    return %c0_i32, %c0_i32_0 : i32, i32
  }
  func.func @transform_4(%arg0: i32, %arg1: i32) -> (i32, i32) {
    %c0_i32 = arith.constant 0 : i32
    %c0_i32_0 = arith.constant 0 : i32
    %c0_i32_1 = arith.constant 0 : i32
    return %c0_i32, %c0_i32_0 : i32, i32
  }
  func.func @transform_5(%arg0: i32, %arg1: i32) -> (i32, i32, i32, i32) {
    %c0_i32 = arith.constant 0 : i32
    %c0_i32_0 = arith.constant 0 : i32
    %c0_i32_1 = arith.constant 0 : i32
    return %arg0, %c0_i32, %arg1, %c0_i32_0 : i32, i32, i32, i32
  }
  func.func @transform_6(%arg0: i32, %arg1: i32) -> (i32, i32, i32, i32) {
    %c0_i32 = arith.constant 0 : i32
    %c0_i32_0 = arith.constant 0 : i32
    %c0_i32_1 = arith.constant 0 : i32
    return %arg0, %c0_i32, %arg1, %c0_i32_0 : i32, i32, i32, i32
  }
  func.func @transform_7(%arg0: i32, %arg1: i32) -> (i32, i32, i32, i32) {
    %c0_i32 = arith.constant 0 : i32
    %c0_i32_0 = arith.constant 0 : i32
    %c0_i32_1 = arith.constant 0 : i32
    return %arg0, %c0_i32, %arg1, %c0_i32_0 : i32, i32, i32, i32
  }
}

module attributes {stable_mosaic.version = 11 : i64} {
  func.func @epilogue_kernel(%arg0: i32, %arg1: i32, %arg2: memref<1x8x32xf32, #tpu.memory_space<vmem>>, %arg3: memref<1x8x32xbf16, #tpu.memory_space<vmem>>, %arg4: memref<32x32xbf16, #tpu.memory_space<vmem>>, %arg5: memref<1x32xf32, #tpu.memory_space<vmem>>, %arg6: memref<1x32xf32, #tpu.memory_space<vmem>>, %arg7: memref<1x32xf32, #tpu.memory_space<vmem>>, %arg8: memref<32x64xbf16, #tpu.memory_space<vmem>>, %arg9: memref<1x64xf32, #tpu.memory_space<vmem>>, %arg10: memref<64x32xbf16, #tpu.memory_space<vmem>>, %arg11: memref<1x32xf32, #tpu.memory_space<vmem>>, %arg12: memref<1x32xf32, #tpu.memory_space<vmem>>, %arg13: memref<1x32xf32, #tpu.memory_space<vmem>>, %arg14: memref<1x8x32xf32, #tpu.memory_space<vmem>>) attributes {dimension_semantics = [#tpu.dimension_semantics<parallel>, #tpu.dimension_semantics<parallel>], iteration_bounds = array<i64: 2, 1>, scalar_prefetch = 0 : i64, scratch_operands = 0 : i64, tpu.core_type = #tpu.core_type<tc>, window_params = [{transform_indices = @transform_0, window_bounds = array<i64: 1, 8, 32>}, {transform_indices = @transform_1, window_bounds = array<i64: 1, 8, 32>}, {pipeline_mode = #tpu.pipeline_mode<synchronous>, transform_indices = @transform_2, window_bounds = array<i64: 32, 32>}, {pipeline_mode = #tpu.pipeline_mode<synchronous>, transform_indices = @transform_3, window_bounds = array<i64: 1, 32>}, {pipeline_mode = #tpu.pipeline_mode<synchronous>, transform_indices = @transform_4, window_bounds = array<i64: 1, 32>}, {pipeline_mode = #tpu.pipeline_mode<synchronous>, transform_indices = @transform_5, window_bounds = array<i64: 1, 32>}, {pipeline_mode = #tpu.pipeline_mode<synchronous>, transform_indices = @transform_6, window_bounds = array<i64: 32, 64>}, {pipeline_mode = #tpu.pipeline_mode<synchronous>, transform_indices = @transform_7, window_bounds = array<i64: 1, 64>}, {pipeline_mode = #tpu.pipeline_mode<synchronous>, transform_indices = @transform_8, window_bounds = array<i64: 64, 32>}, {pipeline_mode = #tpu.pipeline_mode<synchronous>, transform_indices = @transform_9, window_bounds = array<i64: 1, 32>}, {pipeline_mode = #tpu.pipeline_mode<synchronous>, transform_indices = @transform_10, window_bounds = array<i64: 1, 32>}, {pipeline_mode = #tpu.pipeline_mode<synchronous>, transform_indices = @transform_11, window_bounds = array<i64: 1, 32>}, {transform_indices = @transform_12, window_bounds = array<i64: 1, 8, 32>}]} {
    %c0 = arith.constant 0 : index
    %c0_0 = arith.constant 0 : index
    %c0_1 = arith.constant 0 : index
    %0 = vector.load %arg3[%c0, %c0_0, %c0_1] : memref<1x8x32xbf16, #tpu.memory_space<vmem>>, vector<1x8x32xbf16>
    %1 = vector.shape_cast %0 : vector<1x8x32xbf16> to vector<8x32xbf16>
    %c0_2 = arith.constant 0 : index
    %c0_3 = arith.constant 0 : index
    %2 = vector.load %arg4[%c0_2, %c0_3] : memref<32x32xbf16, #tpu.memory_space<vmem>>, vector<32x32xbf16>
    %cst = arith.constant dense<0.000000e+00> : vector<8x32xf32>
    %3 = tpu.matmul %1, %2, %cst {dimension_numbers = #tpu.dot_dimension_numbers<[1], [0], [0], [1], [0, 0, 1, 1], [], []>} : vector<8x32xbf16>, vector<32x32xbf16>, vector<8x32xf32> -> vector<8x32xf32>
    %c0_4 = arith.constant 0 : index
    %c0_5 = arith.constant 0 : index
    %4 = vector.load %arg5[%c0_4, %c0_5] : memref<1x32xf32, #tpu.memory_space<vmem>>, vector<1x32xf32>
    %5 = vector.broadcast %4 : vector<1x32xf32> to vector<8x32xf32>
    %6 = arith.addf %3, %5 : vector<8x32xf32>
    %c0_6 = arith.constant 0 : index
    %c0_7 = arith.constant 0 : index
    %c0_8 = arith.constant 0 : index
    %7 = vector.load %arg2[%c0_6, %c0_7, %c0_8] : memref<1x8x32xf32, #tpu.memory_space<vmem>>, vector<1x8x32xf32>
    %8 = vector.shape_cast %7 : vector<1x8x32xf32> to vector<8x32xf32>
    %9 = arith.addf %8, %6 : vector<8x32xf32>
    %c0_9 = arith.constant 0 : index
    %c0_10 = arith.constant 0 : index
    %10 = vector.load %arg6[%c0_9, %c0_10] : memref<1x32xf32, #tpu.memory_space<vmem>>, vector<1x32xf32>
    %c0_11 = arith.constant 0 : index
    %c0_12 = arith.constant 0 : index
    %11 = vector.load %arg7[%c0_11, %c0_12] : memref<1x32xf32, #tpu.memory_space<vmem>>, vector<1x32xf32>
    %cst_13 = arith.constant dense<0.000000e+00> : vector<8xf32>
    %12 = vector.multi_reduction <add>, %9, %cst_13 [1] : vector<8x32xf32> to vector<8xf32>
    %13 = vector.shape_cast %12 : vector<8xf32> to vector<8x1xf32>
    %cst_14 = arith.constant 3.200000e+01 : f32
    %14 = vector.broadcast %cst_14 : f32 to vector<8x1xf32>
    %15 = arith.divf %13, %14 : vector<8x1xf32>
    %16 = vector.broadcast %15 : vector<8x1xf32> to vector<8x32xf32>
    %17 = arith.subf %9, %16 : vector<8x32xf32>
    %18 = arith.mulf %17, %17 : vector<8x32xf32>
    %cst_15 = arith.constant dense<0.000000e+00> : vector<8xf32>
    %19 = vector.multi_reduction <add>, %18, %cst_15 [1] : vector<8x32xf32> to vector<8xf32>
    %20 = vector.shape_cast %19 : vector<8xf32> to vector<8x1xf32>
    %cst_16 = arith.constant 3.200000e+01 : f32
    %21 = vector.broadcast %cst_16 : f32 to vector<8x1xf32>
    %22 = arith.divf %20, %21 : vector<8x1xf32>
    %23 = vector.broadcast %15 : vector<8x1xf32> to vector<8x32xf32>
    %24 = arith.subf %9, %23 : vector<8x32xf32>
    %cst_17 = arith.constant 9.99999974E-6 : f32
    %25 = vector.broadcast %cst_17 : f32 to vector<8x1xf32>
    %26 = arith.addf %22, %25 : vector<8x1xf32>
    %27 = math.rsqrt %26 : vector<8x1xf32>
    %28 = vector.broadcast %27 : vector<8x1xf32> to vector<8x32xf32>
    %29 = arith.mulf %24, %28 : vector<8x32xf32>
    %30 = vector.broadcast %10 : vector<1x32xf32> to vector<8x32xf32>
    %31 = arith.mulf %29, %30 : vector<8x32xf32>
    %32 = vector.broadcast %11 : vector<1x32xf32> to vector<8x32xf32>
    %33 = arith.addf %31, %32 : vector<8x32xf32>
    %34 = arith.truncf %33 : vector<8x32xf32> to vector<8x32xbf16>
    %c0_18 = arith.constant 0 : index
    %c0_19 = arith.constant 0 : index
    %35 = vector.load %arg8[%c0_18, %c0_19] : memref<32x64xbf16, #tpu.memory_space<vmem>>, vector<32x64xbf16>
    %cst_20 = arith.constant dense<0.000000e+00> : vector<8x64xf32>
    %36 = tpu.matmul %34, %35, %cst_20 {dimension_numbers = #tpu.dot_dimension_numbers<[1], [0], [0], [1], [0, 0, 1, 1], [], []>} : vector<8x32xbf16>, vector<32x64xbf16>, vector<8x64xf32> -> vector<8x64xf32>
    %c0_21 = arith.constant 0 : index
    %c0_22 = arith.constant 0 : index
    %37 = vector.load %arg9[%c0_21, %c0_22] : memref<1x64xf32, #tpu.memory_space<vmem>>, vector<1x64xf32>
    %38 = vector.broadcast %37 : vector<1x64xf32> to vector<8x64xf32>
    %39 = arith.addf %36, %38 : vector<8x64xf32>
    %cst_23 = arith.constant 1.702000e+00 : f32
    %40 = vector.broadcast %cst_23 : f32 to vector<8x64xf32>
    %41 = arith.mulf %40, %39 : vector<8x64xf32>
    %42 = arith.negf %41 : vector<8x64xf32>
    %43 = math.exp %42 : vector<8x64xf32>
    %cst_24 = arith.constant 1.000000e+00 : f32
    %44 = vector.broadcast %cst_24 : f32 to vector<8x64xf32>
    %45 = arith.addf %44, %43 : vector<8x64xf32>
    %46 = arith.divf %44, %45 : vector<8x64xf32>
    %47 = arith.mulf %39, %46 : vector<8x64xf32>
    %48 = arith.truncf %47 : vector<8x64xf32> to vector<8x64xbf16>
    %c0_25 = arith.constant 0 : index
    %c0_26 = arith.constant 0 : index
    %49 = vector.load %arg10[%c0_25, %c0_26] : memref<64x32xbf16, #tpu.memory_space<vmem>>, vector<64x32xbf16>
    %cst_27 = arith.constant dense<0.000000e+00> : vector<8x32xf32>
    %50 = tpu.matmul %48, %49, %cst_27 {dimension_numbers = #tpu.dot_dimension_numbers<[1], [0], [0], [1], [0, 0, 1, 1], [], []>} : vector<8x64xbf16>, vector<64x32xbf16>, vector<8x32xf32> -> vector<8x32xf32>
    %c0_28 = arith.constant 0 : index
    %c0_29 = arith.constant 0 : index
    %51 = vector.load %arg11[%c0_28, %c0_29] : memref<1x32xf32, #tpu.memory_space<vmem>>, vector<1x32xf32>
    %52 = vector.broadcast %51 : vector<1x32xf32> to vector<8x32xf32>
    %53 = arith.addf %50, %52 : vector<8x32xf32>
    %54 = arith.addf %9, %53 : vector<8x32xf32>
    %c0_30 = arith.constant 0 : index
    %c0_31 = arith.constant 0 : index
    %c0_32 = arith.constant 0 : index
    %55 = vector.load %arg14[%c0_30, %c0_31, %c0_32] : memref<1x8x32xf32, #tpu.memory_space<vmem>>, vector<1x8x32xf32>
    %56 = vector.shape_cast %55 : vector<1x8x32xf32> to vector<8x32xf32>
    %57 = vector.shape_cast %54 : vector<8x32xf32> to vector<1x8x32xf32>
    tpu.vector_store %arg14[%c0_30, %c0_31, %c0_32], %57 {strides = array<i32>} : memref<1x8x32xf32, #tpu.memory_space<vmem>>, vector<1x8x32xf32>,
    return
  }
  func.func @transform_0(%arg0: i32, %arg1: i32) -> (i32, i32, i32) {
    %c0_i32 = arith.constant 0 : i32
    %c0_i32_0 = arith.constant 0 : i32
    return %arg0, %arg1, %c0_i32 : i32, i32, i32
  }
  func.func @transform_1(%arg0: i32, %arg1: i32) -> (i32, i32, i32) {
    %c0_i32 = arith.constant 0 : i32
    %c0_i32_0 = arith.constant 0 : i32
    return %arg0, %arg1, %c0_i32 : i32, i32, i32
  }
  func.func @transform_2(%arg0: i32, %arg1: i32) -> (i32, i32) {
    %c0_i32 = arith.constant 0 : i32
    %c0_i32_0 = arith.constant 0 : i32
    %c0_i32_1 = arith.constant 0 : i32
    return %c0_i32, %c0_i32_0 : i32, i32
  }
  func.func @transform_3(%arg0: i32, %arg1: i32) -> (i32, i32) {
    %c0_i32 = arith.constant 0 : i32
    %c0_i32_0 = arith.constant 0 : i32
    %c0_i32_1 = arith.constant 0 : i32
    return %c0_i32, %c0_i32_0 : i32, i32
  }
  func.func @transform_4(%arg0: i32, %arg1: i32) -> (i32, i32) {
    %c0_i32 = arith.constant 0 : i32
    %c0_i32_0 = arith.constant 0 : i32
    %c0_i32_1 = arith.constant 0 : i32
    return %c0_i32, %c0_i32_0 : i32, i32
  }
  func.func @transform_5(%arg0: i32, %arg1: i32) -> (i32, i32) {
    %c0_i32 = arith.constant 0 : i32
    %c0_i32_0 = arith.constant 0 : i32
    %c0_i32_1 = arith.constant 0 : i32
    return %c0_i32, %c0_i32_0 : i32, i32
  }
  func.func @transform_6(%arg0: i32, %arg1: i32) -> (i32, i32) {
    %c0_i32 = arith.constant 0 : i32
    %c0_i32_0 = arith.constant 0 : i32
    %c0_i32_1 = arith.constant 0 : i32
    return %c0_i32, %c0_i32_0 : i32, i32
  }
  func.func @transform_7(%arg0: i32, %arg1: i32) -> (i32, i32) {
    %c0_i32 = arith.constant 0 : i32
    %c0_i32_0 = arith.constant 0 : i32
    %c0_i32_1 = arith.constant 0 : i32
    return %c0_i32, %c0_i32_0 : i32, i32
  }
  func.func @transform_8(%arg0: i32, %arg1: i32) -> (i32, i32) {
    %c0_i32 = arith.constant 0 : i32
    %c0_i32_0 = arith.constant 0 : i32
    %c0_i32_1 = arith.constant 0 : i32
    return %c0_i32, %c0_i32_0 : i32, i32
  }
  func.func @transform_9(%arg0: i32, %arg1: i32) -> (i32, i32) {
    %c0_i32 = arith.constant 0 : i32
    %c0_i32_0 = arith.constant 0 : i32
    %c0_i32_1 = arith.constant 0 : i32
    return %c0_i32, %c0_i32_0 : i32, i32
  }
  func.func @transform_10(%arg0: i32, %arg1: i32) -> (i32, i32) {
    %c0_i32 = arith.constant 0 : i32
    %c0_i32_0 = arith.constant 0 : i32
    %c0_i32_1 = arith.constant 0 : i32
    return %c0_i32, %c0_i32_0 : i32, i32
  }
  func.func @transform_11(%arg0: i32, %arg1: i32) -> (i32, i32) {
    %c0_i32 = arith.constant 0 : i32
    %c0_i32_0 = arith.constant 0 : i32
    %c0_i32_1 = arith.constant 0 : i32
    return %c0_i32, %c0_i32_0 : i32, i32
  }
  func.func @transform_12(%arg0: i32, %arg1: i32) -> (i32, i32, i32) {
    %c0_i32 = arith.constant 0 : i32
    %c0_i32_0 = arith.constant 0 : i32
    return %arg0, %arg1, %c0_i32 : i32, i32, i32
  }
}

module attributes {stable_mosaic.version = 11 : i64} {
  func.func @epilogue_kernel(%arg0: i32, %arg1: i32, %arg2: memref<1x8x32xf32, #tpu.memory_space<vmem>>, %arg3: memref<1x8x32xbf16, #tpu.memory_space<vmem>>, %arg4: memref<32x32xbf16, #tpu.memory_space<vmem>>, %arg5: memref<1x32xf32, #tpu.memory_space<vmem>>, %arg6: memref<1x32xf32, #tpu.memory_space<vmem>>, %arg7: memref<1x32xf32, #tpu.memory_space<vmem>>, %arg8: memref<32x64xbf16, #tpu.memory_space<vmem>>, %arg9: memref<1x64xf32, #tpu.memory_space<vmem>>, %arg10: memref<64x32xbf16, #tpu.memory_space<vmem>>, %arg11: memref<1x32xf32, #tpu.memory_space<vmem>>, %arg12: memref<1x32xf32, #tpu.memory_space<vmem>>, %arg13: memref<1x32xf32, #tpu.memory_space<vmem>>, %arg14: memref<1x8x32xf32, #tpu.memory_space<vmem>>) attributes {dimension_semantics = [#tpu.dimension_semantics<parallel>, #tpu.dimension_semantics<parallel>], iteration_bounds = array<i64: 2, 1>, scalar_prefetch = 0 : i64, scratch_operands = 0 : i64, tpu.core_type = #tpu.core_type<tc>, window_params = [{transform_indices = @transform_0, window_bounds = array<i64: 1, 8, 32>}, {transform_indices = @transform_1, window_bounds = array<i64: 1, 8, 32>}, {pipeline_mode = #tpu.pipeline_mode<synchronous>, transform_indices = @transform_2, window_bounds = array<i64: 32, 32>}, {pipeline_mode = #tpu.pipeline_mode<synchronous>, transform_indices = @transform_3, window_bounds = array<i64: 1, 32>}, {pipeline_mode = #tpu.pipeline_mode<synchronous>, transform_indices = @transform_4, window_bounds = array<i64: 1, 32>}, {pipeline_mode = #tpu.pipeline_mode<synchronous>, transform_indices = @transform_5, window_bounds = array<i64: 1, 32>}, {pipeline_mode = #tpu.pipeline_mode<synchronous>, transform_indices = @transform_6, window_bounds = array<i64: 32, 64>}, {pipeline_mode = #tpu.pipeline_mode<synchronous>, transform_indices = @transform_7, window_bounds = array<i64: 1, 64>}, {pipeline_mode = #tpu.pipeline_mode<synchronous>, transform_indices = @transform_8, window_bounds = array<i64: 64, 32>}, {pipeline_mode = #tpu.pipeline_mode<synchronous>, transform_indices = @transform_9, window_bounds = array<i64: 1, 32>}, {pipeline_mode = #tpu.pipeline_mode<synchronous>, transform_indices = @transform_10, window_bounds = array<i64: 1, 32>}, {pipeline_mode = #tpu.pipeline_mode<synchronous>, transform_indices = @transform_11, window_bounds = array<i64: 1, 32>}, {transform_indices = @transform_12, window_bounds = array<i64: 1, 8, 32>}]} {
    %c0 = arith.constant 0 : index
    %c0_0 = arith.constant 0 : index
    %c0_1 = arith.constant 0 : index
    %0 = vector.load %arg3[%c0, %c0_0, %c0_1] : memref<1x8x32xbf16, #tpu.memory_space<vmem>>, vector<1x8x32xbf16>
    %1 = vector.shape_cast %0 : vector<1x8x32xbf16> to vector<8x32xbf16>
    %c0_2 = arith.constant 0 : index
    %c0_3 = arith.constant 0 : index
    %2 = vector.load %arg4[%c0_2, %c0_3] : memref<32x32xbf16, #tpu.memory_space<vmem>>, vector<32x32xbf16>
    %cst = arith.constant dense<0.000000e+00> : vector<8x32xf32>
    %3 = tpu.matmul %1, %2, %cst {dimension_numbers = #tpu.dot_dimension_numbers<[1], [0], [0], [1], [0, 0, 1, 1], [], []>} : vector<8x32xbf16>, vector<32x32xbf16>, vector<8x32xf32> -> vector<8x32xf32>
    %c0_4 = arith.constant 0 : index
    %c0_5 = arith.constant 0 : index
    %4 = vector.load %arg5[%c0_4, %c0_5] : memref<1x32xf32, #tpu.memory_space<vmem>>, vector<1x32xf32>
    %5 = vector.broadcast %4 : vector<1x32xf32> to vector<8x32xf32>
    %6 = arith.addf %3, %5 : vector<8x32xf32>
    %c0_6 = arith.constant 0 : index
    %c0_7 = arith.constant 0 : index
    %c0_8 = arith.constant 0 : index
    %7 = vector.load %arg2[%c0_6, %c0_7, %c0_8] : memref<1x8x32xf32, #tpu.memory_space<vmem>>, vector<1x8x32xf32>
    %8 = vector.shape_cast %7 : vector<1x8x32xf32> to vector<8x32xf32>
    %9 = arith.addf %8, %6 : vector<8x32xf32>
    %c0_9 = arith.constant 0 : index
    %c0_10 = arith.constant 0 : index
    %10 = vector.load %arg6[%c0_9, %c0_10] : memref<1x32xf32, #tpu.memory_space<vmem>>, vector<1x32xf32>
    %c0_11 = arith.constant 0 : index
    %c0_12 = arith.constant 0 : index
    %11 = vector.load %arg7[%c0_11, %c0_12] : memref<1x32xf32, #tpu.memory_space<vmem>>, vector<1x32xf32>
    %cst_13 = arith.constant dense<0.000000e+00> : vector<8xf32>
    %12 = vector.multi_reduction <add>, %9, %cst_13 [1] : vector<8x32xf32> to vector<8xf32>
    %13 = vector.shape_cast %12 : vector<8xf32> to vector<8x1xf32>
    %cst_14 = arith.constant 3.200000e+01 : f32
    %14 = vector.broadcast %cst_14 : f32 to vector<8x1xf32>
    %15 = arith.divf %13, %14 : vector<8x1xf32>
    %16 = vector.broadcast %15 : vector<8x1xf32> to vector<8x32xf32>
    %17 = arith.subf %9, %16 : vector<8x32xf32>
    %18 = arith.mulf %17, %17 : vector<8x32xf32>
    %cst_15 = arith.constant dense<0.000000e+00> : vector<8xf32>
    %19 = vector.multi_reduction <add>, %18, %cst_15 [1] : vector<8x32xf32> to vector<8xf32>
    %20 = vector.shape_cast %19 : vector<8xf32> to vector<8x1xf32>
    %cst_16 = arith.constant 3.200000e+01 : f32
    %21 = vector.broadcast %cst_16 : f32 to vector<8x1xf32>
    %22 = arith.divf %20, %21 : vector<8x1xf32>
    %23 = vector.broadcast %15 : vector<8x1xf32> to vector<8x32xf32>
    %24 = arith.subf %9, %23 : vector<8x32xf32>
    %cst_17 = arith.constant 9.99999974E-6 : f32
    %25 = vector.broadcast %cst_17 : f32 to vector<8x1xf32>
    %26 = arith.addf %22, %25 : vector<8x1xf32>
    %27 = math.rsqrt %26 : vector<8x1xf32>
    %28 = vector.broadcast %27 : vector<8x1xf32> to vector<8x32xf32>
    %29 = arith.mulf %24, %28 : vector<8x32xf32>
    %30 = vector.broadcast %10 : vector<1x32xf32> to vector<8x32xf32>
    %31 = arith.mulf %29, %30 : vector<8x32xf32>
    %32 = vector.broadcast %11 : vector<1x32xf32> to vector<8x32xf32>
    %33 = arith.addf %31, %32 : vector<8x32xf32>
    %34 = arith.truncf %33 : vector<8x32xf32> to vector<8x32xbf16>
    %c0_18 = arith.constant 0 : index
    %c0_19 = arith.constant 0 : index
    %35 = vector.load %arg8[%c0_18, %c0_19] : memref<32x64xbf16, #tpu.memory_space<vmem>>, vector<32x64xbf16>
    %cst_20 = arith.constant dense<0.000000e+00> : vector<8x64xf32>
    %36 = tpu.matmul %34, %35, %cst_20 {dimension_numbers = #tpu.dot_dimension_numbers<[1], [0], [0], [1], [0, 0, 1, 1], [], []>} : vector<8x32xbf16>, vector<32x64xbf16>, vector<8x64xf32> -> vector<8x64xf32>
    %c0_21 = arith.constant 0 : index
    %c0_22 = arith.constant 0 : index
    %37 = vector.load %arg9[%c0_21, %c0_22] : memref<1x64xf32, #tpu.memory_space<vmem>>, vector<1x64xf32>
    %38 = vector.broadcast %37 : vector<1x64xf32> to vector<8x64xf32>
    %39 = arith.addf %36, %38 : vector<8x64xf32>
    %cst_23 = arith.constant 1.702000e+00 : f32
    %40 = vector.broadcast %cst_23 : f32 to vector<8x64xf32>
    %41 = arith.mulf %40, %39 : vector<8x64xf32>
    %42 = arith.negf %41 : vector<8x64xf32>
    %43 = math.exp %42 : vector<8x64xf32>
    %cst_24 = arith.constant 1.000000e+00 : f32
    %44 = vector.broadcast %cst_24 : f32 to vector<8x64xf32>
    %45 = arith.addf %44, %43 : vector<8x64xf32>
    %46 = arith.divf %44, %45 : vector<8x64xf32>
    %47 = arith.mulf %39, %46 : vector<8x64xf32>
    %48 = arith.truncf %47 : vector<8x64xf32> to vector<8x64xbf16>
    %c0_25 = arith.constant 0 : index
    %c0_26 = arith.constant 0 : index
    %49 = vector.load %arg10[%c0_25, %c0_26] : memref<64x32xbf16, #tpu.memory_space<vmem>>, vector<64x32xbf16>
    %cst_27 = arith.constant dense<0.000000e+00> : vector<8x32xf32>
    %50 = tpu.matmul %48, %49, %cst_27 {dimension_numbers = #tpu.dot_dimension_numbers<[1], [0], [0], [1], [0, 0, 1, 1], [], []>} : vector<8x64xbf16>, vector<64x32xbf16>, vector<8x32xf32> -> vector<8x32xf32>
    %c0_28 = arith.constant 0 : index
    %c0_29 = arith.constant 0 : index
    %51 = vector.load %arg11[%c0_28, %c0_29] : memref<1x32xf32, #tpu.memory_space<vmem>>, vector<1x32xf32>
    %52 = vector.broadcast %51 : vector<1x32xf32> to vector<8x32xf32>
    %53 = arith.addf %50, %52 : vector<8x32xf32>
    %54 = arith.addf %9, %53 : vector<8x32xf32>
    %c0_30 = arith.constant 0 : index
    %c0_31 = arith.constant 0 : index
    %55 = vector.load %arg12[%c0_30, %c0_31] : memref<1x32xf32, #tpu.memory_space<vmem>>, vector<1x32xf32>
    %c0_32 = arith.constant 0 : index
    %c0_33 = arith.constant 0 : index
    %56 = vector.load %arg13[%c0_32, %c0_33] : memref<1x32xf32, #tpu.memory_space<vmem>>, vector<1x32xf32>
    %cst_34 = arith.constant dense<0.000000e+00> : vector<8xf32>
    %57 = vector.multi_reduction <add>, %54, %cst_34 [1] : vector<8x32xf32> to vector<8xf32>
    %58 = vector.shape_cast %57 : vector<8xf32> to vector<8x1xf32>
    %cst_35 = arith.constant 3.200000e+01 : f32
    %59 = vector.broadcast %cst_35 : f32 to vector<8x1xf32>
    %60 = arith.divf %58, %59 : vector<8x1xf32>
    %61 = vector.broadcast %60 : vector<8x1xf32> to vector<8x32xf32>
    %62 = arith.subf %54, %61 : vector<8x32xf32>
    %63 = arith.mulf %62, %62 : vector<8x32xf32>
    %cst_36 = arith.constant dense<0.000000e+00> : vector<8xf32>
    %64 = vector.multi_reduction <add>, %63, %cst_36 [1] : vector<8x32xf32> to vector<8xf32>
    %65 = vector.shape_cast %64 : vector<8xf32> to vector<8x1xf32>
    %cst_37 = arith.constant 3.200000e+01 : f32
    %66 = vector.broadcast %cst_37 : f32 to vector<8x1xf32>
    %67 = arith.divf %65, %66 : vector<8x1xf32>
    %68 = vector.broadcast %60 : vector<8x1xf32> to vector<8x32xf32>
    %69 = arith.subf %54, %68 : vector<8x32xf32>
    %cst_38 = arith.constant 9.99999974E-6 : f32
    %70 = vector.broadcast %cst_38 : f32 to vector<8x1xf32>
    %71 = arith.addf %67, %70 : vector<8x1xf32>
    %72 = math.rsqrt %71 : vector<8x1xf32>
    %73 = vector.broadcast %72 : vector<8x1xf32> to vector<8x32xf32>
    %74 = arith.mulf %69, %73 : vector<8x32xf32>
    %75 = vector.broadcast %55 : vector<1x32xf32> to vector<8x32xf32>
    %76 = arith.mulf %74, %75 : vector<8x32xf32>
    %77 = vector.broadcast %56 : vector<1x32xf32> to vector<8x32xf32>
    %78 = arith.addf %76, %77 : vector<8x32xf32>
    %c0_39 = arith.constant 0 : index
    %c0_40 = arith.constant 0 : index
    %c0_41 = arith.constant 0 : index
    %79 = vector.load %arg14[%c0_39, %c0_40, %c0_41] : memref<1x8x32xf32, #tpu.memory_space<vmem>>, vector<1x8x32xf32>
    %80 = vector.shape_cast %79 : vector<1x8x32xf32> to vector<8x32xf32>
    %81 = vector.shape_cast %78 : vector<8x32xf32> to vector<1x8x32xf32>
    tpu.vector_store %arg14[%c0_39, %c0_40, %c0_41], %81 {strides = array<i32>} : memref<1x8x32xf32, #tpu.memory_space<vmem>>, vector<1x8x32xf32>,
    return
  }
  func.func @transform_0(%arg0: i32, %arg1: i32) -> (i32, i32, i32) {
    %c0_i32 = arith.constant 0 : i32
    %c0_i32_0 = arith.constant 0 : i32
    return %arg0, %arg1, %c0_i32 : i32, i32, i32
  }
  func.func @transform_1(%arg0: i32, %arg1: i32) -> (i32, i32, i32) {
    %c0_i32 = arith.constant 0 : i32
    %c0_i32_0 = arith.constant 0 : i32
    return %arg0, %arg1, %c0_i32 : i32, i32, i32
  }
  func.func @transform_2(%arg0: i32, %arg1: i32) -> (i32, i32) {
    %c0_i32 = arith.constant 0 : i32
    %c0_i32_0 = arith.constant 0 : i32
    %c0_i32_1 = arith.constant 0 : i32
    return %c0_i32, %c0_i32_0 : i32, i32
  }
  func.func @transform_3(%arg0: i32, %arg1: i32) -> (i32, i32) {
    %c0_i32 = arith.constant 0 : i32
    %c0_i32_0 = arith.constant 0 : i32
    %c0_i32_1 = arith.constant 0 : i32
    return %c0_i32, %c0_i32_0 : i32, i32
  }
  func.func @transform_4(%arg0: i32, %arg1: i32) -> (i32, i32) {
    %c0_i32 = arith.constant 0 : i32
    %c0_i32_0 = arith.constant 0 : i32
    %c0_i32_1 = arith.constant 0 : i32
    return %c0_i32, %c0_i32_0 : i32, i32
  }
  func.func @transform_5(%arg0: i32, %arg1: i32) -> (i32, i32) {
    %c0_i32 = arith.constant 0 : i32
    %c0_i32_0 = arith.constant 0 : i32
    %c0_i32_1 = arith.constant 0 : i32
    return %c0_i32, %c0_i32_0 : i32, i32
  }
  func.func @transform_6(%arg0: i32, %arg1: i32) -> (i32, i32) {
    %c0_i32 = arith.constant 0 : i32
    %c0_i32_0 = arith.constant 0 : i32
    %c0_i32_1 = arith.constant 0 : i32
    return %c0_i32, %c0_i32_0 : i32, i32
  }
  func.func @transform_7(%arg0: i32, %arg1: i32) -> (i32, i32) {
    %c0_i32 = arith.constant 0 : i32
    %c0_i32_0 = arith.constant 0 : i32
    %c0_i32_1 = arith.constant 0 : i32
    return %c0_i32, %c0_i32_0 : i32, i32
  }
  func.func @transform_8(%arg0: i32, %arg1: i32) -> (i32, i32) {
    %c0_i32 = arith.constant 0 : i32
    %c0_i32_0 = arith.constant 0 : i32
    %c0_i32_1 = arith.constant 0 : i32
    return %c0_i32, %c0_i32_0 : i32, i32
  }
  func.func @transform_9(%arg0: i32, %arg1: i32) -> (i32, i32) {
    %c0_i32 = arith.constant 0 : i32
    %c0_i32_0 = arith.constant 0 : i32
    %c0_i32_1 = arith.constant 0 : i32
    return %c0_i32, %c0_i32_0 : i32, i32
  }
  func.func @transform_10(%arg0: i32, %arg1: i32) -> (i32, i32) {
    %c0_i32 = arith.constant 0 : i32
    %c0_i32_0 = arith.constant 0 : i32
    %c0_i32_1 = arith.constant 0 : i32
    return %c0_i32, %c0_i32_0 : i32, i32
  }
  func.func @transform_11(%arg0: i32, %arg1: i32) -> (i32, i32) {
    %c0_i32 = arith.constant 0 : i32
    %c0_i32_0 = arith.constant 0 : i32
    %c0_i32_1 = arith.constant 0 : i32
    return %c0_i32, %c0_i32_0 : i32, i32
  }
  func.func @transform_12(%arg0: i32, %arg1: i32) -> (i32, i32, i32) {
    %c0_i32 = arith.constant 0 : i32
    %c0_i32_0 = arith.constant 0 : i32
    return %arg0, %arg1, %c0_i32 : i32, i32, i32
  }
}

module attributes {stable_mosaic.version = 11 : i64} {
  func.func @attn_kernel(%arg0: i32, %arg1: i32, %arg2: i32, %arg3: memref<1x4x8x8xbf16, #tpu.memory_space<vmem>>, %arg4: memref<1x4x8x8xbf16, #tpu.memory_space<vmem>>, %arg5: memref<1x4x8x8xbf16, #tpu.memory_space<vmem>>, %arg6: memref<1x8x32xbf16, #tpu.memory_space<vmem>>, %arg7: memref<4x8x1xf32, #tpu.memory_space<vmem>>, %arg8: memref<4x8x1xf32, #tpu.memory_space<vmem>>, %arg9: memref<4x8x8xf32, #tpu.memory_space<vmem>>) attributes {dimension_semantics = [#tpu.dimension_semantics<parallel>, #tpu.dimension_semantics<parallel>, #tpu.dimension_semantics<arbitrary>], iteration_bounds = array<i64: 2, 1, 1>, scalar_prefetch = 0 : i64, scratch_operands = 3 : i64, tpu.core_type = #tpu.core_type<tc>, window_params = [{transform_indices = @transform_0, window_bounds = array<i64: 1, 4, 8, 8>}, {transform_indices = @transform_1, window_bounds = array<i64: 1, 4, 8, 8>}, {transform_indices = @transform_2, window_bounds = array<i64: 1, 4, 8, 8>}, {transform_indices = @transform_3, window_bounds = array<i64: 1, 8, 32>}]} {
    %c0_i32 = arith.constant 0 : i32
    %0 = arith.cmpi eq, %arg2, %c0_i32 : i32
    %1 = arith.extui %0 : i1 to i32
    %c0_i32_0 = arith.constant 0 : i32
    %2 = arith.cmpi ne, %1, %c0_i32_0 : i32
    scf.if %2 {
      %cst_35 = arith.constant 0xFF800000 : f32
      %36 = vector.broadcast %cst_35 : f32 to vector<4x8x1xf32>
      %c0_36 = arith.constant 0 : index
      %c0_37 = arith.constant 0 : index
      %c0_38 = arith.constant 0 : index
      %37 = vector.load %arg7[%c0_36, %c0_37, %c0_38] : memref<4x8x1xf32, #tpu.memory_space<vmem>>, vector<4x8x1xf32>
      tpu.vector_store %arg7[%c0_36, %c0_37, %c0_38], %36 {strides = array<i32>} : memref<4x8x1xf32, #tpu.memory_space<vmem>>, vector<4x8x1xf32>,
      %cst_39 = arith.constant 0.000000e+00 : f32
      %38 = vector.broadcast %cst_39 : f32 to vector<4x8x1xf32>
      %c0_40 = arith.constant 0 : index
      %c0_41 = arith.constant 0 : index
      %c0_42 = arith.constant 0 : index
      %39 = vector.load %arg8[%c0_40, %c0_41, %c0_42] : memref<4x8x1xf32, #tpu.memory_space<vmem>>, vector<4x8x1xf32>
      tpu.vector_store %arg8[%c0_40, %c0_41, %c0_42], %38 {strides = array<i32>} : memref<4x8x1xf32, #tpu.memory_space<vmem>>, vector<4x8x1xf32>,
      %cst_43 = arith.constant 0.000000e+00 : f32
      %40 = vector.broadcast %cst_43 : f32 to vector<4x8x8xf32>
      %c0_44 = arith.constant 0 : index
      %c0_45 = arith.constant 0 : index
      %c0_46 = arith.constant 0 : index
      %41 = vector.load %arg9[%c0_44, %c0_45, %c0_46] : memref<4x8x8xf32, #tpu.memory_space<vmem>>, vector<4x8x8xf32>
      tpu.vector_store %arg9[%c0_44, %c0_45, %c0_46], %40 {strides = array<i32>} : memref<4x8x8xf32, #tpu.memory_space<vmem>>, vector<4x8x8xf32>,
    } else {
    }
    %c0 = arith.constant 0 : index
    %c0_1 = arith.constant 0 : index
    %c0_2 = arith.constant 0 : index
    %c0_3 = arith.constant 0 : index
    %3 = vector.load %arg3[%c0, %c0_1, %c0_2, %c0_3] : memref<1x4x8x8xbf16, #tpu.memory_space<vmem>>, vector<1x4x8x8xbf16>
    %4 = vector.shape_cast %3 : vector<1x4x8x8xbf16> to vector<4x8x8xbf16>
    %c0_4 = arith.constant 0 : index
    %c0_5 = arith.constant 0 : index
    %c0_6 = arith.constant 0 : index
    %c0_7 = arith.constant 0 : index
    %5 = vector.load %arg4[%c0_4, %c0_5, %c0_6, %c0_7] : memref<1x4x8x8xbf16, #tpu.memory_space<vmem>>, vector<1x4x8x8xbf16>
    %6 = vector.shape_cast %5 : vector<1x4x8x8xbf16> to vector<4x8x8xbf16>
    %c0_8 = arith.constant 0 : index
    %c0_9 = arith.constant 0 : index
    %c0_10 = arith.constant 0 : index
    %c0_11 = arith.constant 0 : index
    %7 = vector.load %arg5[%c0_8, %c0_9, %c0_10, %c0_11] : memref<1x4x8x8xbf16, #tpu.memory_space<vmem>>, vector<1x4x8x8xbf16>
    %8 = vector.shape_cast %7 : vector<1x4x8x8xbf16> to vector<4x8x8xbf16>
    "tpu.trace_start"() <{level = 10 : i32, message = "hqd,hkd->hqk"}> : () -> ()
    %cst = arith.constant dense<0.000000e+00> : vector<4x8x8xf32>
    %9 = tpu.matmul %4, %6, %cst {dimension_numbers = #tpu.dot_dimension_numbers<[2], [2], [1], [1], [0, 0, 0, 1, 1, 1], [0], [0]>} : vector<4x8x8xbf16>, vector<4x8x8xbf16>, vector<4x8x8xf32> -> vector<4x8x8xf32>
    "tpu.trace_stop"() : () -> ()
    %c0_12 = arith.constant 0 : index
    %c0_13 = arith.constant 0 : index
    %c0_14 = arith.constant 0 : index
    %10 = vector.load %arg7[%c0_12, %c0_13, %c0_14] : memref<4x8x1xf32, #tpu.memory_space<vmem>>, vector<4x8x1xf32>
    %cst_15 = arith.constant dense<0xFF800000> : vector<4x8xf32>
    %11 = vector.multi_reduction <maximumf>, %9, %cst_15 [2] : vector<4x8x8xf32> to vector<4x8xf32>
    %12 = vector.shape_cast %11 : vector<4x8xf32> to vector<4x8x1xf32>
    %13 = arith.maximumf %10, %12 : vector<4x8x1xf32>
    %14 = arith.subf %10, %13 : vector<4x8x1xf32>
    %15 = math.exp %14 : vector<4x8x1xf32>
    %16 = vector.broadcast %13 : vector<4x8x1xf32> to vector<4x8x8xf32>
    %17 = arith.subf %9, %16 : vector<4x8x8xf32>
    %18 = math.exp %17 : vector<4x8x8xf32>
    %c0_16 = arith.constant 0 : index
    %c0_17 = arith.constant 0 : index
    %c0_18 = arith.constant 0 : index
    %19 = vector.load %arg8[%c0_16, %c0_17, %c0_18] : memref<4x8x1xf32, #tpu.memory_space<vmem>>, vector<4x8x1xf32>
    %20 = arith.mulf %15, %19 : vector<4x8x1xf32>
    %cst_19 = arith.constant dense<0.000000e+00> : vector<4x8xf32>
    %21 = vector.multi_reduction <add>, %18, %cst_19 [2] : vector<4x8x8xf32> to vector<4x8xf32>
    %22 = vector.shape_cast %21 : vector<4x8xf32> to vector<4x8x1xf32>
    %23 = arith.addf %20, %22 : vector<4x8x1xf32>
    %c0_20 = arith.constant 0 : index
    %c0_21 = arith.constant 0 : index
    %c0_22 = arith.constant 0 : index
    %24 = vector.load %arg8[%c0_20, %c0_21, %c0_22] : memref<4x8x1xf32, #tpu.memory_space<vmem>>, vector<4x8x1xf32>
    tpu.vector_store %arg8[%c0_20, %c0_21, %c0_22], %23 {strides = array<i32>} : memref<4x8x1xf32, #tpu.memory_space<vmem>>, vector<4x8x1xf32>,
    %c0_23 = arith.constant 0 : index
    %c0_24 = arith.constant 0 : index
    %c0_25 = arith.constant 0 : index
    %25 = vector.load %arg9[%c0_23, %c0_24, %c0_25] : memref<4x8x8xf32, #tpu.memory_space<vmem>>, vector<4x8x8xf32>
    %26 = vector.broadcast %15 : vector<4x8x1xf32> to vector<4x8x8xf32>
    %27 = arith.mulf %26, %25 : vector<4x8x8xf32>
    %28 = arith.truncf %18 : vector<4x8x8xf32> to vector<4x8x8xbf16>
    "tpu.trace_start"() <{level = 10 : i32, message = "hqk,hkd->hqd"}> : () -> ()
    %cst_26 = arith.constant dense<0.000000e+00> : vector<4x8x8xf32>
    %29 = tpu.matmul %28, %8, %cst_26 {dimension_numbers = #tpu.dot_dimension_numbers<[2], [1], [1], [2], [0, 0, 0, 1, 1, 2], [0], [0]>} : vector<4x8x8xbf16>, vector<4x8x8xbf16>, vector<4x8x8xf32> -> vector<4x8x8xf32>
    "tpu.trace_stop"() : () -> ()
    %30 = arith.addf %27, %29 : vector<4x8x8xf32>
    %c0_27 = arith.constant 0 : index
    %c0_28 = arith.constant 0 : index
    %c0_29 = arith.constant 0 : index
    %31 = vector.load %arg9[%c0_27, %c0_28, %c0_29] : memref<4x8x8xf32, #tpu.memory_space<vmem>>, vector<4x8x8xf32>
    tpu.vector_store %arg9[%c0_27, %c0_28, %c0_29], %30 {strides = array<i32>} : memref<4x8x8xf32, #tpu.memory_space<vmem>>, vector<4x8x8xf32>,
    %c0_30 = arith.constant 0 : index
    %c0_31 = arith.constant 0 : index
    %c0_32 = arith.constant 0 : index
    %32 = vector.load %arg7[%c0_30, %c0_31, %c0_32] : memref<4x8x1xf32, #tpu.memory_space<vmem>>, vector<4x8x1xf32>
    tpu.vector_store %arg7[%c0_30, %c0_31, %c0_32], %13 {strides = array<i32>} : memref<4x8x1xf32, #tpu.memory_space<vmem>>, vector<4x8x1xf32>,
    %c0_i32_33 = arith.constant 0 : i32
    %33 = arith.cmpi eq, %arg2, %c0_i32_33 : i32
    %34 = arith.extui %33 : i1 to i32
    %c0_i32_34 = arith.constant 0 : i32
    %35 = arith.cmpi ne, %34, %c0_i32_34 : i32
    scf.if %35 {
      %c0_35 = arith.constant 0 : index
      %c0_36 = arith.constant 0 : index
      %c0_37 = arith.constant 0 : index
      %36 = vector.load %arg9[%c0_35, %c0_36, %c0_37] : memref<4x8x8xf32, #tpu.memory_space<vmem>>, vector<4x8x8xf32>
      %c0_38 = arith.constant 0 : index
      %c0_39 = arith.constant 0 : index
      %c0_40 = arith.constant 0 : index
      %37 = vector.load %arg8[%c0_38, %c0_39, %c0_40] : memref<4x8x1xf32, #tpu.memory_space<vmem>>, vector<4x8x1xf32>
      %38 = vector.broadcast %37 : vector<4x8x1xf32> to vector<4x8x8xf32>
      %39 = arith.divf %36, %38 : vector<4x8x8xf32>
      %40 = tpu.transpose %39, [1, 0, 2] : vector<4x8x8xf32> -> vector<8x4x8xf32>
      %41 = vector.shape_cast %40 : vector<8x4x8xf32> to vector<8x32xf32>
      %42 = arith.truncf %41 : vector<8x32xf32> to vector<8x32xbf16>
      %c0_41 = arith.constant 0 : index
      %c0_42 = arith.constant 0 : index
      %c0_43 = arith.constant 0 : index
      %43 = vector.load %arg6[%c0_41, %c0_42, %c0_43] : memref<1x8x32xbf16, #tpu.memory_space<vmem>>, vector<1x8x32xbf16>
      %44 = vector.shape_cast %43 : vector<1x8x32xbf16> to vector<8x32xbf16>
      %45 = vector.shape_cast %42 : vector<8x32xbf16> to vector<1x8x32xbf16>
      tpu.vector_store %arg6[%c0_41, %c0_42, %c0_43], %45 {strides = array<i32>} : memref<1x8x32xbf16, #tpu.memory_space<vmem>>, vector<1x8x32xbf16>,
    } else {
    }
    return
  }
  func.func @transform_0(%arg0: i32, %arg1: i32, %arg2: i32) -> (i32, i32, i32, i32) {
    %c0_i32 = arith.constant 0 : i32
    %c0_i32_0 = arith.constant 0 : i32
    %c0_i32_1 = arith.constant 0 : i32
    return %arg0, %c0_i32, %arg1, %c0_i32_0 : i32, i32, i32, i32
  }
  func.func @transform_1(%arg0: i32, %arg1: i32, %arg2: i32) -> (i32, i32, i32, i32) {
    %c0_i32 = arith.constant 0 : i32
    %c0_i32_0 = arith.constant 0 : i32
    %c0_i32_1 = arith.constant 0 : i32
    return %arg0, %c0_i32, %arg2, %c0_i32_0 : i32, i32, i32, i32
  }
  func.func @transform_2(%arg0: i32, %arg1: i32, %arg2: i32) -> (i32, i32, i32, i32) {
    %c0_i32 = arith.constant 0 : i32
    %c0_i32_0 = arith.constant 0 : i32
    %c0_i32_1 = arith.constant 0 : i32
    return %arg0, %c0_i32, %arg2, %c0_i32_0 : i32, i32, i32, i32
  }
  func.func @transform_3(%arg0: i32, %arg1: i32, %arg2: i32) -> (i32, i32, i32) {
    %c0_i32 = arith.constant 0 : i32
    %c0_i32_0 = arith.constant 0 : i32
    return %arg0, %arg1, %c0_i32 : i32, i32, i32
  }
}

</mosaic_0001>

<llo_original>
// kernel: transformer_forward.8
$region0: #{transformer_forward.8}
  #allocation0 [shape = 'u32[]', space=smem, size = 0x4, offset = 0x4, fixed_abs, tag = 'smem constant byte address 0x4 - core index']
  #allocation1 [shape = 'u32[144,128]{1,0:T(1,128)}', space=vmem, size = 0x12000, scoped, tag = 'internal scratch']
  %s0 = inlined_call_operand.hbm [shape: f32[2,8,32], index: 0, kind: input, shape index: {}]
  %s1 = inlined_call_operand.hbm [shape: bf16[2,8,32], index: 1, kind: input, shape index: {}]
  %s2 = inlined_call_operand.hbm [shape: bf16[32,32], index: 2, kind: input, shape index: {}]
  %s3 = inlined_call_operand.hbm [shape: f32[1,32], index: 3, kind: input, shape index: {}]
  %s4 = inlined_call_operand.hbm [shape: f32[1,32], index: 4, kind: input, shape index: {}]
  %s5 = inlined_call_operand.hbm [shape: f32[1,32], index: 5, kind: input, shape index: {}]
  %s6 = inlined_call_operand.hbm [shape: bf16[32,64], index: 6, kind: input, shape index: {}]
  %s7 = inlined_call_operand.hbm [shape: f32[1,64], index: 7, kind: input, shape index: {}]
  %s8 = inlined_call_operand.hbm [shape: bf16[64,32], index: 8, kind: input, shape index: {}]
  %s9 = inlined_call_operand.hbm [shape: f32[1,32], index: 9, kind: input, shape index: {}]
  %s10 = inlined_call_operand.hbm [shape: f32[1,32], index: 10, kind: input, shape index: {}]
  %s11 = inlined_call_operand.hbm [shape: f32[1,32], index: 11, kind: input, shape index: {}]
  %s12 = inlined_call_operand.hbm [shape: f32[2,8,32], index: 12, kind: output, shape index: {}]
  %s13 = sld [smem:[#allocation0]]
  $region129: #{transformer_forward.8} parent=0
    _
  %s15 = ssub.s32 1, %s13
  %s16 = scalar_select 0, %s15, %s13
  $region1: #{transformer_forward.8} parent=0
    #allocation2 [shape = 'u8[8192]{0}', space=vmem, size = 0x2000, scoped, tag = 'input window, operand 0']
    #allocation3 [shape = 's32[2]{0}', space=sflag, size = 0x8, scoped, tag = 'scoped memory for transformer_forward.8']
    #allocation4 [shape = 's32[2]{0}', space=sflag, size = 0x8, scoped, tag = 'scoped memory for transformer_forward.8']
    #allocation5 [shape = 'u8[4096]{0}', space=vmem, size = 0x1000, scoped, tag = 'input window, operand 1']
    #allocation6 [shape = 's32[2]{0}', space=sflag, size = 0x8, scoped, tag = 'scoped memory for transformer_forward.8']
    #allocation7 [shape = 'u8[8192]{0}', space=vmem, size = 0x2000, scoped, tag = 'input window, operand 2, single buffered']
    #allocation8 [shape = 'u8[512]{0}', space=vmem, size = 0x400, scoped, tag = 'input window, operand 3, single buffered']
    #allocation9 [shape = 's32[1]{0}', space=sflag, size = 0x4, scoped, tag = 'scoped memory for transformer_forward.8']
    #allocation10 [shape = 'u8[512]{0}', space=vmem, size = 0x400, scoped, tag = 'input window, operand 4, single buffered']
    #allocation11 [shape = 'u8[512]{0}', space=vmem, size = 0x400, scoped, tag = 'input window, operand 5, single buffered']
    #allocation12 [shape = 's32[1]{0}', space=sflag, size = 0x4, scoped, tag = 'scoped memory for transformer_forward.8']
    #allocation13 [shape = 'u8[8192]{0}', space=vmem, size = 0x2000, scoped, tag = 'input window, operand 6, single buffered']
    #allocation14 [shape = 'u8[512]{0}', space=vmem, size = 0x400, scoped, tag = 'input window, operand 7, single buffered']
    #allocation15 [shape = 's32[1]{0}', space=sflag, size = 0x4, scoped, tag = 'scoped memory for transformer_forward.8']
    #allocation16 [shape = 'u8[16384]{0}', space=vmem, size = 0x4000, scoped, tag = 'input window, operand 8, single buffered']
    #allocation17 [shape = 'u8[512]{0}', space=vmem, size = 0x400, scoped, tag = 'input window, operand 9, single buffered']
    #allocation18 [shape = 's32[1]{0}', space=sflag, size = 0x4, scoped, tag = 'scoped memory for transformer_forward.8']
    #allocation19 [shape = 'u8[512]{0}', space=vmem, size = 0x400, scoped, tag = 'input window, operand 10, single buffered']
    #allocation20 [shape = 'u8[512]{0}', space=vmem, size = 0x400, scoped, tag = 'input window, operand 11, single buffered']
    #allocation21 [shape = 's32[1]{0}', space=sflag, size = 0x4, scoped, tag = 'scoped memory for transformer_forward.8']
    #allocation22 [shape = 'u8[8192]{0}', space=vmem, size = 0x2000, scoped, tag = 'output window, operand 0']
    %17 = vsyncpa [#allocation3], 0
    %s18 = scalar_lea.sflag [#allocation3], 1
    %19 = vsyncpa %s18, 0
    %20 = vsyncpa [#allocation6], 0
    %s21 = scalar_lea.sflag [#allocation6], 1
    %22 = vsyncpa %s21, 0
    %23 = vsyncpa [#allocation9], 0
    %24 = vsyncpa [#allocation12], 0
    %25 = vsyncpa [#allocation15], 0
    %26 = vsyncpa [#allocation18], 0
    %27 = vsyncpa [#allocation21], 0
    %28 = vsyncpa [#allocation4], 0
    %s29 = scalar_lea.sflag [#allocation4], 1
    %30 = vsyncpa %s29, 0
    loop: start=0, step=1, limit=4
    $region2: #{transformer_forward.8} parent=1 // loop_pre_header
      _
    $region3: #{transformer_forward.8} parent=1 // loop_header
      %s32 = sphi 0, %s36
      %p33 = scmp.ge.s32.totalorder %s32, 4
      %s39 = sphi 0, %s51
      %s40 = sphi 0, %s47
      %s41 = sphi 0, %s39
      %s42 = sphi 0, %s40
      %s43 = sphi 0, %s41
      %s44 = sphi 0, %s42
      %s56 = sphi 0, %s58
      %s59 = sphi 0, %s56
      %s60 = sphi 0, %s59
      %s76 = sphi 0, %s60
      %s84 = sphi 0, %s86
      %s87 = sphi 0, %s84
      %s88 = sphi 0, %s87
      %s104 = sphi 0, %s88
      %s108 = sphi 0, %s108
      %s110 = sphi 0, %s108
      %s111 = sphi 0, %s110
      %s125 = sphi 0, %s111
      %s129 = sphi 0, %s129
      %s131 = sphi 0, %s129
      %s132 = sphi 0, %s131
      %s146 = sphi 0, %s132
      %s150 = sphi 0, %s150
      %s152 = sphi 0, %s150
      %s153 = sphi 0, %s152
      %s167 = sphi 0, %s153
      %s171 = sphi 0, %s171
      %s173 = sphi 0, %s171
      %s174 = sphi 0, %s173
      %s188 = sphi 0, %s174
      %s192 = sphi 0, %s192
      %s194 = sphi 0, %s192
      %s195 = sphi 0, %s194
      %s209 = sphi 0, %s195
      %s213 = sphi 0, %s213
      %s215 = sphi 0, %s213
      %s216 = sphi 0, %s215
      %s230 = sphi 0, %s216
      %s234 = sphi 0, %s234
      %s236 = sphi 0, %s234
      %s237 = sphi 0, %s236
      %s251 = sphi 0, %s237
      %s255 = sphi 0, %s255
      %s257 = sphi 0, %s255
      %s258 = sphi 0, %s257
      %s272 = sphi 0, %s258
      %s276 = sphi 0, %s276
      %s278 = sphi 0, %s276
      %s279 = sphi 0, %s278
      %s293 = sphi 0, %s279
      %s297 = sphi 0, %s297
      %s299 = sphi 0, %s297
      %s300 = sphi 0, %s299
      %s314 = sphi 0, %s300
      %s322 = sphi 0, %s324
      %s325 = sphi 0, %s322
      %s326 = sphi 0, %s325
      %s342 = sphi 0, %s326
    $region4: #{transformer_forward.8} parent=1 // loop_header_branch
      %35 = sbr.rel (%p33) target = $region8
    $region5: #{transformer_forward.8} parent=1 // loop_body
      %s37 = ssub.s32 %s32, 1
      %s38 = ssub.s32 %s32, 2
      %s45 = sadd.s32 1, %s40
      %p46 = scmp.ge.s32.totalorder %s45, 1
      %s47 = scalar_select %p46, 0, %s45
      %s48 = sadd.s32 1, %s39
      %s49 = scalar_select %p46, %s48, %s39
      %p50 = scmp.ge.s32.totalorder %s49, 2
      %s51 = scalar_select %p50, 0, %s49
      %s52 = ssub.s32 %s39, %s51
      %s53 = ssub.s32 %s40, %s47
      %s54 = sor.u32 %s52, %s53
      %p55 = scmp.eq.s32.totalorder %s54, 0
      %s57 = sadd.s32 %s56, 1
      %s58 = scalar_select %p55, %s56, %s57
      %p61 = pneg %p55
      %p62 = scmp.eq.s32.totalorder %s32, 1
      %p63 = por %p61, %p62
      %p64 = scmp.ne.s32.totalorder %s56, %s59
      %p65 = scmp.eq.s32.totalorder %s32, 0
      %p66 = por %p64, %p65
      %p67 = scmp.ne.s32.totalorder %s56, %s59
      %p68 = scmp.eq.s32.totalorder %s37, 1
      %p69 = por %p67, %p68
      %p70 = scmp.ne.s32.totalorder %s59, %s60
      %p71 = scmp.eq.s32.totalorder %s37, 0
      %p72 = por %p70, %p71
      %p73 = scmp.ne.s32.totalorder %s59, %s60
      %p74 = scmp.eq.s32.totalorder %s38, 1
      %p75 = por %p73, %p74
      %p77 = scmp.ne.s32.totalorder %s60, %s76
      %p78 = scmp.eq.s32.totalorder %s38, 0
      %p79 = por %p77, %p78
      %s80 = ssub.s32 %s39, %s51
      %s81 = ssub.s32 %s40, %s47
      %s82 = sor.u32 %s80, %s81
      %p83 = scmp.eq.s32.totalorder %s82, 0
      %s85 = sadd.s32 %s84, 1
      %s86 = scalar_select %p83, %s84, %s85
      %p89 = pneg %p83
      %p90 = scmp.eq.s32.totalorder %s32, 1
      %p91 = por %p89, %p90
      %p92 = scmp.ne.s32.totalorder %s84, %s87
      %p93 = scmp.eq.s32.totalorder %s32, 0
      %p94 = por %p92, %p93
      %p95 = scmp.ne.s32.totalorder %s84, %s87
      %p96 = scmp.eq.s32.totalorder %s37, 1
      %p97 = por %p95, %p96
      %p98 = scmp.ne.s32.totalorder %s87, %s88
      %p99 = scmp.eq.s32.totalorder %s37, 0
      %p100 = por %p98, %p99
      %p101 = scmp.ne.s32.totalorder %s87, %s88
      %p102 = scmp.eq.s32.totalorder %s38, 1
      %p103 = por %p101, %p102
      %p105 = scmp.ne.s32.totalorder %s88, %s104
      %p106 = scmp.eq.s32.totalorder %s38, 0
      %p107 = por %p105, %p106
      %s109 = sadd.s32 %s108, 1
      %p112 = scmp.eq.s32.totalorder %s32, 1
      %p113 = scmp.ne.s32.totalorder %s108, %s110
      %p114 = scmp.eq.s32.totalorder %s32, 0
      %p115 = por %p113, %p114
      %p116 = scmp.ne.s32.totalorder %s108, %s110
      %p117 = scmp.eq.s32.totalorder %s37, 1
      %p118 = por %p116, %p117
      %p119 = scmp.ne.s32.totalorder %s110, %s111
      %p120 = scmp.eq.s32.totalorder %s37, 0
      %p121 = por %p119, %p120
      %p122 = scmp.ne.s32.totalorder %s110, %s111
      %p123 = scmp.eq.s32.totalorder %s38, 1
      %p124 = por %p122, %p123
      %p126 = scmp.ne.s32.totalorder %s111, %s125
      %p127 = scmp.eq.s32.totalorder %s38, 0
      %p128 = por %p126, %p127
      %s130 = sadd.s32 %s129, 1
      %p133 = scmp.eq.s32.totalorder %s32, 1
      %p134 = scmp.ne.s32.totalorder %s129, %s131
      %p135 = scmp.eq.s32.totalorder %s32, 0
      %p136 = por %p134, %p135
      %p137 = scmp.ne.s32.totalorder %s129, %s131
      %p138 = scmp.eq.s32.totalorder %s37, 1
      %p139 = por %p137, %p138
      %p140 = scmp.ne.s32.totalorder %s131, %s132
      %p141 = scmp.eq.s32.totalorder %s37, 0
      %p142 = por %p140, %p141
      %p143 = scmp.ne.s32.totalorder %s131, %s132
      %p144 = scmp.eq.s32.totalorder %s38, 1
      %p145 = por %p143, %p144
      %p147 = scmp.ne.s32.totalorder %s132, %s146
      %p148 = scmp.eq.s32.totalorder %s38, 0
      %p149 = por %p147, %p148
      %s151 = sadd.s32 %s150, 1
      %p154 = scmp.eq.s32.totalorder %s32, 1
      %p155 = scmp.ne.s32.totalorder %s150, %s152
      %p156 = scmp.eq.s32.totalorder %s32, 0
      %p157 = por %p155, %p156
      %p158 = scmp.ne.s32.totalorder %s150, %s152
      %p159 = scmp.eq.s32.totalorder %s37, 1
      %p160 = por %p158, %p159
      %p161 = scmp.ne.s32.totalorder %s152, %s153
      %p162 = scmp.eq.s32.totalorder %s37, 0
      %p163 = por %p161, %p162
      %p164 = scmp.ne.s32.totalorder %s152, %s153
      %p165 = scmp.eq.s32.totalorder %s38, 1
      %p166 = por %p164, %p165
      %p168 = scmp.ne.s32.totalorder %s153, %s167
      %p169 = scmp.eq.s32.totalorder %s38, 0
      %p170 = por %p168, %p169
      %s172 = sadd.s32 %s171, 1
      %p175 = scmp.eq.s32.totalorder %s32, 1
      %p176 = scmp.ne.s32.totalorder %s171, %s173
      %p177 = scmp.eq.s32.totalorder %s32, 0
      %p178 = por %p176, %p177
      %p179 = scmp.ne.s32.totalorder %s171, %s173
      %p180 = scmp.eq.s32.totalorder %s37, 1
      %p181 = por %p179, %p180
      %p182 = scmp.ne.s32.totalorder %s173, %s174
      %p183 = scmp.eq.s32.totalorder %s37, 0
      %p184 = por %p182, %p183
      %p185 = scmp.ne.s32.totalorder %s173, %s174
      %p186 = scmp.eq.s32.totalorder %s38, 1
      %p187 = por %p185, %p186
      %p189 = scmp.ne.s32.totalorder %s174, %s188
      %p190 = scmp.eq.s32.totalorder %s38, 0
      %p191 = por %p189, %p190
      %s193 = sadd.s32 %s192, 1
      %p196 = scmp.eq.s32.totalorder %s32, 1
      %p197 = scmp.ne.s32.totalorder %s192, %s194
      %p198 = scmp.eq.s32.totalorder %s32, 0
      %p199 = por %p197, %p198
      %p200 = scmp.ne.s32.totalorder %s192, %s194
      %p201 = scmp.eq.s32.totalorder %s37, 1
      %p202 = por %p200, %p201
      %p203 = scmp.ne.s32.totalorder %s194, %s195
      %p204 = scmp.eq.s32.totalorder %s37, 0
      %p205 = por %p203, %p204
      %p206 = scmp.ne.s32.totalorder %s194, %s195
      %p207 = scmp.eq.s32.totalorder %s38, 1
      %p208 = por %p206, %p207
      %p210 = scmp.ne.s32.totalorder %s195, %s209
      %p211 = scmp.eq.s32.totalorder %s38, 0
      %p212 = por %p210, %p211
      %s214 = sadd.s32 %s213, 1
      %p217 = scmp.eq.s32.totalorder %s32, 1
      %p218 = scmp.ne.s32.totalorder %s213, %s215
      %p219 = scmp.eq.s32.totalorder %s32, 0
      %p220 = por %p218, %p219
      %p221 = scmp.ne.s32.totalorder %s213, %s215
      %p222 = scmp.eq.s32.totalorder %s37, 1
      %p223 = por %p221, %p222
      %p224 = scmp.ne.s32.totalorder %s215, %s216
      %p225 = scmp.eq.s32.totalorder %s37, 0
      %p226 = por %p224, %p225
      %p227 = scmp.ne.s32.totalorder %s215, %s216
      %p228 = scmp.eq.s32.totalorder %s38, 1
      %p229 = por %p227, %p228
      %p231 = scmp.ne.s32.totalorder %s216, %s230
      %p232 = scmp.eq.s32.totalorder %s38, 0
      %p233 = por %p231, %p232
      %s235 = sadd.s32 %s234, 1
      %p238 = scmp.eq.s32.totalorder %s32, 1
      %p239 = scmp.ne.s32.totalorder %s234, %s236
      %p240 = scmp.eq.s32.totalorder %s32, 0
      %p241 = por %p239, %p240
      %p242 = scmp.ne.s32.totalorder %s234, %s236
      %p243 = scmp.eq.s32.totalorder %s37, 1
      %p244 = por %p242, %p243
      %p245 = scmp.ne.s32.totalorder %s236, %s237
      %p246 = scmp.eq.s32.totalorder %s37, 0
      %p247 = por %p245, %p246
      %p248 = scmp.ne.s32.totalorder %s236, %s237
      %p249 = scmp.eq.s32.totalorder %s38, 1
      %p250 = por %p248, %p249
      %p252 = scmp.ne.s32.totalorder %s237, %s251
      %p253 = scmp.eq.s32.totalorder %s38, 0
      %p254 = por %p252, %p253
      %s256 = sadd.s32 %s255, 1
      %p259 = scmp.eq.s32.totalorder %s32, 1
      %p260 = scmp.ne.s32.totalorder %s255, %s257
      %p261 = scmp.eq.s32.totalorder %s32, 0
      %p262 = por %p260, %p261
      %p263 = scmp.ne.s32.totalorder %s255, %s257
      %p264 = scmp.eq.s32.totalorder %s37, 1
      %p265 = por %p263, %p264
      %p266 = scmp.ne.s32.totalorder %s257, %s258
      %p267 = scmp.eq.s32.totalorder %s37, 0
      %p268 = por %p266, %p267
      %p269 = scmp.ne.s32.totalorder %s257, %s258
      %p270 = scmp.eq.s32.totalorder %s38, 1
      %p271 = por %p269, %p270
      %p273 = scmp.ne.s32.totalorder %s258, %s272
      %p274 = scmp.eq.s32.totalorder %s38, 0
      %p275 = por %p273, %p274
      %s277 = sadd.s32 %s276, 1
      %p280 = scmp.eq.s32.totalorder %s32, 1
      %p281 = scmp.ne.s32.totalorder %s276, %s278
      %p282 = scmp.eq.s32.totalorder %s32, 0
      %p283 = por %p281, %p282
      %p284 = scmp.ne.s32.totalorder %s276, %s278
      %p285 = scmp.eq.s32.totalorder %s37, 1
      %p286 = por %p284, %p285
      %p287 = scmp.ne.s32.totalorder %s278, %s279
      %p288 = scmp.eq.s32.totalorder %s37, 0
      %p289 = por %p287, %p288
      %p290 = scmp.ne.s32.totalorder %s278, %s279
      %p291 = scmp.eq.s32.totalorder %s38, 1
      %p292 = por %p290, %p291
      %p294 = scmp.ne.s32.totalorder %s279, %s293
      %p295 = scmp.eq.s32.totalorder %s38, 0
      %p296 = por %p294, %p295
      %s298 = sadd.s32 %s297, 1
      %p301 = scmp.eq.s32.totalorder %s32, 1
      %p302 = scmp.ne.s32.totalorder %s297, %s299
      %p303 = scmp.eq.s32.totalorder %s32, 0
      %p304 = por %p302, %p303
      %p305 = scmp.ne.s32.totalorder %s297, %s299
      %p306 = scmp.eq.s32.totalorder %s37, 1
      %p307 = por %p305, %p306
      %p308 = scmp.ne.s32.totalorder %s299, %s300
      %p309 = scmp.eq.s32.totalorder %s37, 0
      %p310 = por %p308, %p309
      %p311 = scmp.ne.s32.totalorder %s299, %s300
      %p312 = scmp.eq.s32.totalorder %s38, 1
      %p313 = por %p311, %p312
      %p315 = scmp.ne.s32.totalorder %s300, %s314
      %p316 = scmp.eq.s32.totalorder %s38, 0
      %p317 = por %p315, %p316
      %s318 = ssub.s32 %s39, %s51
      %s319 = ssub.s32 %s40, %s47
      %s320 = sor.u32 %s318, %s319
      %p321 = scmp.eq.s32.totalorder %s320, 0
      %s323 = sadd.s32 %s322, 1
      %s324 = scalar_select %p321, %s322, %s323
      %p327 = pneg %p321
      %p328 = scmp.eq.s32.totalorder %s32, 1
      %p329 = por %p327, %p328
      %p330 = scmp.ne.s32.totalorder %s322, %s325
      %p331 = scmp.eq.s32.totalorder %s32, 0
      %p332 = por %p330, %p331
      %p333 = scmp.ne.s32.totalorder %s322, %s325
      %p334 = scmp.eq.s32.totalorder %s37, 1
      %p335 = por %p333, %p334
      %p336 = scmp.ne.s32.totalorder %s325, %s326
      %p337 = scmp.eq.s32.totalorder %s37, 0
      %p338 = por %p336, %p337
      %p339 = scmp.ne.s32.totalorder %s325, %s326
      %p340 = scmp.eq.s32.totalorder %s38, 1
      %p341 = por %p339, %p340
      %p343 = scmp.ne.s32.totalorder %s326, %s342
      %p344 = scmp.eq.s32.totalorder %s38, 0
      %p345 = por %p343, %p344
      %p346 = scmp.le.s32.totalorder 1, %s32
      %p347 = scmp.lt.s32.totalorder %s32, 3
      %p348 = pnand %p346, %p347
      %p349 = pneg %p348
      // Predicated region
      $region9: #{transformer_forward.8} parent=5 // pred_check
        _
      $region10: #{transformer_forward.8} parent=5 // pred_check_branch
        %351 = sbr.rel (%p348) target = $region12
      $region11: #{transformer_forward.8} parent=5 // pred_region
        %s352 = ssub.s32 %s32, 1
        // Predicated region
        $region13: #{transformer_forward.8} parent=11 // pred_check
          %p353 = pneg %p121
        $region14: #{transformer_forward.8} parent=11 // pred_check_branch
          %355 = sbr.rel (%p353) target = $region16
        $region15: #{transformer_forward.8} parent=11 // pred_region
          %s357 = ssub.s32 256, 256
          %358 = vsyncadd [#allocation6], %s357
          %s359 = sshll.u32 [#allocation7], 4
          %s360 = int_to_ptr.vmem [resolvable:$true] %s359
          %365 = dma.hbm_to_vmem [thread:$0]  %s2, 256, %s360, [#allocation6], 64, 64, 4
        $region16: #{transformer_forward.8} parent=11 // pred_fallthru
          _
        // Predicated region
        $region17: #{transformer_forward.8} parent=11 // pred_check
          %p366 = pneg %p142
        $region18: #{transformer_forward.8} parent=11 // pred_check_branch
          %368 = sbr.rel (%p366) target = $region20
        $region19: #{transformer_forward.8} parent=11 // pred_region
          %s370 = ssub.s32 16, 16
          %371 = vsyncadd [#allocation9], %s370
          %s373 = sshll.u32 [#allocation8], 4
          %s374 = int_to_ptr.vmem [resolvable:$true] %s373
          %376 = dma.hbm_to_vmem [thread:$0]  %s3, 16, %s374, [#allocation9]
        $region20: #{transformer_forward.8} parent=11 // pred_fallthru
          _
        // Predicated region
        $region21: #{transformer_forward.8} parent=11 // pred_check
          %p377 = pneg %p163
        $region22: #{transformer_forward.8} parent=11 // pred_check_branch
          %379 = sbr.rel (%p377) target = $region24
        $region23: #{transformer_forward.8} parent=11 // pred_region
          %s381 = ssub.s32 16, 16
          %382 = vsyncadd [#allocation9], %s381
          %s384 = sshll.u32 [#allocation10], 4
          %s385 = int_to_ptr.vmem [resolvable:$true] %s384
          %387 = dma.hbm_to_vmem [thread:$0]  %s4, 16, %s385, [#allocation9]
        $region24: #{transformer_forward.8} parent=11 // pred_fallthru
          _
        // Predicated region
        $region25: #{transformer_forward.8} parent=11 // pred_check
          %p388 = pneg %p184
        $region26: #{transformer_forward.8} parent=11 // pred_check_branch
          %390 = sbr.rel (%p388) target = $region28
        $region27: #{transformer_forward.8} parent=11 // pred_region
          %s392 = ssub.s32 16, 16
          %393 = vsyncadd [#allocation12], %s392
          %s395 = sshll.u32 [#allocation11], 4
          %s396 = int_to_ptr.vmem [resolvable:$true] %s395
          %398 = dma.hbm_to_vmem [thread:$0]  %s5, 16, %s396, [#allocation12]
        $region28: #{transformer_forward.8} parent=11 // pred_fallthru
          _
        // Predicated region
        $region29: #{transformer_forward.8} parent=11 // pred_check
          %p399 = pneg %p205
        $region30: #{transformer_forward.8} parent=11 // pred_check_branch
          %401 = sbr.rel (%p399) target = $region32
        $region31: #{transformer_forward.8} parent=11 // pred_region
          %s403 = ssub.s32 256, 256
          %404 = vsyncadd [#allocation12], %s403
          %s405 = sshll.u32 [#allocation13], 4
          %s406 = int_to_ptr.vmem [resolvable:$true] %s405
          %411 = dma.hbm_to_vmem [thread:$0]  %s6, 256, %s406, [#allocation12], 64, 64, 4
        $region32: #{transformer_forward.8} parent=11 // pred_fallthru
          _
        // Predicated region
        $region33: #{transformer_forward.8} parent=11 // pred_check
          %p412 = pneg %p226
        $region34: #{transformer_forward.8} parent=11 // pred_check_branch
          %414 = sbr.rel (%p412) target = $region36
        $region35: #{transformer_forward.8} parent=11 // pred_region
          %s416 = ssub.s32 16, 16
          %417 = vsyncadd [#allocation15], %s416
          %s419 = sshll.u32 [#allocation14], 4
          %s420 = int_to_ptr.vmem [resolvable:$true] %s419
          %422 = dma.hbm_to_vmem [thread:$0]  %s7, 16, %s420, [#allocation15]
        $region36: #{transformer_forward.8} parent=11 // pred_fallthru
          _
        // Predicated region
        $region37: #{transformer_forward.8} parent=11 // pred_check
          %p423 = pneg %p247
        $region38: #{transformer_forward.8} parent=11 // pred_check_branch
          %425 = sbr.rel (%p423) target = $region40
        $region39: #{transformer_forward.8} parent=11 // pred_region
          %s427 = ssub.s32 512, 512
          %428 = vsyncadd [#allocation15], %s427
          %s429 = sshll.u32 [#allocation16], 4
          %s430 = int_to_ptr.vmem [resolvable:$true] %s429
          %435 = dma.hbm_to_vmem [thread:$0]  %s8, 512, %s430, [#allocation15], 64, 64, 4
        $region40: #{transformer_forward.8} parent=11 // pred_fallthru
          _
        // Predicated region
        $region41: #{transformer_forward.8} parent=11 // pred_check
          %p436 = pneg %p268
        $region42: #{transformer_forward.8} parent=11 // pred_check_branch
          %438 = sbr.rel (%p436) target = $region44
        $region43: #{transformer_forward.8} parent=11 // pred_region
          %s440 = ssub.s32 16, 16
          %441 = vsyncadd [#allocation18], %s440
          %s443 = sshll.u32 [#allocation17], 4
          %s444 = int_to_ptr.vmem [resolvable:$true] %s443
          %446 = dma.hbm_to_vmem [thread:$0]  %s9, 16, %s444, [#allocation18]
        $region44: #{transformer_forward.8} parent=11 // pred_fallthru
          _
        // Predicated region
        $region45: #{transformer_forward.8} parent=11 // pred_check
          %p447 = pneg %p289
        $region46: #{transformer_forward.8} parent=11 // pred_check_branch
          %449 = sbr.rel (%p447) target = $region48
        $region47: #{transformer_forward.8} parent=11 // pred_region
          %s451 = ssub.s32 16, 16
          %452 = vsyncadd [#allocation18], %s451
          %s454 = sshll.u32 [#allocation19], 4
          %s455 = int_to_ptr.vmem [resolvable:$true] %s454
          %457 = dma.hbm_to_vmem [thread:$0]  %s10, 16, %s455, [#allocation18]
        $region48: #{transformer_forward.8} parent=11 // pred_fallthru
          _
        // Predicated region
        $region49: #{transformer_forward.8} parent=11 // pred_check
          %p458 = pneg %p310
        $region50: #{transformer_forward.8} parent=11 // pred_check_branch
          %460 = sbr.rel (%p458) target = $region52
        $region51: #{transformer_forward.8} parent=11 // pred_region
          %s462 = ssub.s32 16, 16
          %463 = vsyncadd [#allocation21], %s462
          %s465 = sshll.u32 [#allocation20], 4
          %s466 = int_to_ptr.vmem [resolvable:$true] %s465
          %468 = dma.hbm_to_vmem [thread:$0]  %s11, 16, %s466, [#allocation21]
        $region52: #{transformer_forward.8} parent=11 // pred_fallthru
          _
      $region12: #{transformer_forward.8} parent=5 // pred_fallthru
        _
      %p469 = scmp.lt.s32.totalorder %s32, 2
      // Predicated region
      $region53: #{transformer_forward.8} parent=5 // pred_check
        %p470 = pneg %p469
      $region54: #{transformer_forward.8} parent=5 // pred_check_branch
        %472 = sbr.rel (%p470) target = $region56
      $region55: #{transformer_forward.8} parent=5 // pred_region
        // Predicated region
        $region57: #{transformer_forward.8} parent=55 // pred_check
          %p473 = pneg %p66
        $region58: #{transformer_forward.8} parent=55 // pred_check_branch
          %475 = sbr.rel (%p473) target = $region60
        $region59: #{transformer_forward.8} parent=55 // pred_region
          %s476 = sand.u32 %s56, 1
          %s477 = scalar_lea.sflag [#allocation3], %s476
          %s478 = sand.u32 %s56, 1
          %s479 = smul.addr %s478, 8
          %s480 = scalar_lea.vmem [#allocation2], %s479
          %s482 = ssub.s32 128, 128
          %483 = vsyncadd %s477, %s482
          %s484 = sadd.s32 %s40, %s39
          %s485 = smul.addr %s484, 128
          %s486 = scalar_lea.hbm %s0, %s485
          %s488 = sshll.u32 %s480, 4
          %s489 = int_to_ptr.vmem [resolvable:$true] %s488
          %491 = dma.hbm_to_vmem [thread:$0]  %s486, 128, %s489, %s477
        $region60: #{transformer_forward.8} parent=55 // pred_fallthru
          _
        // Predicated region
        $region61: #{transformer_forward.8} parent=55 // pred_check
          %p492 = pneg %p94
        $region62: #{transformer_forward.8} parent=55 // pred_check_branch
          %494 = sbr.rel (%p492) target = $region64
        $region63: #{transformer_forward.8} parent=55 // pred_region
          %s495 = sand.u32 %s32, 1
          %s496 = scalar_lea.sflag [#allocation6], %s495
          %s497 = sand.u32 %s84, 1
          %s498 = smul.addr %s497, 4
          %s499 = scalar_lea.vmem [#allocation5], %s498
          %s501 = ssub.s32 64, 64
          %502 = vsyncadd %s496, %s501
          %s503 = sadd.s32 %s40, %s39
          %s504 = smul.addr %s503, 64
          %s505 = scalar_lea.hbm %s1, %s504
          %s507 = sshll.u32 %s499, 4
          %s508 = int_to_ptr.vmem [resolvable:$true] %s507
          %510 = dma.hbm_to_vmem [thread:$0]  %s505, 64, %s508, %s496
        $region64: #{transformer_forward.8} parent=55 // pred_fallthru
          _
      $region56: #{transformer_forward.8} parent=5 // pred_fallthru
        _
      %p511 = scmp.le.s32.totalorder 1, %s32
      %p512 = scmp.lt.s32.totalorder %s32, 3
      %p513 = pnand %p511, %p512
      %p514 = pneg %p513
      // Predicated region
      $region65: #{transformer_forward.8} parent=5 // pred_check
        _
      $region66: #{transformer_forward.8} parent=5 // pred_check_branch
        %516 = sbr.rel (%p513) target = $region68
      $region67: #{transformer_forward.8} parent=5 // pred_region
        %s517 = ssub.s32 %s32, 1
        %s518 = sand.u32 %s59, 1
        %s519 = scalar_lea.sflag [#allocation3], %s518
        %s520 = sand.u32 %s59, 1
        %s521 = smul.addr %s520, 8
        %s522 = scalar_lea.vmem [#allocation2], %s521
        // Predicated region
        $region69: #{transformer_forward.8} parent=67 // pred_check
          %p523 = pneg %p72
        $region70: #{transformer_forward.8} parent=67 // pred_check_branch
          %525 = sbr.rel (%p523) target = $region72
        $region71: #{transformer_forward.8} parent=67 // pred_region
          %526 = dma.done %s519, 128
        $region72: #{transformer_forward.8} parent=67 // pred_fallthru
          _
        %s527 = sand.u32 %s37, 1
        %s528 = scalar_lea.sflag [#allocation6], %s527
        %s529 = sand.u32 %s87, 1
        %s530 = smul.addr %s529, 4
        %s531 = scalar_lea.vmem [#allocation5], %s530
        // Predicated region
        $region73: #{transformer_forward.8} parent=67 // pred_check
          %p532 = pneg %p100
        $region74: #{transformer_forward.8} parent=67 // pred_check_branch
          %534 = sbr.rel (%p532) target = $region76
        $region75: #{transformer_forward.8} parent=67 // pred_region
          %535 = dma.done %s528, 64
        $region76: #{transformer_forward.8} parent=67 // pred_fallthru
          _
        // Predicated region
        $region77: #{transformer_forward.8} parent=67 // pred_check
          %p536 = pneg %p121
        $region78: #{transformer_forward.8} parent=67 // pred_check_branch
          %538 = sbr.rel (%p536) target = $region80
        $region79: #{transformer_forward.8} parent=67 // pred_region
          %539 = dma.done [#allocation6], 256
        $region80: #{transformer_forward.8} parent=67 // pred_fallthru
          _
        // Predicated region
        $region81: #{transformer_forward.8} parent=67 // pred_check
          %p540 = pneg %p142
        $region82: #{transformer_forward.8} parent=67 // pred_check_branch
          %542 = sbr.rel (%p540) target = $region84
        $region83: #{transformer_forward.8} parent=67 // pred_region
          %543 = dma.done [#allocation9], 16
        $region84: #{transformer_forward.8} parent=67 // pred_fallthru
          _
        // Predicated region
        $region85: #{transformer_forward.8} parent=67 // pred_check
          %p544 = pneg %p163
        $region86: #{transformer_forward.8} parent=67 // pred_check_branch
          %546 = sbr.rel (%p544) target = $region88
        $region87: #{transformer_forward.8} parent=67 // pred_region
          %547 = dma.done [#allocation9], 16
        $region88: #{transformer_forward.8} parent=67 // pred_fallthru
          _
        // Predicated region
        $region89: #{transformer_forward.8} parent=67 // pred_check
          %p548 = pneg %p184
        $region90: #{transformer_forward.8} parent=67 // pred_check_branch
          %550 = sbr.rel (%p548) target = $region92
        $region91: #{transformer_forward.8} parent=67 // pred_region
          %551 = dma.done [#allocation12], 16
        $region92: #{transformer_forward.8} parent=67 // pred_fallthru
          _
        // Predicated region
        $region93: #{transformer_forward.8} parent=67 // pred_check
          %p552 = pneg %p205
        $region94: #{transformer_forward.8} parent=67 // pred_check_branch
          %554 = sbr.rel (%p552) target = $region96
        $region95: #{transformer_forward.8} parent=67 // pred_region
          %555 = dma.done [#allocation12], 256
        $region96: #{transformer_forward.8} parent=67 // pred_fallthru
          _
        // Predicated region
        $region97: #{transformer_forward.8} parent=67 // pred_check
          %p556 = pneg %p226
        $region98: #{transformer_forward.8} parent=67 // pred_check_branch
          %558 = sbr.rel (%p556) target = $region100
        $region99: #{transformer_forward.8} parent=67 // pred_region
          %559 = dma.done [#allocation15], 16
        $region100: #{transformer_forward.8} parent=67 // pred_fallthru
          _
        // Predicated region
        $region101: #{transformer_forward.8} parent=67 // pred_check
          %p560 = pneg %p247
        $region102: #{transformer_forward.8} parent=67 // pred_check_branch
          %562 = sbr.rel (%p560) target = $region104
        $region103: #{transformer_forward.8} parent=67 // pred_region
          %563 = dma.done [#allocation15], 512
        $region104: #{transformer_forward.8} parent=67 // pred_fallthru
          _
        // Predicated region
        $region105: #{transformer_forward.8} parent=67 // pred_check
          %p564 = pneg %p268
        $region106: #{transformer_forward.8} parent=67 // pred_check_branch
          %566 = sbr.rel (%p564) target = $region108
        $region107: #{transformer_forward.8} parent=67 // pred_region
          %567 = dma.done [#allocation18], 16
        $region108: #{transformer_forward.8} parent=67 // pred_fallthru
          _
        // Predicated region
        $region109: #{transformer_forward.8} parent=67 // pred_check
          %p568 = pneg %p289
        $region110: #{transformer_forward.8} parent=67 // pred_check_branch
          %570 = sbr.rel (%p568) target = $region112
        $region111: #{transformer_forward.8} parent=67 // pred_region
          %571 = dma.done [#allocation18], 16
        $region112: #{transformer_forward.8} parent=67 // pred_fallthru
          _
        // Predicated region
        $region113: #{transformer_forward.8} parent=67 // pred_check
          %p572 = pneg %p310
        $region114: #{transformer_forward.8} parent=67 // pred_check_branch
          %574 = sbr.rel (%p572) target = $region116
        $region115: #{transformer_forward.8} parent=67 // pred_region
          %575 = dma.done [#allocation21], 16
        $region116: #{transformer_forward.8} parent=67 // pred_fallthru
          _
        %s576 = sand.u32 %s59, 1
        %s577 = scalar_lea.sflag [#allocation3], %s576
        %s578 = sand.u32 %s59, 1
        %s579 = smul.addr %s578, 8
        %s580 = scalar_lea.vmem [#allocation2], %s579
        %p581 = pneg %p72
        %p582 = pneg %p69
        %s583 = sand.u32 %s37, 1
        %s584 = scalar_lea.sflag [#allocation6], %s583
        %s585 = sand.u32 %s87, 1
        %s586 = smul.addr %s585, 4
        %s587 = scalar_lea.vmem [#allocation5], %s586
        %p588 = pneg %p100
        %p589 = pneg %p97
        %p590 = pneg %p121
        %p591 = pneg %p118
        %p592 = pneg %p142
        %p593 = pneg %p139
        %p594 = pneg %p163
        %p595 = pneg %p160
        %p596 = pneg %p184
        %p597 = pneg %p181
        %p598 = pneg %p205
        %p599 = pneg %p202
        %p600 = pneg %p226
        %p601 = pneg %p223
        %p602 = pneg %p247
        %p603 = pneg %p244
        %p604 = pneg %p268
        %p605 = pneg %p265
        %p606 = pneg %p289
        %p607 = pneg %p286
        %p608 = pneg %p310
        %p609 = pneg %p307
        %p610 = pneg %p338
        %p611 = pneg %p335
        %s612 = sand.u32 %s325, 1
        %s613 = scalar_lea.sflag [#allocation4], %s612
        %s614 = sand.u32 %s325, 1
        %s615 = smul.addr %s614, 8
        %s616 = scalar_lea.vmem [#allocation22], %s615
        %v618 = vld [vmem:[%s531] sm:$0xf]
        %v619 = vld [vmem:[#allocation7] sm:$0xf]
        %v620 = vld [vmem:[#allocation7 + $0x4] sm:$0xf]
        %v621 = vld [vmem:[#allocation7 + $0x8] sm:$0xf]
        %v622 = vld [vmem:[#allocation7 + $0xc] sm:$0xf]
        %v623 = vld [vmem:[#allocation8] sm:$0x1]
        %v625 = vlaneseq
        %v626 = vshrl.u32 %v625, 7
        %v627 = vsub.s32 0, %v626
        %v628 = vrot.slane %v623, %v627
        %v634 = vunpack.c.l.b16 %v619
        %v635 = vunpack.c.l.b16 %v620
        %v636 = vunpack.c.l.b16 %v621
        %v637 = vunpack.c.l.b16 %v622
        %v638 = vpack.c.b16 %v635, %v634
        %v639 = vpack.c.b16 %v637, %v636
        %vm642 = vcmask 261120
        %v644 = vsel %vm642, %v618, 0
        %646 = vmatprep.subr.bf16.mxu0 0
        %647 = vmatpush1.bf16.msra.mxu0 %v638
        %648 = vmatprep.subr.bf16.mxu0 0
        %649 = vmatpush1.bf16.msra.mxu0 %v639
        %650 = vmatprep.subr.bf16.mxu0 0
        %651 = vmatpush1.bf16.msra.mxu0 0
        %652 = vmatprep.subr.bf16.mxu0 0
        %653 = vmatpush1.bf16.msra.mxu0 0
        %654 = vmatprep.subr.bf16.mxu0 0
        %655 = vmatpush1.bf16.msra.mxu0 0
        %656 = vmatprep.subr.bf16.mxu0 0
        %657 = vmatpush1.bf16.msra.mxu0 0
        %658 = vmatprep.subr.bf16.mxu0 0
        %659 = vmatpush1.bf16.msra.mxu0 0
        %660 = vmatprep.subr.bf16.mxu0 0
        %661 = vmatpush1.bf16.msra.mxu0 0
        %662 = vmatprep.subr.bf16.mxu0 0
        %663 = vmatpush1.bf16.msra.mxu0 0
        %664 = vmatprep.subr.bf16.mxu0 0
        %665 = vmatpush1.bf16.msra.mxu0 0
        %666 = vmatprep.subr.bf16.mxu0 0
        %667 = vmatpush1.bf16.msra.mxu0 0
        %668 = vmatprep.subr.bf16.mxu0 0
        %669 = vmatpush1.bf16.msra.mxu0 0
        %670 = vmatprep.subr.bf16.mxu0 0
        %671 = vmatpush1.bf16.msra.mxu0 0
        %672 = vmatprep.subr.bf16.mxu0 0
        %673 = vmatpush1.bf16.msra.mxu0 0
        %674 = vmatprep.subr.bf16.mxu0 0
        %675 = vmatpush1.bf16.msra.mxu0 0
        %676 = vmatprep.subr.bf16.mxu0 0
        %677 = vmatpush1.bf16.msra.mxu0 0
        %678 = vmatprep.mubr.bf16.mxu0 0
        %679 = vmatmul.mubr.bf16.gmra.mrb[0].mxu0 %v644
        %v680 = vpop.f32.mrb[0].mxu0
        %v681 = vadd.f32 %v628, %v680
        %v682 = vpop.f32.mrb[0].mxu0
        %v683 = vpop.f32.mrb[0].mxu0
        %v684 = vpop.f32.mrb[0].mxu0
        %685 = vdwg.mxu0
        %v686 = vld [vmem:[%s522] sm:$0xff]
        %v687 = vadd.f32 %v686, %v681
        %v688 = vld [vmem:[#allocation10] sm:$0x1]
        %v689 = vld [vmem:[#allocation11] sm:$0x1]
        %v690 = vsel %vm642, %v687, 0.0
        %691 = vadd.xlane.f32.xlu0 %v690
        %v692 = vpop.xlane.xlu0 %691
        %v693 = vrcp.pop 32.0
        %v694 = vmul.f32 %v692, %v693
        %v695 = vsub.f32 %v687, %v694
        %v696 = vmul.f32 %v695, %v695
        %v697 = vsel %vm642, %v696, 0.0
        %698 = vadd.xlane.f32.xlu0 %v697
        %v699 = vpop.xlane.xlu0 %698
        %v700 = vmul.f32 %v699, %v693
        %v701 = vadd.f32 %v700, 1e-05
        %v702 = vrsqrt.pop %v701
        %v703 = vmul.f32 %v695, %v702
        %v705 = vlaneseq
        %v706 = vshrl.u32 %v705, 7
        %v707 = vsub.s32 0, %v706
        %v708 = vrot.slane %v688, %v707
        %v710 = vmul.f32 %v703, %v708
        %v712 = vlaneseq
        %v713 = vshrl.u32 %v712, 7
        %v714 = vsub.s32 0, %v713
        %v715 = vrot.slane %v689, %v714
        %v717 = vadd.f32 %v710, %v715
        %v718 = vpack.c.bf16 %v717, %v717
        %v719 = vld [vmem:[#allocation13] sm:$0xf]
        %v720 = vld [vmem:[#allocation13 + $0x4] sm:$0xf]
        %v721 = vld [vmem:[#allocation13 + $0x8] sm:$0xf]
        %v722 = vld [vmem:[#allocation13 + $0xc] sm:$0xf]
        %v723 = vld [vmem:[#allocation14] sm:$0x1]
        %v725 = vlaneseq
        %v726 = vshrl.u32 %v725, 7
        %v727 = vsub.s32 0, %v726
        %v728 = vrot.slane %v723, %v727
        %v734 = vunpack.c.l.b16 %v719
        %v735 = vunpack.c.l.b16 %v720
        %v736 = vunpack.c.l.b16 %v721
        %v737 = vunpack.c.l.b16 %v722
        %v738 = vpack.c.b16 %v735, %v734
        %v739 = vpack.c.b16 %v737, %v736
        %v743 = vsel %vm642, %v718, 0
        %745 = vmatprep.subr.bf16.mxu0 0
        %746 = vmatpush1.bf16.msra.mxu0 %v738
        %747 = vmatprep.subr.bf16.mxu0 0
        %748 = vmatpush1.bf16.msra.mxu0 %v739
        %749 = vmatprep.subr.bf16.mxu0 0
        %750 = vmatpush1.bf16.msra.mxu0 0
        %751 = vmatprep.subr.bf16.mxu0 0
        %752 = vmatpush1.bf16.msra.mxu0 0
        %753 = vmatprep.subr.bf16.mxu0 0
        %754 = vmatpush1.bf16.msra.mxu0 0
        %755 = vmatprep.subr.bf16.mxu0 0
        %756 = vmatpush1.bf16.msra.mxu0 0
        %757 = vmatprep.subr.bf16.mxu0 0
        %758 = vmatpush1.bf16.msra.mxu0 0
        %759 = vmatprep.subr.bf16.mxu0 0
        %760 = vmatpush1.bf16.msra.mxu0 0
        %761 = vmatprep.subr.bf16.mxu0 0
        %762 = vmatpush1.bf16.msra.mxu0 0
        %763 = vmatprep.subr.bf16.mxu0 0
        %764 = vmatpush1.bf16.msra.mxu0 0
        %765 = vmatprep.subr.bf16.mxu0 0
        %766 = vmatpush1.bf16.msra.mxu0 0
        %767 = vmatprep.subr.bf16.mxu0 0
        %768 = vmatpush1.bf16.msra.mxu0 0
        %769 = vmatprep.subr.bf16.mxu0 0
        %770 = vmatpush1.bf16.msra.mxu0 0
        %771 = vmatprep.subr.bf16.mxu0 0
        %772 = vmatpush1.bf16.msra.mxu0 0
        %773 = vmatprep.subr.bf16.mxu0 0
        %774 = vmatpush1.bf16.msra.mxu0 0
        %775 = vmatprep.subr.bf16.mxu0 0
        %776 = vmatpush1.bf16.msra.mxu0 0
        %777 = vmatprep.mubr.bf16.mxu0 0
        %778 = vmatmul.mubr.bf16.gmra.mrb[0].mxu0 %v743
        %v779 = vpop.f32.mrb[0].mxu0
        %v780 = vadd.f32 %v728, %v779
        %v781 = vpop.f32.mrb[0].mxu0
        %v782 = vpop.f32.mrb[0].mxu0
        %v783 = vpop.f32.mrb[0].mxu0
        %784 = vdwg.mxu0
        %v785 = vmul.f32 %v780, 1.702
        %v786 = vxor.u32 %v785, 2147483648
        %v787 = vmul.f32 %v786, 1.442695
        %v788 = vpow.pop %v787
        %v789 = vadd.f32 %v788, 1.0
        %v790 = vrcp.pop %v789
        %v791 = vmul.f32 1.0, %v790
        %v792 = vmul.f32 %v780, %v791
        %v793 = vpack.c.bf16 %v792, %v792
        %v794 = vld [vmem:[#allocation16] sm:$0xf]
        %v795 = vld [vmem:[#allocation16 + $0x4] sm:$0xf]
        %v796 = vld [vmem:[#allocation16 + $0x8] sm:$0xf]
        %v797 = vld [vmem:[#allocation16 + $0xc] sm:$0xf]
        %v798 = vld [vmem:[#allocation16 + $0x10] sm:$0xf]
        %v799 = vld [vmem:[#allocation16 + $0x14] sm:$0xf]
        %v800 = vld [vmem:[#allocation16 + $0x18] sm:$0xf]
        %v801 = vld [vmem:[#allocation16 + $0x1c] sm:$0xf]
        %v802 = vld [vmem:[#allocation17] sm:$0x1]
        %v804 = vlaneseq
        %v805 = vshrl.u32 %v804, 7
        %v806 = vsub.s32 0, %v805
        %v807 = vrot.slane %v802, %v806
        %v817 = vunpack.c.l.b16 %v794
        %v818 = vunpack.c.l.b16 %v795
        %v819 = vunpack.c.l.b16 %v796
        %v820 = vunpack.c.l.b16 %v797
        %v821 = vunpack.c.l.b16 %v798
        %v822 = vunpack.c.l.b16 %v799
        %v823 = vunpack.c.l.b16 %v800
        %v824 = vunpack.c.l.b16 %v801
        %v825 = vpack.c.b16 %v818, %v817
        %v826 = vpack.c.b16 %v820, %v819
        %v827 = vpack.c.b16 %v822, %v821
        %v828 = vpack.c.b16 %v824, %v823
        %vm833 = vcmask 523264
        %v835 = vsel %vm833, %v793, 0
        %837 = vmatprep.subr.bf16.mxu0 0
        %838 = vmatpush1.bf16.msra.mxu0 %v825
        %839 = vmatprep.subr.bf16.mxu0 0
        %840 = vmatpush1.bf16.msra.mxu0 %v826
        %841 = vmatprep.subr.bf16.mxu0 0
        %842 = vmatpush1.bf16.msra.mxu0 %v827
        %843 = vmatprep.subr.bf16.mxu0 0
        %844 = vmatpush1.bf16.msra.mxu0 %v828
        %845 = vmatprep.subr.bf16.mxu0 0
        %846 = vmatpush1.bf16.msra.mxu0 0
        %847 = vmatprep.subr.bf16.mxu0 0
        %848 = vmatpush1.bf16.msra.mxu0 0
        %849 = vmatprep.subr.bf16.mxu0 0
        %850 = vmatpush1.bf16.msra.mxu0 0
        %851 = vmatprep.subr.bf16.mxu0 0
        %852 = vmatpush1.bf16.msra.mxu0 0
        %853 = vmatprep.subr.bf16.mxu0 0
        %854 = vmatpush1.bf16.msra.mxu0 0
        %855 = vmatprep.subr.bf16.mxu0 0
        %856 = vmatpush1.bf16.msra.mxu0 0
        %857 = vmatprep.subr.bf16.mxu0 0
        %858 = vmatpush1.bf16.msra.mxu0 0
        %859 = vmatprep.subr.bf16.mxu0 0
        %860 = vmatpush1.bf16.msra.mxu0 0
        %861 = vmatprep.subr.bf16.mxu0 0
        %862 = vmatpush1.bf16.msra.mxu0 0
        %863 = vmatprep.subr.bf16.mxu0 0
        %864 = vmatpush1.bf16.msra.mxu0 0
        %865 = vmatprep.subr.bf16.mxu0 0
        %866 = vmatpush1.bf16.msra.mxu0 0
        %867 = vmatprep.subr.bf16.mxu0 0
        %868 = vmatpush1.bf16.msra.mxu0 0
        %869 = vmatprep.mubr.bf16.mxu0 0
        %870 = vmatmul.mubr.bf16.gmra.mrb[0].mxu0 %v835
        %v871 = vpop.f32.mrb[0].mxu0
        %v872 = vadd.f32 %v807, %v871
        %v873 = vpop.f32.mrb[0].mxu0
        %v874 = vpop.f32.mrb[0].mxu0
        %v875 = vpop.f32.mrb[0].mxu0
        %876 = vdwg.mxu0
        %v877 = vadd.f32 %v687, %v872
        %878 = vst.msk [vmem:[%s616] sm:$0xff] %vm642, %v877
        %s879 = sand.u32 %s325, 1
        %s880 = scalar_lea.sflag [#allocation4], %s879
        %s881 = sand.u32 %s325, 1
        %s882 = smul.addr %s881, 8
        %s883 = scalar_lea.vmem [#allocation22], %s882
        // Predicated region
        $region117: #{transformer_forward.8} parent=67 // pred_check
          %p884 = pneg %p335
        $region118: #{transformer_forward.8} parent=67 // pred_check_branch
          %886 = sbr.rel (%p884) target = $region120
        $region119: #{transformer_forward.8} parent=67 // pred_region
          %s888 = ssub.s32 128, 128
          %889 = vsyncadd %s880, %s888
          %s890 = sadd.s32 %s42, %s41
          %s891 = smul.addr %s890, 128
          %s892 = scalar_lea.hbm %s12, %s891
          %s894 = sshll.u32 %s883, 4
          %s895 = int_to_ptr.vmem [resolvable:$true] %s894
          %897 = dma.vmem_to_hbm [thread:$0]  %s895, 128, %s892, %s880
        $region120: #{transformer_forward.8} parent=67 // pred_fallthru
          _
      $region68: #{transformer_forward.8} parent=5 // pred_fallthru
        _
      %p898 = scmp.le.s32.totalorder 2, %s32
      // Predicated region
      $region121: #{transformer_forward.8} parent=5 // pred_check
        %p899 = pneg %p898
      $region122: #{transformer_forward.8} parent=5 // pred_check_branch
        %901 = sbr.rel (%p899) target = $region124
      $region123: #{transformer_forward.8} parent=5 // pred_region
        %s902 = ssub.s32 %s32, 2
        // Predicated region
        $region125: #{transformer_forward.8} parent=123 // pred_check
          %p903 = pneg %p341
        $region126: #{transformer_forward.8} parent=123 // pred_check_branch
          %905 = sbr.rel (%p903) target = $region128
        $region127: #{transformer_forward.8} parent=123 // pred_region
          %s906 = sand.u32 %s326, 1
          %s907 = scalar_lea.sflag [#allocation4], %s906
          %s908 = sand.u32 %s326, 1
          %s909 = smul.addr %s908, 8
          %s910 = scalar_lea.vmem [#allocation22], %s909
          %911 = dma.done %s907, 128
        $region128: #{transformer_forward.8} parent=123 // pred_fallthru
          _
      $region124: #{transformer_forward.8} parent=5 // pred_fallthru
        _
    $region6: #{transformer_forward.8} parent=1 // loop_footer
      %s36 = sadd.s32 1, %s32
    $region7: #{transformer_forward.8} parent=1 // loop_footer_branch
      %31 = sbr.rel target = $region3
    $region8: #{transformer_forward.8} parent=1 // loop_exit
      _
    %912 = vsyncpa [#allocation3], 1
    %s913 = scalar_lea.sflag [#allocation3], 1
    %914 = vsyncpa %s913, 1
    %915 = vsyncpa [#allocation6], 1
    %s916 = scalar_lea.sflag [#allocation6], 1
    %917 = vsyncpa %s916, 1
    %918 = vsyncpa [#allocation9], 1
    %919 = vsyncpa [#allocation12], 1
    %920 = vsyncpa [#allocation15], 1
    %921 = vsyncpa [#allocation18], 1
    %922 = vsyncpa [#allocation21], 1
    %923 = vsyncpa [#allocation4], 1
    %s924 = scalar_lea.sflag [#allocation4], 1
    %925 = vsyncpa %s924, 1

// kernel: transformer_forward.6
$region0: #{transformer_forward.6}
  #allocation0 [shape = 'u32[]', space=smem, size = 0x4, offset = 0x4, fixed_abs, tag = 'smem constant byte address 0x4 - core index']
  #allocation1 [shape = 'u32[144,128]{1,0:T(1,128)}', space=vmem, size = 0x12000, scoped, tag = 'internal scratch']
  %s0 = inlined_call_operand.hbm [shape: f32[2,8,32], index: 0, kind: input, shape index: {}]
  %s1 = inlined_call_operand.hbm [shape: f32[1,32], index: 1, kind: input, shape index: {}]
  %s2 = inlined_call_operand.hbm [shape: f32[1,32], index: 2, kind: input, shape index: {}]
  %s3 = inlined_call_operand.hbm [shape: bf16[32,96], index: 3, kind: input, shape index: {}]
  %s4 = inlined_call_operand.hbm [shape: f32[1,96], index: 4, kind: input, shape index: {}]
  %s5 = inlined_call_operand.hbm [shape: bf16[2,4,8,8], index: 5, kind: output, shape index: {0}]
  %s6 = inlined_call_operand.hbm [shape: bf16[2,4,8,8], index: 6, kind: output, shape index: {1}]
  %s7 = inlined_call_operand.hbm [shape: bf16[2,4,8,8], index: 7, kind: output, shape index: {2}]
  %8 = xla_tuple %s5, %s6, %s7
  %s9 = sld [smem:[#allocation0]]
  $region89: #{transformer_forward.6} parent=0
    _
  %s11 = ssub.s32 1, %s9
  %s12 = scalar_select 0, %s11, %s9
  $region1: #{transformer_forward.6} parent=0
    #allocation2 [shape = 'u8[8192]{0}', space=vmem, size = 0x2000, scoped, tag = 'input window, operand 0']
    #allocation3 [shape = 's32[2]{0}', space=sflag, size = 0x8, scoped, tag = 'scoped memory for transformer_forward.6']
    #allocation4 [shape = 's32[2]{0}', space=sflag, size = 0x8, scoped, tag = 'scoped memory for transformer_forward.6']
    #allocation5 [shape = 'u8[512]{0}', space=vmem, size = 0x400, scoped, tag = 'input window, operand 1, single buffered']
    #allocation6 [shape = 's32[1]{0}', space=sflag, size = 0x4, scoped, tag = 'scoped memory for transformer_forward.6']
    #allocation7 [shape = 'u8[512]{0}', space=vmem, size = 0x400, scoped, tag = 'input window, operand 2, single buffered']
    #allocation8 [shape = 'u8[8192]{0}', space=vmem, size = 0x2000, scoped, tag = 'input window, operand 3, single buffered']
    #allocation9 [shape = 's32[1]{0}', space=sflag, size = 0x4, scoped, tag = 'scoped memory for transformer_forward.6']
    #allocation10 [shape = 'u8[512]{0}', space=vmem, size = 0x400, scoped, tag = 'input window, operand 4, single buffered']
    #allocation11 [shape = 'u8[16384]{0}', space=vmem, size = 0x4000, scoped, tag = 'output window, operand 0']
    #allocation12 [shape = 'u8[16384]{0}', space=vmem, size = 0x4000, scoped, tag = 'output window, operand 1']
    #allocation13 [shape = 's32[2]{0}', space=sflag, size = 0x8, scoped, tag = 'scoped memory for transformer_forward.6']
    #allocation14 [shape = 'u8[16384]{0}', space=vmem, size = 0x4000, scoped, tag = 'output window, operand 2']
    %13 = vsyncpa [#allocation3], 0
    %s14 = scalar_lea.sflag [#allocation3], 1
    %15 = vsyncpa %s14, 0
    %16 = vsyncpa [#allocation6], 0
    %17 = vsyncpa [#allocation9], 0
    %18 = vsyncpa [#allocation4], 0
    %s19 = scalar_lea.sflag [#allocation4], 1
    %20 = vsyncpa %s19, 0
    %21 = vsyncpa [#allocation13], 0
    %s22 = scalar_lea.sflag [#allocation13], 1
    %23 = vsyncpa %s22, 0
    loop: start=0, step=1, limit=4
    $region2: #{transformer_forward.6} parent=1 // loop_pre_header
      _
    $region3: #{transformer_forward.6} parent=1 // loop_header
      %s25 = sphi 0, %s29
      %p26 = scmp.ge.s32.totalorder %s25, 4
      %s32 = sphi 0, %s44
      %s33 = sphi 0, %s40
      %s34 = sphi 0, %s32
      %s35 = sphi 0, %s33
      %s36 = sphi 0, %s34
      %s37 = sphi 0, %s35
      %s49 = sphi 0, %s51
      %s52 = sphi 0, %s49
      %s53 = sphi 0, %s52
      %s69 = sphi 0, %s53
      %s73 = sphi 0, %s73
      %s75 = sphi 0, %s73
      %s76 = sphi 0, %s75
      %s90 = sphi 0, %s76
      %s94 = sphi 0, %s94
      %s96 = sphi 0, %s94
      %s97 = sphi 0, %s96
      %s111 = sphi 0, %s97
      %s115 = sphi 0, %s115
      %s117 = sphi 0, %s115
      %s118 = sphi 0, %s117
      %s132 = sphi 0, %s118
      %s136 = sphi 0, %s136
      %s138 = sphi 0, %s136
      %s139 = sphi 0, %s138
      %s153 = sphi 0, %s139
      %s161 = sphi 0, %s163
      %s164 = sphi 0, %s161
      %s165 = sphi 0, %s164
      %s181 = sphi 0, %s165
      %s189 = sphi 0, %s191
      %s192 = sphi 0, %s189
      %s193 = sphi 0, %s192
      %s209 = sphi 0, %s193
      %s217 = sphi 0, %s219
      %s220 = sphi 0, %s217
      %s221 = sphi 0, %s220
      %s237 = sphi 0, %s221
    $region4: #{transformer_forward.6} parent=1 // loop_header_branch
      %28 = sbr.rel (%p26) target = $region8
    $region5: #{transformer_forward.6} parent=1 // loop_body
      %s30 = ssub.s32 %s25, 1
      %s31 = ssub.s32 %s25, 2
      %s38 = sadd.s32 1, %s33
      %p39 = scmp.ge.s32.totalorder %s38, 1
      %s40 = scalar_select %p39, 0, %s38
      %s41 = sadd.s32 1, %s32
      %s42 = scalar_select %p39, %s41, %s32
      %p43 = scmp.ge.s32.totalorder %s42, 2
      %s44 = scalar_select %p43, 0, %s42
      %s45 = ssub.s32 %s32, %s44
      %s46 = ssub.s32 %s33, %s40
      %s47 = sor.u32 %s45, %s46
      %p48 = scmp.eq.s32.totalorder %s47, 0
      %s50 = sadd.s32 %s49, 1
      %s51 = scalar_select %p48, %s49, %s50
      %p54 = pneg %p48
      %p55 = scmp.eq.s32.totalorder %s25, 1
      %p56 = por %p54, %p55
      %p57 = scmp.ne.s32.totalorder %s49, %s52
      %p58 = scmp.eq.s32.totalorder %s25, 0
      %p59 = por %p57, %p58
      %p60 = scmp.ne.s32.totalorder %s49, %s52
      %p61 = scmp.eq.s32.totalorder %s30, 1
      %p62 = por %p60, %p61
      %p63 = scmp.ne.s32.totalorder %s52, %s53
      %p64 = scmp.eq.s32.totalorder %s30, 0
      %p65 = por %p63, %p64
      %p66 = scmp.ne.s32.totalorder %s52, %s53
      %p67 = scmp.eq.s32.totalorder %s31, 1
      %p68 = por %p66, %p67
      %p70 = scmp.ne.s32.totalorder %s53, %s69
      %p71 = scmp.eq.s32.totalorder %s31, 0
      %p72 = por %p70, %p71
      %s74 = sadd.s32 %s73, 1
      %p77 = scmp.eq.s32.totalorder %s25, 1
      %p78 = scmp.ne.s32.totalorder %s73, %s75
      %p79 = scmp.eq.s32.totalorder %s25, 0
      %p80 = por %p78, %p79
      %p81 = scmp.ne.s32.totalorder %s73, %s75
      %p82 = scmp.eq.s32.totalorder %s30, 1
      %p83 = por %p81, %p82
      %p84 = scmp.ne.s32.totalorder %s75, %s76
      %p85 = scmp.eq.s32.totalorder %s30, 0
      %p86 = por %p84, %p85
      %p87 = scmp.ne.s32.totalorder %s75, %s76
      %p88 = scmp.eq.s32.totalorder %s31, 1
      %p89 = por %p87, %p88
      %p91 = scmp.ne.s32.totalorder %s76, %s90
      %p92 = scmp.eq.s32.totalorder %s31, 0
      %p93 = por %p91, %p92
      %s95 = sadd.s32 %s94, 1
      %p98 = scmp.eq.s32.totalorder %s25, 1
      %p99 = scmp.ne.s32.totalorder %s94, %s96
      %p100 = scmp.eq.s32.totalorder %s25, 0
      %p101 = por %p99, %p100
      %p102 = scmp.ne.s32.totalorder %s94, %s96
      %p103 = scmp.eq.s32.totalorder %s30, 1
      %p104 = por %p102, %p103
      %p105 = scmp.ne.s32.totalorder %s96, %s97
      %p106 = scmp.eq.s32.totalorder %s30, 0
      %p107 = por %p105, %p106
      %p108 = scmp.ne.s32.totalorder %s96, %s97
      %p109 = scmp.eq.s32.totalorder %s31, 1
      %p110 = por %p108, %p109
      %p112 = scmp.ne.s32.totalorder %s97, %s111
      %p113 = scmp.eq.s32.totalorder %s31, 0
      %p114 = por %p112, %p113
      %s116 = sadd.s32 %s115, 1
      %p119 = scmp.eq.s32.totalorder %s25, 1
      %p120 = scmp.ne.s32.totalorder %s115, %s117
      %p121 = scmp.eq.s32.totalorder %s25, 0
      %p122 = por %p120, %p121
      %p123 = scmp.ne.s32.totalorder %s115, %s117
      %p124 = scmp.eq.s32.totalorder %s30, 1
      %p125 = por %p123, %p124
      %p126 = scmp.ne.s32.totalorder %s117, %s118
      %p127 = scmp.eq.s32.totalorder %s30, 0
      %p128 = por %p126, %p127
      %p129 = scmp.ne.s32.totalorder %s117, %s118
      %p130 = scmp.eq.s32.totalorder %s31, 1
      %p131 = por %p129, %p130
      %p133 = scmp.ne.s32.totalorder %s118, %s132
      %p134 = scmp.eq.s32.totalorder %s31, 0
      %p135 = por %p133, %p134
      %s137 = sadd.s32 %s136, 1
      %p140 = scmp.eq.s32.totalorder %s25, 1
      %p141 = scmp.ne.s32.totalorder %s136, %s138
      %p142 = scmp.eq.s32.totalorder %s25, 0
      %p143 = por %p141, %p142
      %p144 = scmp.ne.s32.totalorder %s136, %s138
      %p145 = scmp.eq.s32.totalorder %s30, 1
      %p146 = por %p144, %p145
      %p147 = scmp.ne.s32.totalorder %s138, %s139
      %p148 = scmp.eq.s32.totalorder %s30, 0
      %p149 = por %p147, %p148
      %p150 = scmp.ne.s32.totalorder %s138, %s139
      %p151 = scmp.eq.s32.totalorder %s31, 1
      %p152 = por %p150, %p151
      %p154 = scmp.ne.s32.totalorder %s139, %s153
      %p155 = scmp.eq.s32.totalorder %s31, 0
      %p156 = por %p154, %p155
      %s157 = ssub.s32 %s32, %s44
      %s158 = ssub.s32 %s33, %s40
      %s159 = sor.u32 %s157, %s158
      %p160 = scmp.eq.s32.totalorder %s159, 0
      %s162 = sadd.s32 %s161, 1
      %s163 = scalar_select %p160, %s161, %s162
      %p166 = pneg %p160
      %p167 = scmp.eq.s32.totalorder %s25, 1
      %p168 = por %p166, %p167
      %p169 = scmp.ne.s32.totalorder %s161, %s164
      %p170 = scmp.eq.s32.totalorder %s25, 0
      %p171 = por %p169, %p170
      %p172 = scmp.ne.s32.totalorder %s161, %s164
      %p173 = scmp.eq.s32.totalorder %s30, 1
      %p174 = por %p172, %p173
      %p175 = scmp.ne.s32.totalorder %s164, %s165
      %p176 = scmp.eq.s32.totalorder %s30, 0
      %p177 = por %p175, %p176
      %p178 = scmp.ne.s32.totalorder %s164, %s165
      %p179 = scmp.eq.s32.totalorder %s31, 1
      %p180 = por %p178, %p179
      %p182 = scmp.ne.s32.totalorder %s165, %s181
      %p183 = scmp.eq.s32.totalorder %s31, 0
      %p184 = por %p182, %p183
      %s185 = ssub.s32 %s32, %s44
      %s186 = ssub.s32 %s33, %s40
      %s187 = sor.u32 %s185, %s186
      %p188 = scmp.eq.s32.totalorder %s187, 0
      %s190 = sadd.s32 %s189, 1
      %s191 = scalar_select %p188, %s189, %s190
      %p194 = pneg %p188
      %p195 = scmp.eq.s32.totalorder %s25, 1
      %p196 = por %p194, %p195
      %p197 = scmp.ne.s32.totalorder %s189, %s192
      %p198 = scmp.eq.s32.totalorder %s25, 0
      %p199 = por %p197, %p198
      %p200 = scmp.ne.s32.totalorder %s189, %s192
      %p201 = scmp.eq.s32.totalorder %s30, 1
      %p202 = por %p200, %p201
      %p203 = scmp.ne.s32.totalorder %s192, %s193
      %p204 = scmp.eq.s32.totalorder %s30, 0
      %p205 = por %p203, %p204
      %p206 = scmp.ne.s32.totalorder %s192, %s193
      %p207 = scmp.eq.s32.totalorder %s31, 1
      %p208 = por %p206, %p207
      %p210 = scmp.ne.s32.totalorder %s193, %s209
      %p211 = scmp.eq.s32.totalorder %s31, 0
      %p212 = por %p210, %p211
      %s213 = ssub.s32 %s32, %s44
      %s214 = ssub.s32 %s33, %s40
      %s215 = sor.u32 %s213, %s214
      %p216 = scmp.eq.s32.totalorder %s215, 0
      %s218 = sadd.s32 %s217, 1
      %s219 = scalar_select %p216, %s217, %s218
      %p222 = pneg %p216
      %p223 = scmp.eq.s32.totalorder %s25, 1
      %p224 = por %p222, %p223
      %p225 = scmp.ne.s32.totalorder %s217, %s220
      %p226 = scmp.eq.s32.totalorder %s25, 0
      %p227 = por %p225, %p226
      %p228 = scmp.ne.s32.totalorder %s217, %s220
      %p229 = scmp.eq.s32.totalorder %s30, 1
      %p230 = por %p228, %p229
      %p231 = scmp.ne.s32.totalorder %s220, %s221
      %p232 = scmp.eq.s32.totalorder %s30, 0
      %p233 = por %p231, %p232
      %p234 = scmp.ne.s32.totalorder %s220, %s221
      %p235 = scmp.eq.s32.totalorder %s31, 1
      %p236 = por %p234, %p235
      %p238 = scmp.ne.s32.totalorder %s221, %s237
      %p239 = scmp.eq.s32.totalorder %s31, 0
      %p240 = por %p238, %p239
      %p241 = scmp.le.s32.totalorder 1, %s25
      %p242 = scmp.lt.s32.totalorder %s25, 3
      %p243 = pnand %p241, %p242
      %p244 = pneg %p243
      // Predicated region
      $region9: #{transformer_forward.6} parent=5 // pred_check
        _
      $region10: #{transformer_forward.6} parent=5 // pred_check_branch
        %246 = sbr.rel (%p243) target = $region12
      $region11: #{transformer_forward.6} parent=5 // pred_region
        %s247 = ssub.s32 %s25, 1
        // Predicated region
        $region13: #{transformer_forward.6} parent=11 // pred_check
          %p248 = pneg %p86
        $region14: #{transformer_forward.6} parent=11 // pred_check_branch
          %250 = sbr.rel (%p248) target = $region16
        $region15: #{transformer_forward.6} parent=11 // pred_region
          %s252 = ssub.s32 16, 16
          %253 = vsyncadd [#allocation6], %s252
          %s255 = sshll.u32 [#allocation5], 4
          %s256 = int_to_ptr.vmem [resolvable:$true] %s255
          %258 = dma.hbm_to_vmem [thread:$0]  %s1, 16, %s256, [#allocation6]
        $region16: #{transformer_forward.6} parent=11 // pred_fallthru
          _
        // Predicated region
        $region17: #{transformer_forward.6} parent=11 // pred_check
          %p259 = pneg %p107
        $region18: #{transformer_forward.6} parent=11 // pred_check_branch
          %261 = sbr.rel (%p259) target = $region20
        $region19: #{transformer_forward.6} parent=11 // pred_region
          %s263 = ssub.s32 16, 16
          %264 = vsyncadd [#allocation6], %s263
          %s266 = sshll.u32 [#allocation7], 4
          %s267 = int_to_ptr.vmem [resolvable:$true] %s266
          %269 = dma.hbm_to_vmem [thread:$0]  %s2, 16, %s267, [#allocation6]
        $region20: #{transformer_forward.6} parent=11 // pred_fallthru
          _
        // Predicated region
        $region21: #{transformer_forward.6} parent=11 // pred_check
          %p270 = pneg %p128
        $region22: #{transformer_forward.6} parent=11 // pred_check_branch
          %272 = sbr.rel (%p270) target = $region24
        $region23: #{transformer_forward.6} parent=11 // pred_region
          %s274 = ssub.s32 256, 256
          %275 = vsyncadd [#allocation9], %s274
          %s276 = sshll.u32 [#allocation8], 4
          %s277 = int_to_ptr.vmem [resolvable:$true] %s276
          %282 = dma.hbm_to_vmem [thread:$0]  %s3, 256, %s277, [#allocation9], 64, 64, 4
        $region24: #{transformer_forward.6} parent=11 // pred_fallthru
          _
        // Predicated region
        $region25: #{transformer_forward.6} parent=11 // pred_check
          %p283 = pneg %p149
        $region26: #{transformer_forward.6} parent=11 // pred_check_branch
          %285 = sbr.rel (%p283) target = $region28
        $region27: #{transformer_forward.6} parent=11 // pred_region
          %s287 = ssub.s32 16, 16
          %288 = vsyncadd [#allocation9], %s287
          %s290 = sshll.u32 [#allocation10], 4
          %s291 = int_to_ptr.vmem [resolvable:$true] %s290
          %293 = dma.hbm_to_vmem [thread:$0]  %s4, 16, %s291, [#allocation9]
        $region28: #{transformer_forward.6} parent=11 // pred_fallthru
          _
      $region12: #{transformer_forward.6} parent=5 // pred_fallthru
        _
      %p294 = scmp.lt.s32.totalorder %s25, 2
      // Predicated region
      $region29: #{transformer_forward.6} parent=5 // pred_check
        %p295 = pneg %p294
      $region30: #{transformer_forward.6} parent=5 // pred_check_branch
        %297 = sbr.rel (%p295) target = $region32
      $region31: #{transformer_forward.6} parent=5 // pred_region
        // Predicated region
        $region33: #{transformer_forward.6} parent=31 // pred_check
          %p298 = pneg %p59
        $region34: #{transformer_forward.6} parent=31 // pred_check_branch
          %300 = sbr.rel (%p298) target = $region36
        $region35: #{transformer_forward.6} parent=31 // pred_region
          %s301 = sand.u32 %s49, 1
          %s302 = scalar_lea.sflag [#allocation3], %s301
          %s303 = sand.u32 %s49, 1
          %s304 = smul.addr %s303, 8
          %s305 = scalar_lea.vmem [#allocation2], %s304
          %s307 = ssub.s32 128, 128
          %308 = vsyncadd %s302, %s307
          %s309 = sadd.s32 %s33, %s32
          %s310 = smul.addr %s309, 128
          %s311 = scalar_lea.hbm %s0, %s310
          %s313 = sshll.u32 %s305, 4
          %s314 = int_to_ptr.vmem [resolvable:$true] %s313
          %316 = dma.hbm_to_vmem [thread:$0]  %s311, 128, %s314, %s302
        $region36: #{transformer_forward.6} parent=31 // pred_fallthru
          _
      $region32: #{transformer_forward.6} parent=5 // pred_fallthru
        _
      %p317 = scmp.le.s32.totalorder 1, %s25
      %p318 = scmp.lt.s32.totalorder %s25, 3
      %p319 = pnand %p317, %p318
      %p320 = pneg %p319
      // Predicated region
      $region37: #{transformer_forward.6} parent=5 // pred_check
        _
      $region38: #{transformer_forward.6} parent=5 // pred_check_branch
        %322 = sbr.rel (%p319) target = $region40
      $region39: #{transformer_forward.6} parent=5 // pred_region
        %s323 = ssub.s32 %s25, 1
        %s324 = sand.u32 %s52, 1
        %s325 = scalar_lea.sflag [#allocation3], %s324
        %s326 = sand.u32 %s52, 1
        %s327 = smul.addr %s326, 8
        %s328 = scalar_lea.vmem [#allocation2], %s327
        // Predicated region
        $region41: #{transformer_forward.6} parent=39 // pred_check
          %p329 = pneg %p65
        $region42: #{transformer_forward.6} parent=39 // pred_check_branch
          %331 = sbr.rel (%p329) target = $region44
        $region43: #{transformer_forward.6} parent=39 // pred_region
          %332 = dma.done %s325, 128
        $region44: #{transformer_forward.6} parent=39 // pred_fallthru
          _
        // Predicated region
        $region45: #{transformer_forward.6} parent=39 // pred_check
          %p333 = pneg %p86
        $region46: #{transformer_forward.6} parent=39 // pred_check_branch
          %335 = sbr.rel (%p333) target = $region48
        $region47: #{transformer_forward.6} parent=39 // pred_region
          %336 = dma.done [#allocation6], 16
        $region48: #{transformer_forward.6} parent=39 // pred_fallthru
          _
        // Predicated region
        $region49: #{transformer_forward.6} parent=39 // pred_check
          %p337 = pneg %p107
        $region50: #{transformer_forward.6} parent=39 // pred_check_branch
          %339 = sbr.rel (%p337) target = $region52
        $region51: #{transformer_forward.6} parent=39 // pred_region
          %340 = dma.done [#allocation6], 16
        $region52: #{transformer_forward.6} parent=39 // pred_fallthru
          _
        // Predicated region
        $region53: #{transformer_forward.6} parent=39 // pred_check
          %p341 = pneg %p128
        $region54: #{transformer_forward.6} parent=39 // pred_check_branch
          %343 = sbr.rel (%p341) target = $region56
        $region55: #{transformer_forward.6} parent=39 // pred_region
          %344 = dma.done [#allocation9], 256
        $region56: #{transformer_forward.6} parent=39 // pred_fallthru
          _
        // Predicated region
        $region57: #{transformer_forward.6} parent=39 // pred_check
          %p345 = pneg %p149
        $region58: #{transformer_forward.6} parent=39 // pred_check_branch
          %347 = sbr.rel (%p345) target = $region60
        $region59: #{transformer_forward.6} parent=39 // pred_region
          %348 = dma.done [#allocation9], 16
        $region60: #{transformer_forward.6} parent=39 // pred_fallthru
          _
        %s349 = sand.u32 %s52, 1
        %s350 = scalar_lea.sflag [#allocation3], %s349
        %s351 = sand.u32 %s52, 1
        %s352 = smul.addr %s351, 8
        %s353 = scalar_lea.vmem [#allocation2], %s352
        %p354 = pneg %p65
        %p355 = pneg %p62
        %p356 = pneg %p86
        %p357 = pneg %p83
        %p358 = pneg %p107
        %p359 = pneg %p104
        %p360 = pneg %p128
        %p361 = pneg %p125
        %p362 = pneg %p149
        %p363 = pneg %p146
        %p364 = pneg %p177
        %p365 = pneg %p174
        %s366 = sand.u32 %s164, 1
        %s367 = scalar_lea.sflag [#allocation4], %s366
        %s368 = sand.u32 %s164, 1
        %s369 = smul.addr %s368, 16
        %s370 = scalar_lea.vmem [#allocation11], %s369
        %p371 = pneg %p205
        %p372 = pneg %p202
        %s373 = sand.u32 %s30, 1
        %s374 = scalar_lea.sflag [#allocation13], %s373
        %s375 = sand.u32 %s192, 1
        %s376 = smul.addr %s375, 16
        %s377 = scalar_lea.vmem [#allocation12], %s376
        %p378 = pneg %p233
        %p379 = pneg %p230
        %s380 = sand.u32 %s30, 1
        %s381 = scalar_lea.sflag [#allocation13], %s380
        %s382 = sand.u32 %s220, 1
        %s383 = smul.addr %s382, 16
        %s384 = scalar_lea.vmem [#allocation14], %s383
        %v386 = vld [vmem:[%s328] sm:$0xff]
        %v387 = vld [vmem:[#allocation5] sm:$0x1]
        %v388 = vld [vmem:[#allocation7] sm:$0x1]
        %vm389 = vcmask 261120
        %v390 = vsel %vm389, %v386, 0.0
        %391 = vadd.xlane.f32.xlu0 %v390
        %v392 = vpop.xlane.xlu0 %391
        %v393 = vrcp.pop 32.0
        %v394 = vmul.f32 %v392, %v393
        %v395 = vsub.f32 %v386, %v394
        %v396 = vmul.f32 %v395, %v395
        %v397 = vsel %vm389, %v396, 0.0
        %398 = vadd.xlane.f32.xlu0 %v397
        %v399 = vpop.xlane.xlu0 %398
        %v400 = vmul.f32 %v399, %v393
        %v401 = vadd.f32 %v400, 1e-05
        %v402 = vrsqrt.pop %v401
        %v403 = vmul.f32 %v395, %v402
        %v405 = vlaneseq
        %v406 = vshrl.u32 %v405, 7
        %v407 = vsub.s32 0, %v406
        %v408 = vrot.slane %v387, %v407
        %v410 = vmul.f32 %v403, %v408
        %v412 = vlaneseq
        %v413 = vshrl.u32 %v412, 7
        %v414 = vsub.s32 0, %v413
        %v415 = vrot.slane %v388, %v414
        %v417 = vadd.f32 %v410, %v415
        %v418 = vpack.c.bf16 %v417, %v417
        %v419 = vld [vmem:[#allocation8] sm:$0xf]
        %v420 = vld [vmem:[#allocation8 + $0x4] sm:$0xf]
        %v421 = vld [vmem:[#allocation8 + $0x8] sm:$0xf]
        %v422 = vld [vmem:[#allocation8 + $0xc] sm:$0xf]
        %v423 = vld [vmem:[#allocation10] sm:$0x1]
        %v425 = vlaneseq
        %v426 = vshrl.u32 %v425, 7
        %v427 = vsub.s32 0, %v426
        %v428 = vrot.slane %v423, %v427
        %v434 = vunpack.c.l.b16 %v419
        %v435 = vunpack.c.l.b16 %v420
        %v436 = vunpack.c.l.b16 %v421
        %v437 = vunpack.c.l.b16 %v422
        %v438 = vpack.c.b16 %v435, %v434
        %v439 = vpack.c.b16 %v437, %v436
        %v443 = vsel %vm389, %v418, 0
        %445 = vmatprep.subr.bf16.mxu0 0
        %446 = vmatpush1.bf16.msra.mxu0 %v438
        %447 = vmatprep.subr.bf16.mxu0 0
        %448 = vmatpush1.bf16.msra.mxu0 %v439
        %449 = vmatprep.subr.bf16.mxu0 0
        %450 = vmatpush1.bf16.msra.mxu0 0
        %451 = vmatprep.subr.bf16.mxu0 0
        %452 = vmatpush1.bf16.msra.mxu0 0
        %453 = vmatprep.subr.bf16.mxu0 0
        %454 = vmatpush1.bf16.msra.mxu0 0
        %455 = vmatprep.subr.bf16.mxu0 0
        %456 = vmatpush1.bf16.msra.mxu0 0
        %457 = vmatprep.subr.bf16.mxu0 0
        %458 = vmatpush1.bf16.msra.mxu0 0
        %459 = vmatprep.subr.bf16.mxu0 0
        %460 = vmatpush1.bf16.msra.mxu0 0
        %461 = vmatprep.subr.bf16.mxu0 0
        %462 = vmatpush1.bf16.msra.mxu0 0
        %463 = vmatprep.subr.bf16.mxu0 0
        %464 = vmatpush1.bf16.msra.mxu0 0
        %465 = vmatprep.subr.bf16.mxu0 0
        %466 = vmatpush1.bf16.msra.mxu0 0
        %467 = vmatprep.subr.bf16.mxu0 0
        %468 = vmatpush1.bf16.msra.mxu0 0
        %469 = vmatprep.subr.bf16.mxu0 0
        %470 = vmatpush1.bf16.msra.mxu0 0
        %471 = vmatprep.subr.bf16.mxu0 0
        %472 = vmatpush1.bf16.msra.mxu0 0
        %473 = vmatprep.subr.bf16.mxu0 0
        %474 = vmatpush1.bf16.msra.mxu0 0
        %475 = vmatprep.subr.bf16.mxu0 0
        %476 = vmatpush1.bf16.msra.mxu0 0
        %477 = vmatprep.mubr.bf16.mxu0 0
        %478 = vmatmul.mubr.bf16.gmra.mrb[0].mxu0 %v443
        %v479 = vpop.f32.mrb[0].mxu0
        %v480 = vadd.f32 %v428, %v479
        %v481 = vpop.f32.mrb[0].mxu0
        %v482 = vpop.f32.mrb[0].mxu0
        %v483 = vpop.f32.mrb[0].mxu0
        %484 = vdwg.mxu0
        %v485 = vmul.f32 %v480, 0.35355338
        %487 = vrot.lane.b32.xlu0 %v485, 120
        %v488 = vpop.permute.xlu0 %487
        %490 = vrot.lane.b32.xlu0 %v485, 112
        %v491 = vpop.permute.xlu0 %490
        %493 = vrot.lane.b32.xlu0 %v485, 104
        %v494 = vpop.permute.xlu0 %493
        %v496 = vcombine.low %v485, %v491
        %v497 = vcombine.high %v485, %v491
        %v499 = vunpack.c.l.s4 1983009808
        %v500 = vunpack.c.0.s8 %v499
        %v501 = vlaneseq
        %v502 = vshrl.u32 %v501, 7
        %v503 = vsub.s32 %v500, %v502
        %v504 = vrot.slane %v496, %v503
        %v506 = vunpack.c.l.s4 1983009808
        %v507 = vunpack.c.0.s8 %v506
        %v508 = vlaneseq
        %v509 = vshrl.u32 %v508, 7
        %v510 = vsub.s32 %v507, %v509
        %v511 = vrot.slane %v497, %v510
        %v512 = vcombine.low %v488, %v494
        %v513 = vcombine.high %v488, %v494
        %v515 = vunpack.c.l.s4 1983009808
        %v516 = vunpack.c.0.s8 %v515
        %v517 = vlaneseq
        %v518 = vshrl.u32 %v517, 7
        %v519 = vsub.s32 %v516, %v518
        %v520 = vrot.slane %v512, %v519
        %v522 = vunpack.c.l.s4 1983009808
        %v523 = vunpack.c.0.s8 %v522
        %v524 = vlaneseq
        %v525 = vshrl.u32 %v524, 7
        %v526 = vsub.s32 %v523, %v525
        %v527 = vrot.slane %v513, %v526
        %v528 = vcombine.low %v504, %v520
        %v529 = vcombine.high %v504, %v520
        %v531 = vunpack.c.l.s4 1934713408
        %v532 = vunpack.c.0.s8 %v531
        %v533 = vlaneseq
        %v534 = vshrl.u32 %v533, 7
        %v535 = vsub.s32 %v532, %v534
        %v536 = vrot.slane %v528, %v535
        %v538 = vunpack.c.l.s4 1934713408
        %v539 = vunpack.c.0.s8 %v538
        %v540 = vlaneseq
        %v541 = vshrl.u32 %v540, 7
        %v542 = vsub.s32 %v539, %v541
        %v543 = vrot.slane %v529, %v542
        %v544 = vcombine.low %v511, %v527
        %v545 = vcombine.high %v511, %v527
        %v547 = vunpack.c.l.s4 1934713408
        %v548 = vunpack.c.0.s8 %v547
        %v549 = vlaneseq
        %v550 = vshrl.u32 %v549, 7
        %v551 = vsub.s32 %v548, %v550
        %v552 = vrot.slane %v544, %v551
        %v554 = vunpack.c.l.s4 1934713408
        %v555 = vunpack.c.0.s8 %v554
        %v556 = vlaneseq
        %v557 = vshrl.u32 %v556, 7
        %v558 = vsub.s32 %v555, %v557
        %v559 = vrot.slane %v545, %v558
        %v560 = vcombine.high %v536, 0.0
        %v561 = vcombine.high %v543, 0.0
        %v562 = vcombine.high %v552, 0.0
        %v563 = vcombine.high %v559, 0.0
        %v564 = vcombine.low %v536, %v543
        %v566 = vunpack.c.l.s4 1983009808
        %v567 = vunpack.c.0.s8 %v566
        %v568 = vlaneseq
        %v569 = vshrl.u32 %v568, 7
        %v570 = vsub.s32 %v567, %v569
        %v571 = vrot.slane %v564, %v570
        %v572 = vcombine.low %v560, %v561
        %v574 = vunpack.c.l.s4 1983009808
        %v575 = vunpack.c.0.s8 %v574
        %v576 = vlaneseq
        %v577 = vshrl.u32 %v576, 7
        %v578 = vsub.s32 %v575, %v577
        %v579 = vrot.slane %v572, %v578
        %v580 = vcombine.low %v552, %v559
        %v582 = vunpack.c.l.s4 1983009808
        %v583 = vunpack.c.0.s8 %v582
        %v584 = vlaneseq
        %v585 = vshrl.u32 %v584, 7
        %v586 = vsub.s32 %v583, %v585
        %v587 = vrot.slane %v580, %v586
        %v588 = vcombine.low %v562, %v563
        %v590 = vunpack.c.l.s4 1983009808
        %v591 = vunpack.c.0.s8 %v590
        %v592 = vlaneseq
        %v593 = vshrl.u32 %v592, 7
        %v594 = vsub.s32 %v591, %v593
        %v595 = vrot.slane %v588, %v594
        %v596 = vcombine.low %v571, %v579
        %v597 = vcombine.high %v571, %v579
        %v599 = vunpack.c.l.s4 1934713408
        %v600 = vunpack.c.0.s8 %v599
        %v601 = vlaneseq
        %v602 = vshrl.u32 %v601, 7
        %v603 = vsub.s32 %v600, %v602
        %v604 = vrot.slane %v596, %v603
        %v606 = vunpack.c.l.s4 1934713408
        %v607 = vunpack.c.0.s8 %v606
        %v608 = vlaneseq
        %v609 = vshrl.u32 %v608, 7
        %v610 = vsub.s32 %v607, %v609
        %v611 = vrot.slane %v597, %v610
        %v612 = vcombine.low %v587, %v595
        %v613 = vcombine.high %v587, %v595
        %v615 = vunpack.c.l.s4 1934713408
        %v616 = vunpack.c.0.s8 %v615
        %v617 = vlaneseq
        %v618 = vshrl.u32 %v617, 7
        %v619 = vsub.s32 %v616, %v618
        %v620 = vrot.slane %v612, %v619
        %v622 = vunpack.c.l.s4 1934713408
        %v623 = vunpack.c.0.s8 %v622
        %v624 = vlaneseq
        %v625 = vshrl.u32 %v624, 7
        %v626 = vsub.s32 %v623, %v625
        %v627 = vrot.slane %v613, %v626
        %v628 = vcombine.low %v604, %v620
        %v629 = vcombine.high %v604, %v620
        %v630 = vcombine.low %v611, %v627
        %v631 = vcombine.high %v611, %v627
        %v632 = vpack.c.bf16 %v628, %v628
        %v633 = vpack.c.bf16 %v629, %v629
        %v634 = vpack.c.bf16 %v630, %v630
        %v635 = vpack.c.bf16 %v631, %v631
        %vm636 = vcmask 60416
        %637 = vst.msk [vmem:[%s370] sm:$0xf] %vm636, %v632
        %638 = vst.msk [vmem:[%s370 + $0x4] sm:$0xf] %vm636, %v633
        %639 = vst.msk [vmem:[%s370 + $0x8] sm:$0xf] %vm636, %v634
        %640 = vst.msk [vmem:[%s370 + $0xc] sm:$0xf] %vm636, %v635
        %642 = vrot.lane.b32.xlu0 %v480, 120
        %v643 = vpop.permute.xlu0 %642
        %644 = vrot.lane.b32.xlu0 %v480, 112
        %v645 = vpop.permute.xlu0 %644
        %646 = vrot.lane.b32.xlu0 %v480, 104
        %v647 = vpop.permute.xlu0 %646
        %648 = vrot.lane.b32.xlu0 %v480, 96
        %v649 = vpop.permute.xlu0 %648
        %650 = vrot.lane.b32.xlu0 %v643, 96
        %v651 = vpop.permute.xlu0 %650
        %652 = vrot.lane.b32.xlu0 %v645, 96
        %v653 = vpop.permute.xlu0 %652
        %654 = vrot.lane.b32.xlu0 %v647, 96
        %v655 = vpop.permute.xlu0 %654
        %v660 = vcombine.low %v649, %v653
        %v661 = vcombine.high %v649, %v653
        %v663 = vunpack.c.l.s4 1983009808
        %v664 = vunpack.c.0.s8 %v663
        %v665 = vlaneseq
        %v666 = vshrl.u32 %v665, 7
        %v667 = vsub.s32 %v664, %v666
        %v668 = vrot.slane %v660, %v667
        %v670 = vunpack.c.l.s4 1983009808
        %v671 = vunpack.c.0.s8 %v670
        %v672 = vlaneseq
        %v673 = vshrl.u32 %v672, 7
        %v674 = vsub.s32 %v671, %v673
        %v675 = vrot.slane %v661, %v674
        %v676 = vcombine.low %v651, %v655
        %v677 = vcombine.high %v651, %v655
        %v679 = vunpack.c.l.s4 1983009808
        %v680 = vunpack.c.0.s8 %v679
        %v681 = vlaneseq
        %v682 = vshrl.u32 %v681, 7
        %v683 = vsub.s32 %v680, %v682
        %v684 = vrot.slane %v676, %v683
        %v686 = vunpack.c.l.s4 1983009808
        %v687 = vunpack.c.0.s8 %v686
        %v688 = vlaneseq
        %v689 = vshrl.u32 %v688, 7
        %v690 = vsub.s32 %v687, %v689
        %v691 = vrot.slane %v677, %v690
        %v692 = vcombine.low %v668, %v684
        %v693 = vcombine.high %v668, %v684
        %v695 = vunpack.c.l.s4 1934713408
        %v696 = vunpack.c.0.s8 %v695
        %v697 = vlaneseq
        %v698 = vshrl.u32 %v697, 7
        %v699 = vsub.s32 %v696, %v698
        %v700 = vrot.slane %v692, %v699
        %v702 = vunpack.c.l.s4 1934713408
        %v703 = vunpack.c.0.s8 %v702
        %v704 = vlaneseq
        %v705 = vshrl.u32 %v704, 7
        %v706 = vsub.s32 %v703, %v705
        %v707 = vrot.slane %v693, %v706
        %v708 = vcombine.low %v675, %v691
        %v709 = vcombine.high %v675, %v691
        %v711 = vunpack.c.l.s4 1934713408
        %v712 = vunpack.c.0.s8 %v711
        %v713 = vlaneseq
        %v714 = vshrl.u32 %v713, 7
        %v715 = vsub.s32 %v712, %v714
        %v716 = vrot.slane %v708, %v715
        %v718 = vunpack.c.l.s4 1934713408
        %v719 = vunpack.c.0.s8 %v718
        %v720 = vlaneseq
        %v721 = vshrl.u32 %v720, 7
        %v722 = vsub.s32 %v719, %v721
        %v723 = vrot.slane %v709, %v722
        %v724 = vcombine.high %v700, 0.0
        %v725 = vcombine.high %v707, 0.0
        %v726 = vcombine.high %v716, 0.0
        %v727 = vcombine.high %v723, 0.0
        %v728 = vcombine.low %v700, %v707
        %v730 = vunpack.c.l.s4 1983009808
        %v731 = vunpack.c.0.s8 %v730
        %v732 = vlaneseq
        %v733 = vshrl.u32 %v732, 7
        %v734 = vsub.s32 %v731, %v733
        %v735 = vrot.slane %v728, %v734
        %v736 = vcombine.low %v724, %v725
        %v738 = vunpack.c.l.s4 1983009808
        %v739 = vunpack.c.0.s8 %v738
        %v740 = vlaneseq
        %v741 = vshrl.u32 %v740, 7
        %v742 = vsub.s32 %v739, %v741
        %v743 = vrot.slane %v736, %v742
        %v744 = vcombine.low %v716, %v723
        %v746 = vunpack.c.l.s4 1983009808
        %v747 = vunpack.c.0.s8 %v746
        %v748 = vlaneseq
        %v749 = vshrl.u32 %v748, 7
        %v750 = vsub.s32 %v747, %v749
        %v751 = vrot.slane %v744, %v750
        %v752 = vcombine.low %v726, %v727
        %v754 = vunpack.c.l.s4 1983009808
        %v755 = vunpack.c.0.s8 %v754
        %v756 = vlaneseq
        %v757 = vshrl.u32 %v756, 7
        %v758 = vsub.s32 %v755, %v757
        %v759 = vrot.slane %v752, %v758
        %v760 = vcombine.low %v735, %v743
        %v761 = vcombine.high %v735, %v743
        %v763 = vunpack.c.l.s4 1934713408
        %v764 = vunpack.c.0.s8 %v763
        %v765 = vlaneseq
        %v766 = vshrl.u32 %v765, 7
        %v767 = vsub.s32 %v764, %v766
        %v768 = vrot.slane %v760, %v767
        %v770 = vunpack.c.l.s4 1934713408
        %v771 = vunpack.c.0.s8 %v770
        %v772 = vlaneseq
        %v773 = vshrl.u32 %v772, 7
        %v774 = vsub.s32 %v771, %v773
        %v775 = vrot.slane %v761, %v774
        %v776 = vcombine.low %v751, %v759
        %v777 = vcombine.high %v751, %v759
        %v779 = vunpack.c.l.s4 1934713408
        %v780 = vunpack.c.0.s8 %v779
        %v781 = vlaneseq
        %v782 = vshrl.u32 %v781, 7
        %v783 = vsub.s32 %v780, %v782
        %v784 = vrot.slane %v776, %v783
        %v786 = vunpack.c.l.s4 1934713408
        %v787 = vunpack.c.0.s8 %v786
        %v788 = vlaneseq
        %v789 = vshrl.u32 %v788, 7
        %v790 = vsub.s32 %v787, %v789
        %v791 = vrot.slane %v777, %v790
        %v792 = vcombine.low %v768, %v784
        %v793 = vcombine.high %v768, %v784
        %v794 = vcombine.low %v775, %v791
        %v795 = vcombine.high %v775, %v791
        %v796 = vpack.c.bf16 %v792, %v792
        %v797 = vpack.c.bf16 %v793, %v793
        %v798 = vpack.c.bf16 %v794, %v794
        %v799 = vpack.c.bf16 %v795, %v795
        %800 = vst.msk [vmem:[%s377] sm:$0xf] %vm636, %v796
        %801 = vst.msk [vmem:[%s377 + $0x4] sm:$0xf] %vm636, %v797
        %802 = vst.msk [vmem:[%s377 + $0x8] sm:$0xf] %vm636, %v798
        %803 = vst.msk [vmem:[%s377 + $0xc] sm:$0xf] %vm636, %v799
        %804 = vrot.lane.b32.xlu0 %v480, 64
        %v805 = vpop.permute.xlu0 %804
        %806 = vrot.lane.b32.xlu0 %v643, 64
        %v807 = vpop.permute.xlu0 %806
        %808 = vrot.lane.b32.xlu0 %v645, 64
        %v809 = vpop.permute.xlu0 %808
        %810 = vrot.lane.b32.xlu0 %v647, 64
        %v811 = vpop.permute.xlu0 %810
        %v816 = vcombine.low %v805, %v809
        %v817 = vcombine.high %v805, %v809
        %v819 = vunpack.c.l.s4 1983009808
        %v820 = vunpack.c.0.s8 %v819
        %v821 = vlaneseq
        %v822 = vshrl.u32 %v821, 7
        %v823 = vsub.s32 %v820, %v822
        %v824 = vrot.slane %v816, %v823
        %v826 = vunpack.c.l.s4 1983009808
        %v827 = vunpack.c.0.s8 %v826
        %v828 = vlaneseq
        %v829 = vshrl.u32 %v828, 7
        %v830 = vsub.s32 %v827, %v829
        %v831 = vrot.slane %v817, %v830
        %v832 = vcombine.low %v807, %v811
        %v833 = vcombine.high %v807, %v811
        %v835 = vunpack.c.l.s4 1983009808
        %v836 = vunpack.c.0.s8 %v835
        %v837 = vlaneseq
        %v838 = vshrl.u32 %v837, 7
        %v839 = vsub.s32 %v836, %v838
        %v840 = vrot.slane %v832, %v839
        %v842 = vunpack.c.l.s4 1983009808
        %v843 = vunpack.c.0.s8 %v842
        %v844 = vlaneseq
        %v845 = vshrl.u32 %v844, 7
        %v846 = vsub.s32 %v843, %v845
        %v847 = vrot.slane %v833, %v846
        %v848 = vcombine.low %v824, %v840
        %v849 = vcombine.high %v824, %v840
        %v851 = vunpack.c.l.s4 1934713408
        %v852 = vunpack.c.0.s8 %v851
        %v853 = vlaneseq
        %v854 = vshrl.u32 %v853, 7
        %v855 = vsub.s32 %v852, %v854
        %v856 = vrot.slane %v848, %v855
        %v858 = vunpack.c.l.s4 1934713408
        %v859 = vunpack.c.0.s8 %v858
        %v860 = vlaneseq
        %v861 = vshrl.u32 %v860, 7
        %v862 = vsub.s32 %v859, %v861
        %v863 = vrot.slane %v849, %v862
        %v864 = vcombine.low %v831, %v847
        %v865 = vcombine.high %v831, %v847
        %v867 = vunpack.c.l.s4 1934713408
        %v868 = vunpack.c.0.s8 %v867
        %v869 = vlaneseq
        %v870 = vshrl.u32 %v869, 7
        %v871 = vsub.s32 %v868, %v870
        %v872 = vrot.slane %v864, %v871
        %v874 = vunpack.c.l.s4 1934713408
        %v875 = vunpack.c.0.s8 %v874
        %v876 = vlaneseq
        %v877 = vshrl.u32 %v876, 7
        %v878 = vsub.s32 %v875, %v877
        %v879 = vrot.slane %v865, %v878
        %v880 = vcombine.high %v856, 0.0
        %v881 = vcombine.high %v863, 0.0
        %v882 = vcombine.high %v872, 0.0
        %v883 = vcombine.high %v879, 0.0
        %v884 = vcombine.low %v856, %v863
        %v886 = vunpack.c.l.s4 1983009808
        %v887 = vunpack.c.0.s8 %v886
        %v888 = vlaneseq
        %v889 = vshrl.u32 %v888, 7
        %v890 = vsub.s32 %v887, %v889
        %v891 = vrot.slane %v884, %v890
        %v892 = vcombine.low %v880, %v881
        %v894 = vunpack.c.l.s4 1983009808
        %v895 = vunpack.c.0.s8 %v894
        %v896 = vlaneseq
        %v897 = vshrl.u32 %v896, 7
        %v898 = vsub.s32 %v895, %v897
        %v899 = vrot.slane %v892, %v898
        %v900 = vcombine.low %v872, %v879
        %v902 = vunpack.c.l.s4 1983009808
        %v903 = vunpack.c.0.s8 %v902
        %v904 = vlaneseq
        %v905 = vshrl.u32 %v904, 7
        %v906 = vsub.s32 %v903, %v905
        %v907 = vrot.slane %v900, %v906
        %v908 = vcombine.low %v882, %v883
        %v910 = vunpack.c.l.s4 1983009808
        %v911 = vunpack.c.0.s8 %v910
        %v912 = vlaneseq
        %v913 = vshrl.u32 %v912, 7
        %v914 = vsub.s32 %v911, %v913
        %v915 = vrot.slane %v908, %v914
        %v916 = vcombine.low %v891, %v899
        %v917 = vcombine.high %v891, %v899
        %v919 = vunpack.c.l.s4 1934713408
        %v920 = vunpack.c.0.s8 %v919
        %v921 = vlaneseq
        %v922 = vshrl.u32 %v921, 7
        %v923 = vsub.s32 %v920, %v922
        %v924 = vrot.slane %v916, %v923
        %v926 = vunpack.c.l.s4 1934713408
        %v927 = vunpack.c.0.s8 %v926
        %v928 = vlaneseq
        %v929 = vshrl.u32 %v928, 7
        %v930 = vsub.s32 %v927, %v929
        %v931 = vrot.slane %v917, %v930
        %v932 = vcombine.low %v907, %v915
        %v933 = vcombine.high %v907, %v915
        %v935 = vunpack.c.l.s4 1934713408
        %v936 = vunpack.c.0.s8 %v935
        %v937 = vlaneseq
        %v938 = vshrl.u32 %v937, 7
        %v939 = vsub.s32 %v936, %v938
        %v940 = vrot.slane %v932, %v939
        %v942 = vunpack.c.l.s4 1934713408
        %v943 = vunpack.c.0.s8 %v942
        %v944 = vlaneseq
        %v945 = vshrl.u32 %v944, 7
        %v946 = vsub.s32 %v943, %v945
        %v947 = vrot.slane %v933, %v946
        %v948 = vcombine.low %v924, %v940
        %v949 = vcombine.high %v924, %v940
        %v950 = vcombine.low %v931, %v947
        %v951 = vcombine.high %v931, %v947
        %v952 = vpack.c.bf16 %v948, %v948
        %v953 = vpack.c.bf16 %v949, %v949
        %v954 = vpack.c.bf16 %v950, %v950
        %v955 = vpack.c.bf16 %v951, %v951
        %956 = vst.msk [vmem:[%s384] sm:$0xf] %vm636, %v952
        %957 = vst.msk [vmem:[%s384 + $0x4] sm:$0xf] %vm636, %v953
        %958 = vst.msk [vmem:[%s384 + $0x8] sm:$0xf] %vm636, %v954
        %959 = vst.msk [vmem:[%s384 + $0xc] sm:$0xf] %vm636, %v955
        %s960 = sand.u32 %s164, 1
        %s961 = scalar_lea.sflag [#allocation4], %s960
        %s962 = sand.u32 %s164, 1
        %s963 = smul.addr %s962, 16
        %s964 = scalar_lea.vmem [#allocation11], %s963
        %s965 = sand.u32 %s30, 1
        %s966 = scalar_lea.sflag [#allocation13], %s965
        %s967 = sand.u32 %s192, 1
        %s968 = smul.addr %s967, 16
        %s969 = scalar_lea.vmem [#allocation12], %s968
        %s970 = sand.u32 %s30, 1
        %s971 = scalar_lea.sflag [#allocation13], %s970
        %s972 = sand.u32 %s220, 1
        %s973 = smul.addr %s972, 16
        %s974 = scalar_lea.vmem [#allocation14], %s973
        // Predicated region
        $region61: #{transformer_forward.6} parent=39 // pred_check
          %p975 = pneg %p174
        $region62: #{transformer_forward.6} parent=39 // pred_check_branch
          %977 = sbr.rel (%p975) target = $region64
        $region63: #{transformer_forward.6} parent=39 // pred_region
          %s979 = ssub.s32 256, 256
          %980 = vsyncadd %s961, %s979
          %s981 = smul.addr %s34, 4
          %s982 = sadd.s32 %s35, %s981
          %s983 = smul.addr %s982, 64
          %s984 = scalar_lea.hbm %s5, %s983
          %s985 = sshll.u32 %s964, 4
          %s986 = int_to_ptr.vmem [resolvable:$true] %s985
          %991 = dma.vmem_to_hbm [thread:$0]  %s986, 256, %s984, %s961, 64, 64, 4
        $region64: #{transformer_forward.6} parent=39 // pred_fallthru
          _
        // Predicated region
        $region65: #{transformer_forward.6} parent=39 // pred_check
          %p992 = pneg %p202
        $region66: #{transformer_forward.6} parent=39 // pred_check_branch
          %994 = sbr.rel (%p992) target = $region68
        $region67: #{transformer_forward.6} parent=39 // pred_region
          %s996 = ssub.s32 256, 256
          %997 = vsyncadd %s966, %s996
          %s998 = smul.addr %s34, 4
          %s999 = sadd.s32 %s35, %s998
          %s1000 = smul.addr %s999, 64
          %s1001 = scalar_lea.hbm %s6, %s1000
          %s1002 = sshll.u32 %s969, 4
          %s1003 = int_to_ptr.vmem [resolvable:$true] %s1002
          %1008 = dma.vmem_to_hbm [thread:$0]  %s1003, 256, %s1001, %s966, 64, 64, 4
        $region68: #{transformer_forward.6} parent=39 // pred_fallthru
          _
        // Predicated region
        $region69: #{transformer_forward.6} parent=39 // pred_check
          %p1009 = pneg %p230
        $region70: #{transformer_forward.6} parent=39 // pred_check_branch
          %1011 = sbr.rel (%p1009) target = $region72
        $region71: #{transformer_forward.6} parent=39 // pred_region
          %s1013 = ssub.s32 256, 256
          %1014 = vsyncadd %s971, %s1013
          %s1015 = smul.addr %s34, 4
          %s1016 = sadd.s32 %s35, %s1015
          %s1017 = smul.addr %s1016, 64
          %s1018 = scalar_lea.hbm %s7, %s1017
          %s1019 = sshll.u32 %s974, 4
          %s1020 = int_to_ptr.vmem [resolvable:$true] %s1019
          %1025 = dma.vmem_to_hbm [thread:$0]  %s1020, 256, %s1018, %s971, 64, 64, 4
        $region72: #{transformer_forward.6} parent=39 // pred_fallthru
          _
      $region40: #{transformer_forward.6} parent=5 // pred_fallthru
        _
      %p1026 = scmp.le.s32.totalorder 2, %s25
      // Predicated region
      $region73: #{transformer_forward.6} parent=5 // pred_check
        %p1027 = pneg %p1026
      $region74: #{transformer_forward.6} parent=5 // pred_check_branch
        %1029 = sbr.rel (%p1027) target = $region76
      $region75: #{transformer_forward.6} parent=5 // pred_region
        %s1030 = ssub.s32 %s25, 2
        // Predicated region
        $region77: #{transformer_forward.6} parent=75 // pred_check
          %p1031 = pneg %p180
        $region78: #{transformer_forward.6} parent=75 // pred_check_branch
          %1033 = sbr.rel (%p1031) target = $region80
        $region79: #{transformer_forward.6} parent=75 // pred_region
          %s1034 = sand.u32 %s165, 1
          %s1035 = scalar_lea.sflag [#allocation4], %s1034
          %s1036 = sand.u32 %s165, 1
          %s1037 = smul.addr %s1036, 16
          %s1038 = scalar_lea.vmem [#allocation11], %s1037
          %1039 = dma.done %s1035, 256
        $region80: #{transformer_forward.6} parent=75 // pred_fallthru
          _
        // Predicated region
        $region81: #{transformer_forward.6} parent=75 // pred_check
          %p1040 = pneg %p208
        $region82: #{transformer_forward.6} parent=75 // pred_check_branch
          %1042 = sbr.rel (%p1040) target = $region84
        $region83: #{transformer_forward.6} parent=75 // pred_region
          %s1043 = sand.u32 %s31, 1
          %s1044 = scalar_lea.sflag [#allocation13], %s1043
          %s1045 = sand.u32 %s193, 1
          %s1046 = smul.addr %s1045, 16
          %s1047 = scalar_lea.vmem [#allocation12], %s1046
          %1048 = dma.done %s1044, 256
        $region84: #{transformer_forward.6} parent=75 // pred_fallthru
          _
        // Predicated region
        $region85: #{transformer_forward.6} parent=75 // pred_check
          %p1049 = pneg %p236
        $region86: #{transformer_forward.6} parent=75 // pred_check_branch
          %1051 = sbr.rel (%p1049) target = $region88
        $region87: #{transformer_forward.6} parent=75 // pred_region
          %s1052 = sand.u32 %s31, 1
          %s1053 = scalar_lea.sflag [#allocation13], %s1052
          %s1054 = sand.u32 %s221, 1
          %s1055 = smul.addr %s1054, 16
          %s1056 = scalar_lea.vmem [#allocation14], %s1055
          %1057 = dma.done %s1053, 256
        $region88: #{transformer_forward.6} parent=75 // pred_fallthru
          _
      $region76: #{transformer_forward.6} parent=5 // pred_fallthru
        _
    $region6: #{transformer_forward.6} parent=1 // loop_footer
      %s29 = sadd.s32 1, %s25
    $region7: #{transformer_forward.6} parent=1 // loop_footer_branch
      %24 = sbr.rel target = $region3
    $region8: #{transformer_forward.6} parent=1 // loop_exit
      _
    %1058 = vsyncpa [#allocation3], 1
    %s1059 = scalar_lea.sflag [#allocation3], 1
    %1060 = vsyncpa %s1059, 1
    %1061 = vsyncpa [#allocation6], 1
    %1062 = vsyncpa [#allocation9], 1
    %1063 = vsyncpa [#allocation4], 1
    %s1064 = scalar_lea.sflag [#allocation4], 1
    %1065 = vsyncpa %s1064, 1
    %1066 = vsyncpa [#allocation13], 1
    %s1067 = scalar_lea.sflag [#allocation13], 1
    %1068 = vsyncpa %s1067, 1

// kernel: transformer_forward.11
$region0: #{transformer_forward.11}
  #allocation0 [shape = 'u32[]', space=smem, size = 0x4, offset = 0x4, fixed_abs, tag = 'smem constant byte address 0x4 - core index']
  #allocation1 [shape = 'u32[144,128]{1,0:T(1,128)}', space=vmem, size = 0x12000, scoped, tag = 'internal scratch']
  %s0 = inlined_call_operand.hbm [shape: f32[2,8,32], index: 0, kind: input, shape index: {}]
  %s1 = inlined_call_operand.hbm [shape: bf16[2,8,32], index: 1, kind: input, shape index: {}]
  %s2 = inlined_call_operand.hbm [shape: bf16[32,32], index: 2, kind: input, shape index: {}]
  %s3 = inlined_call_operand.hbm [shape: f32[1,32], index: 3, kind: input, shape index: {}]
  %s4 = inlined_call_operand.hbm [shape: f32[1,32], index: 4, kind: input, shape index: {}]
  %s5 = inlined_call_operand.hbm [shape: f32[1,32], index: 5, kind: input, shape index: {}]
  %s6 = inlined_call_operand.hbm [shape: bf16[32,64], index: 6, kind: input, shape index: {}]
  %s7 = inlined_call_operand.hbm [shape: f32[1,64], index: 7, kind: input, shape index: {}]
  %s8 = inlined_call_operand.hbm [shape: bf16[64,32], index: 8, kind: input, shape index: {}]
  %s9 = inlined_call_operand.hbm [shape: f32[1,32], index: 9, kind: input, shape index: {}]
  %s10 = inlined_call_operand.hbm [shape: f32[1,32], index: 10, kind: input, shape index: {}]
  %s11 = inlined_call_operand.hbm [shape: f32[1,32], index: 11, kind: input, shape index: {}]
  %s12 = inlined_call_operand.hbm [shape: f32[2,8,32], index: 12, kind: output, shape index: {}]
  %s13 = sld [smem:[#allocation0]]
  $region129: #{transformer_forward.11} parent=0
    _
  %s15 = ssub.s32 1, %s13
  %s16 = scalar_select 0, %s15, %s13
  $region1: #{transformer_forward.11} parent=0
    #allocation2 [shape = 'u8[8192]{0}', space=vmem, size = 0x2000, scoped, tag = 'input window, operand 0']
    #allocation3 [shape = 's32[2]{0}', space=sflag, size = 0x8, scoped, tag = 'scoped memory for transformer_forward.11']
    #allocation4 [shape = 's32[2]{0}', space=sflag, size = 0x8, scoped, tag = 'scoped memory for transformer_forward.11']
    #allocation5 [shape = 'u8[4096]{0}', space=vmem, size = 0x1000, scoped, tag = 'input window, operand 1']
    #allocation6 [shape = 's32[2]{0}', space=sflag, size = 0x8, scoped, tag = 'scoped memory for transformer_forward.11']
    #allocation7 [shape = 'u8[8192]{0}', space=vmem, size = 0x2000, scoped, tag = 'input window, operand 2, single buffered']
    #allocation8 [shape = 'u8[512]{0}', space=vmem, size = 0x400, scoped, tag = 'input window, operand 3, single buffered']
    #allocation9 [shape = 's32[1]{0}', space=sflag, size = 0x4, scoped, tag = 'scoped memory for transformer_forward.11']
    #allocation10 [shape = 'u8[512]{0}', space=vmem, size = 0x400, scoped, tag = 'input window, operand 4, single buffered']
    #allocation11 [shape = 'u8[512]{0}', space=vmem, size = 0x400, scoped, tag = 'input window, operand 5, single buffered']
    #allocation12 [shape = 's32[1]{0}', space=sflag, size = 0x4, scoped, tag = 'scoped memory for transformer_forward.11']
    #allocation13 [shape = 'u8[8192]{0}', space=vmem, size = 0x2000, scoped, tag = 'input window, operand 6, single buffered']
    #allocation14 [shape = 'u8[512]{0}', space=vmem, size = 0x400, scoped, tag = 'input window, operand 7, single buffered']
    #allocation15 [shape = 's32[1]{0}', space=sflag, size = 0x4, scoped, tag = 'scoped memory for transformer_forward.11']
    #allocation16 [shape = 'u8[16384]{0}', space=vmem, size = 0x4000, scoped, tag = 'input window, operand 8, single buffered']
    #allocation17 [shape = 'u8[512]{0}', space=vmem, size = 0x400, scoped, tag = 'input window, operand 9, single buffered']
    #allocation18 [shape = 's32[1]{0}', space=sflag, size = 0x4, scoped, tag = 'scoped memory for transformer_forward.11']
    #allocation19 [shape = 'u8[512]{0}', space=vmem, size = 0x400, scoped, tag = 'input window, operand 10, single buffered']
    #allocation20 [shape = 'u8[512]{0}', space=vmem, size = 0x400, scoped, tag = 'input window, operand 11, single buffered']
    #allocation21 [shape = 's32[1]{0}', space=sflag, size = 0x4, scoped, tag = 'scoped memory for transformer_forward.11']
    #allocation22 [shape = 'u8[8192]{0}', space=vmem, size = 0x2000, scoped, tag = 'output window, operand 0']
    %17 = vsyncpa [#allocation3], 0
    %s18 = scalar_lea.sflag [#allocation3], 1
    %19 = vsyncpa %s18, 0
    %20 = vsyncpa [#allocation6], 0
    %s21 = scalar_lea.sflag [#allocation6], 1
    %22 = vsyncpa %s21, 0
    %23 = vsyncpa [#allocation9], 0
    %24 = vsyncpa [#allocation12], 0
    %25 = vsyncpa [#allocation15], 0
    %26 = vsyncpa [#allocation18], 0
    %27 = vsyncpa [#allocation21], 0
    %28 = vsyncpa [#allocation4], 0
    %s29 = scalar_lea.sflag [#allocation4], 1
    %30 = vsyncpa %s29, 0
    loop: start=0, step=1, limit=4
    $region2: #{transformer_forward.11} parent=1 // loop_pre_header
      _
    $region3: #{transformer_forward.11} parent=1 // loop_header
      %s32 = sphi 0, %s36
      %p33 = scmp.ge.s32.totalorder %s32, 4
      %s39 = sphi 0, %s51
      %s40 = sphi 0, %s47
      %s41 = sphi 0, %s39
      %s42 = sphi 0, %s40
      %s43 = sphi 0, %s41
      %s44 = sphi 0, %s42
      %s56 = sphi 0, %s58
      %s59 = sphi 0, %s56
      %s60 = sphi 0, %s59
      %s76 = sphi 0, %s60
      %s84 = sphi 0, %s86
      %s87 = sphi 0, %s84
      %s88 = sphi 0, %s87
      %s104 = sphi 0, %s88
      %s108 = sphi 0, %s108
      %s110 = sphi 0, %s108
      %s111 = sphi 0, %s110
      %s125 = sphi 0, %s111
      %s129 = sphi 0, %s129
      %s131 = sphi 0, %s129
      %s132 = sphi 0, %s131
      %s146 = sphi 0, %s132
      %s150 = sphi 0, %s150
      %s152 = sphi 0, %s150
      %s153 = sphi 0, %s152
      %s167 = sphi 0, %s153
      %s171 = sphi 0, %s171
      %s173 = sphi 0, %s171
      %s174 = sphi 0, %s173
      %s188 = sphi 0, %s174
      %s192 = sphi 0, %s192
      %s194 = sphi 0, %s192
      %s195 = sphi 0, %s194
      %s209 = sphi 0, %s195
      %s213 = sphi 0, %s213
      %s215 = sphi 0, %s213
      %s216 = sphi 0, %s215
      %s230 = sphi 0, %s216
      %s234 = sphi 0, %s234
      %s236 = sphi 0, %s234
      %s237 = sphi 0, %s236
      %s251 = sphi 0, %s237
      %s255 = sphi 0, %s255
      %s257 = sphi 0, %s255
      %s258 = sphi 0, %s257
      %s272 = sphi 0, %s258
      %s276 = sphi 0, %s276
      %s278 = sphi 0, %s276
      %s279 = sphi 0, %s278
      %s293 = sphi 0, %s279
      %s297 = sphi 0, %s297
      %s299 = sphi 0, %s297
      %s300 = sphi 0, %s299
      %s314 = sphi 0, %s300
      %s322 = sphi 0, %s324
      %s325 = sphi 0, %s322
      %s326 = sphi 0, %s325
      %s342 = sphi 0, %s326
    $region4: #{transformer_forward.11} parent=1 // loop_header_branch
      %35 = sbr.rel (%p33) target = $region8
    $region5: #{transformer_forward.11} parent=1 // loop_body
      %s37 = ssub.s32 %s32, 1
      %s38 = ssub.s32 %s32, 2
      %s45 = sadd.s32 1, %s40
      %p46 = scmp.ge.s32.totalorder %s45, 1
      %s47 = scalar_select %p46, 0, %s45
      %s48 = sadd.s32 1, %s39
      %s49 = scalar_select %p46, %s48, %s39
      %p50 = scmp.ge.s32.totalorder %s49, 2
      %s51 = scalar_select %p50, 0, %s49
      %s52 = ssub.s32 %s39, %s51
      %s53 = ssub.s32 %s40, %s47
      %s54 = sor.u32 %s52, %s53
      %p55 = scmp.eq.s32.totalorder %s54, 0
      %s57 = sadd.s32 %s56, 1
      %s58 = scalar_select %p55, %s56, %s57
      %p61 = pneg %p55
      %p62 = scmp.eq.s32.totalorder %s32, 1
      %p63 = por %p61, %p62
      %p64 = scmp.ne.s32.totalorder %s56, %s59
      %p65 = scmp.eq.s32.totalorder %s32, 0
      %p66 = por %p64, %p65
      %p67 = scmp.ne.s32.totalorder %s56, %s59
      %p68 = scmp.eq.s32.totalorder %s37, 1
      %p69 = por %p67, %p68
      %p70 = scmp.ne.s32.totalorder %s59, %s60
      %p71 = scmp.eq.s32.totalorder %s37, 0
      %p72 = por %p70, %p71
      %p73 = scmp.ne.s32.totalorder %s59, %s60
      %p74 = scmp.eq.s32.totalorder %s38, 1
      %p75 = por %p73, %p74
      %p77 = scmp.ne.s32.totalorder %s60, %s76
      %p78 = scmp.eq.s32.totalorder %s38, 0
      %p79 = por %p77, %p78
      %s80 = ssub.s32 %s39, %s51
      %s81 = ssub.s32 %s40, %s47
      %s82 = sor.u32 %s80, %s81
      %p83 = scmp.eq.s32.totalorder %s82, 0
      %s85 = sadd.s32 %s84, 1
      %s86 = scalar_select %p83, %s84, %s85
      %p89 = pneg %p83
      %p90 = scmp.eq.s32.totalorder %s32, 1
      %p91 = por %p89, %p90
      %p92 = scmp.ne.s32.totalorder %s84, %s87
      %p93 = scmp.eq.s32.totalorder %s32, 0
      %p94 = por %p92, %p93
      %p95 = scmp.ne.s32.totalorder %s84, %s87
      %p96 = scmp.eq.s32.totalorder %s37, 1
      %p97 = por %p95, %p96
      %p98 = scmp.ne.s32.totalorder %s87, %s88
      %p99 = scmp.eq.s32.totalorder %s37, 0
      %p100 = por %p98, %p99
      %p101 = scmp.ne.s32.totalorder %s87, %s88
      %p102 = scmp.eq.s32.totalorder %s38, 1
      %p103 = por %p101, %p102
      %p105 = scmp.ne.s32.totalorder %s88, %s104
      %p106 = scmp.eq.s32.totalorder %s38, 0
      %p107 = por %p105, %p106
      %s109 = sadd.s32 %s108, 1
      %p112 = scmp.eq.s32.totalorder %s32, 1
      %p113 = scmp.ne.s32.totalorder %s108, %s110
      %p114 = scmp.eq.s32.totalorder %s32, 0
      %p115 = por %p113, %p114
      %p116 = scmp.ne.s32.totalorder %s108, %s110
      %p117 = scmp.eq.s32.totalorder %s37, 1
      %p118 = por %p116, %p117
      %p119 = scmp.ne.s32.totalorder %s110, %s111
      %p120 = scmp.eq.s32.totalorder %s37, 0
      %p121 = por %p119, %p120
      %p122 = scmp.ne.s32.totalorder %s110, %s111
      %p123 = scmp.eq.s32.totalorder %s38, 1
      %p124 = por %p122, %p123
      %p126 = scmp.ne.s32.totalorder %s111, %s125
      %p127 = scmp.eq.s32.totalorder %s38, 0
      %p128 = por %p126, %p127
      %s130 = sadd.s32 %s129, 1
      %p133 = scmp.eq.s32.totalorder %s32, 1
      %p134 = scmp.ne.s32.totalorder %s129, %s131
      %p135 = scmp.eq.s32.totalorder %s32, 0
      %p136 = por %p134, %p135
      %p137 = scmp.ne.s32.totalorder %s129, %s131
      %p138 = scmp.eq.s32.totalorder %s37, 1
      %p139 = por %p137, %p138
      %p140 = scmp.ne.s32.totalorder %s131, %s132
      %p141 = scmp.eq.s32.totalorder %s37, 0
      %p142 = por %p140, %p141
      %p143 = scmp.ne.s32.totalorder %s131, %s132
      %p144 = scmp.eq.s32.totalorder %s38, 1
      %p145 = por %p143, %p144
      %p147 = scmp.ne.s32.totalorder %s132, %s146
      %p148 = scmp.eq.s32.totalorder %s38, 0
      %p149 = por %p147, %p148
      %s151 = sadd.s32 %s150, 1
      %p154 = scmp.eq.s32.totalorder %s32, 1
      %p155 = scmp.ne.s32.totalorder %s150, %s152
      %p156 = scmp.eq.s32.totalorder %s32, 0
      %p157 = por %p155, %p156
      %p158 = scmp.ne.s32.totalorder %s150, %s152
      %p159 = scmp.eq.s32.totalorder %s37, 1
      %p160 = por %p158, %p159
      %p161 = scmp.ne.s32.totalorder %s152, %s153
      %p162 = scmp.eq.s32.totalorder %s37, 0
      %p163 = por %p161, %p162
      %p164 = scmp.ne.s32.totalorder %s152, %s153
      %p165 = scmp.eq.s32.totalorder %s38, 1
      %p166 = por %p164, %p165
      %p168 = scmp.ne.s32.totalorder %s153, %s167
      %p169 = scmp.eq.s32.totalorder %s38, 0
      %p170 = por %p168, %p169
      %s172 = sadd.s32 %s171, 1
      %p175 = scmp.eq.s32.totalorder %s32, 1
      %p176 = scmp.ne.s32.totalorder %s171, %s173
      %p177 = scmp.eq.s32.totalorder %s32, 0
      %p178 = por %p176, %p177
      %p179 = scmp.ne.s32.totalorder %s171, %s173
      %p180 = scmp.eq.s32.totalorder %s37, 1
      %p181 = por %p179, %p180
      %p182 = scmp.ne.s32.totalorder %s173, %s174
      %p183 = scmp.eq.s32.totalorder %s37, 0
      %p184 = por %p182, %p183
      %p185 = scmp.ne.s32.totalorder %s173, %s174
      %p186 = scmp.eq.s32.totalorder %s38, 1
      %p187 = por %p185, %p186
      %p189 = scmp.ne.s32.totalorder %s174, %s188
      %p190 = scmp.eq.s32.totalorder %s38, 0
      %p191 = por %p189, %p190
      %s193 = sadd.s32 %s192, 1
      %p196 = scmp.eq.s32.totalorder %s32, 1
      %p197 = scmp.ne.s32.totalorder %s192, %s194
      %p198 = scmp.eq.s32.totalorder %s32, 0
      %p199 = por %p197, %p198
      %p200 = scmp.ne.s32.totalorder %s192, %s194
      %p201 = scmp.eq.s32.totalorder %s37, 1
      %p202 = por %p200, %p201
      %p203 = scmp.ne.s32.totalorder %s194, %s195
      %p204 = scmp.eq.s32.totalorder %s37, 0
      %p205 = por %p203, %p204
      %p206 = scmp.ne.s32.totalorder %s194, %s195
      %p207 = scmp.eq.s32.totalorder %s38, 1
      %p208 = por %p206, %p207
      %p210 = scmp.ne.s32.totalorder %s195, %s209
      %p211 = scmp.eq.s32.totalorder %s38, 0
      %p212 = por %p210, %p211
      %s214 = sadd.s32 %s213, 1
      %p217 = scmp.eq.s32.totalorder %s32, 1
      %p218 = scmp.ne.s32.totalorder %s213, %s215
      %p219 = scmp.eq.s32.totalorder %s32, 0
      %p220 = por %p218, %p219
      %p221 = scmp.ne.s32.totalorder %s213, %s215
      %p222 = scmp.eq.s32.totalorder %s37, 1
      %p223 = por %p221, %p222
      %p224 = scmp.ne.s32.totalorder %s215, %s216
      %p225 = scmp.eq.s32.totalorder %s37, 0
      %p226 = por %p224, %p225
      %p227 = scmp.ne.s32.totalorder %s215, %s216
      %p228 = scmp.eq.s32.totalorder %s38, 1
      %p229 = por %p227, %p228
      %p231 = scmp.ne.s32.totalorder %s216, %s230
      %p232 = scmp.eq.s32.totalorder %s38, 0
      %p233 = por %p231, %p232
      %s235 = sadd.s32 %s234, 1
      %p238 = scmp.eq.s32.totalorder %s32, 1
      %p239 = scmp.ne.s32.totalorder %s234, %s236
      %p240 = scmp.eq.s32.totalorder %s32, 0
      %p241 = por %p239, %p240
      %p242 = scmp.ne.s32.totalorder %s234, %s236
      %p243 = scmp.eq.s32.totalorder %s37, 1
      %p244 = por %p242, %p243
      %p245 = scmp.ne.s32.totalorder %s236, %s237
      %p246 = scmp.eq.s32.totalorder %s37, 0
      %p247 = por %p245, %p246
      %p248 = scmp.ne.s32.totalorder %s236, %s237
      %p249 = scmp.eq.s32.totalorder %s38, 1
      %p250 = por %p248, %p249
      %p252 = scmp.ne.s32.totalorder %s237, %s251
      %p253 = scmp.eq.s32.totalorder %s38, 0
      %p254 = por %p252, %p253
      %s256 = sadd.s32 %s255, 1
      %p259 = scmp.eq.s32.totalorder %s32, 1
      %p260 = scmp.ne.s32.totalorder %s255, %s257
      %p261 = scmp.eq.s32.totalorder %s32, 0
      %p262 = por %p260, %p261
      %p263 = scmp.ne.s32.totalorder %s255, %s257
      %p264 = scmp.eq.s32.totalorder %s37, 1
      %p265 = por %p263, %p264
      %p266 = scmp.ne.s32.totalorder %s257, %s258
      %p267 = scmp.eq.s32.totalorder %s37, 0
      %p268 = por %p266, %p267
      %p269 = scmp.ne.s32.totalorder %s257, %s258
      %p270 = scmp.eq.s32.totalorder %s38, 1
      %p271 = por %p269, %p270
      %p273 = scmp.ne.s32.totalorder %s258, %s272
      %p274 = scmp.eq.s32.totalorder %s38, 0
      %p275 = por %p273, %p274
      %s277 = sadd.s32 %s276, 1
      %p280 = scmp.eq.s32.totalorder %s32, 1
      %p281 = scmp.ne.s32.totalorder %s276, %s278
      %p282 = scmp.eq.s32.totalorder %s32, 0
      %p283 = por %p281, %p282
      %p284 = scmp.ne.s32.totalorder %s276, %s278
      %p285 = scmp.eq.s32.totalorder %s37, 1
      %p286 = por %p284, %p285
      %p287 = scmp.ne.s32.totalorder %s278, %s279
      %p288 = scmp.eq.s32.totalorder %s37, 0
      %p289 = por %p287, %p288
      %p290 = scmp.ne.s32.totalorder %s278, %s279
      %p291 = scmp.eq.s32.totalorder %s38, 1
      %p292 = por %p290, %p291
      %p294 = scmp.ne.s32.totalorder %s279, %s293
      %p295 = scmp.eq.s32.totalorder %s38, 0
      %p296 = por %p294, %p295
      %s298 = sadd.s32 %s297, 1
      %p301 = scmp.eq.s32.totalorder %s32, 1
      %p302 = scmp.ne.s32.totalorder %s297, %s299
      %p303 = scmp.eq.s32.totalorder %s32, 0
      %p304 = por %p302, %p303
      %p305 = scmp.ne.s32.totalorder %s297, %s299
      %p306 = scmp.eq.s32.totalorder %s37, 1
      %p307 = por %p305, %p306
      %p308 = scmp.ne.s32.totalorder %s299, %s300
      %p309 = scmp.eq.s32.totalorder %s37, 0
      %p310 = por %p308, %p309
      %p311 = scmp.ne.s32.totalorder %s299, %s300
      %p312 = scmp.eq.s32.totalorder %s38, 1
      %p313 = por %p311, %p312
      %p315 = scmp.ne.s32.totalorder %s300, %s314
      %p316 = scmp.eq.s32.totalorder %s38, 0
      %p317 = por %p315, %p316
      %s318 = ssub.s32 %s39, %s51
      %s319 = ssub.s32 %s40, %s47
      %s320 = sor.u32 %s318, %s319
      %p321 = scmp.eq.s32.totalorder %s320, 0
      %s323 = sadd.s32 %s322, 1
      %s324 = scalar_select %p321, %s322, %s323
      %p327 = pneg %p321
      %p328 = scmp.eq.s32.totalorder %s32, 1
      %p329 = por %p327, %p328
      %p330 = scmp.ne.s32.totalorder %s322, %s325
      %p331 = scmp.eq.s32.totalorder %s32, 0
      %p332 = por %p330, %p331
      %p333 = scmp.ne.s32.totalorder %s322, %s325
      %p334 = scmp.eq.s32.totalorder %s37, 1
      %p335 = por %p333, %p334
      %p336 = scmp.ne.s32.totalorder %s325, %s326
      %p337 = scmp.eq.s32.totalorder %s37, 0
      %p338 = por %p336, %p337
      %p339 = scmp.ne.s32.totalorder %s325, %s326
      %p340 = scmp.eq.s32.totalorder %s38, 1
      %p341 = por %p339, %p340
      %p343 = scmp.ne.s32.totalorder %s326, %s342
      %p344 = scmp.eq.s32.totalorder %s38, 0
      %p345 = por %p343, %p344
      %p346 = scmp.le.s32.totalorder 1, %s32
      %p347 = scmp.lt.s32.totalorder %s32, 3
      %p348 = pnand %p346, %p347
      %p349 = pneg %p348
      // Predicated region
      $region9: #{transformer_forward.11} parent=5 // pred_check
        _
      $region10: #{transformer_forward.11} parent=5 // pred_check_branch
        %351 = sbr.rel (%p348) target = $region12
      $region11: #{transformer_forward.11} parent=5 // pred_region
        %s352 = ssub.s32 %s32, 1
        // Predicated region
        $region13: #{transformer_forward.11} parent=11 // pred_check
          %p353 = pneg %p121
        $region14: #{transformer_forward.11} parent=11 // pred_check_branch
          %355 = sbr.rel (%p353) target = $region16
        $region15: #{transformer_forward.11} parent=11 // pred_region
          %s357 = ssub.s32 256, 256
          %358 = vsyncadd [#allocation6], %s357
          %s359 = sshll.u32 [#allocation7], 4
          %s360 = int_to_ptr.vmem [resolvable:$true] %s359
          %365 = dma.hbm_to_vmem [thread:$0]  %s2, 256, %s360, [#allocation6], 64, 64, 4
        $region16: #{transformer_forward.11} parent=11 // pred_fallthru
          _
        // Predicated region
        $region17: #{transformer_forward.11} parent=11 // pred_check
          %p366 = pneg %p142
        $region18: #{transformer_forward.11} parent=11 // pred_check_branch
          %368 = sbr.rel (%p366) target = $region20
        $region19: #{transformer_forward.11} parent=11 // pred_region
          %s370 = ssub.s32 16, 16
          %371 = vsyncadd [#allocation9], %s370
          %s373 = sshll.u32 [#allocation8], 4
          %s374 = int_to_ptr.vmem [resolvable:$true] %s373
          %376 = dma.hbm_to_vmem [thread:$0]  %s3, 16, %s374, [#allocation9]
        $region20: #{transformer_forward.11} parent=11 // pred_fallthru
          _
        // Predicated region
        $region21: #{transformer_forward.11} parent=11 // pred_check
          %p377 = pneg %p163
        $region22: #{transformer_forward.11} parent=11 // pred_check_branch
          %379 = sbr.rel (%p377) target = $region24
        $region23: #{transformer_forward.11} parent=11 // pred_region
          %s381 = ssub.s32 16, 16
          %382 = vsyncadd [#allocation9], %s381
          %s384 = sshll.u32 [#allocation10], 4
          %s385 = int_to_ptr.vmem [resolvable:$true] %s384
          %387 = dma.hbm_to_vmem [thread:$0]  %s4, 16, %s385, [#allocation9]
        $region24: #{transformer_forward.11} parent=11 // pred_fallthru
          _
        // Predicated region
        $region25: #{transformer_forward.11} parent=11 // pred_check
          %p388 = pneg %p184
        $region26: #{transformer_forward.11} parent=11 // pred_check_branch
          %390 = sbr.rel (%p388) target = $region28
        $region27: #{transformer_forward.11} parent=11 // pred_region
          %s392 = ssub.s32 16, 16
          %393 = vsyncadd [#allocation12], %s392
          %s395 = sshll.u32 [#allocation11], 4
          %s396 = int_to_ptr.vmem [resolvable:$true] %s395
          %398 = dma.hbm_to_vmem [thread:$0]  %s5, 16, %s396, [#allocation12]
        $region28: #{transformer_forward.11} parent=11 // pred_fallthru
          _
        // Predicated region
        $region29: #{transformer_forward.11} parent=11 // pred_check
          %p399 = pneg %p205
        $region30: #{transformer_forward.11} parent=11 // pred_check_branch
          %401 = sbr.rel (%p399) target = $region32
        $region31: #{transformer_forward.11} parent=11 // pred_region
          %s403 = ssub.s32 256, 256
          %404 = vsyncadd [#allocation12], %s403
          %s405 = sshll.u32 [#allocation13], 4
          %s406 = int_to_ptr.vmem [resolvable:$true] %s405
          %411 = dma.hbm_to_vmem [thread:$0]  %s6, 256, %s406, [#allocation12], 64, 64, 4
        $region32: #{transformer_forward.11} parent=11 // pred_fallthru
          _
        // Predicated region
        $region33: #{transformer_forward.11} parent=11 // pred_check
          %p412 = pneg %p226
        $region34: #{transformer_forward.11} parent=11 // pred_check_branch
          %414 = sbr.rel (%p412) target = $region36
        $region35: #{transformer_forward.11} parent=11 // pred_region
          %s416 = ssub.s32 16, 16
          %417 = vsyncadd [#allocation15], %s416
          %s419 = sshll.u32 [#allocation14], 4
          %s420 = int_to_ptr.vmem [resolvable:$true] %s419
          %422 = dma.hbm_to_vmem [thread:$0]  %s7, 16, %s420, [#allocation15]
        $region36: #{transformer_forward.11} parent=11 // pred_fallthru
          _
        // Predicated region
        $region37: #{transformer_forward.11} parent=11 // pred_check
          %p423 = pneg %p247
        $region38: #{transformer_forward.11} parent=11 // pred_check_branch
          %425 = sbr.rel (%p423) target = $region40
        $region39: #{transformer_forward.11} parent=11 // pred_region
          %s427 = ssub.s32 512, 512
          %428 = vsyncadd [#allocation15], %s427
          %s429 = sshll.u32 [#allocation16], 4
          %s430 = int_to_ptr.vmem [resolvable:$true] %s429
          %435 = dma.hbm_to_vmem [thread:$0]  %s8, 512, %s430, [#allocation15], 64, 64, 4
        $region40: #{transformer_forward.11} parent=11 // pred_fallthru
          _
        // Predicated region
        $region41: #{transformer_forward.11} parent=11 // pred_check
          %p436 = pneg %p268
        $region42: #{transformer_forward.11} parent=11 // pred_check_branch
          %438 = sbr.rel (%p436) target = $region44
        $region43: #{transformer_forward.11} parent=11 // pred_region
          %s440 = ssub.s32 16, 16
          %441 = vsyncadd [#allocation18], %s440
          %s443 = sshll.u32 [#allocation17], 4
          %s444 = int_to_ptr.vmem [resolvable:$true] %s443
          %446 = dma.hbm_to_vmem [thread:$0]  %s9, 16, %s444, [#allocation18]
        $region44: #{transformer_forward.11} parent=11 // pred_fallthru
          _
        // Predicated region
        $region45: #{transformer_forward.11} parent=11 // pred_check
          %p447 = pneg %p289
        $region46: #{transformer_forward.11} parent=11 // pred_check_branch
          %449 = sbr.rel (%p447) target = $region48
        $region47: #{transformer_forward.11} parent=11 // pred_region
          %s451 = ssub.s32 16, 16
          %452 = vsyncadd [#allocation18], %s451
          %s454 = sshll.u32 [#allocation19], 4
          %s455 = int_to_ptr.vmem [resolvable:$true] %s454
          %457 = dma.hbm_to_vmem [thread:$0]  %s10, 16, %s455, [#allocation18]
        $region48: #{transformer_forward.11} parent=11 // pred_fallthru
          _
        // Predicated region
        $region49: #{transformer_forward.11} parent=11 // pred_check
          %p458 = pneg %p310
        $region50: #{transformer_forward.11} parent=11 // pred_check_branch
          %460 = sbr.rel (%p458) target = $region52
        $region51: #{transformer_forward.11} parent=11 // pred_region
          %s462 = ssub.s32 16, 16
          %463 = vsyncadd [#allocation21], %s462
          %s465 = sshll.u32 [#allocation20], 4
          %s466 = int_to_ptr.vmem [resolvable:$true] %s465
          %468 = dma.hbm_to_vmem [thread:$0]  %s11, 16, %s466, [#allocation21]
        $region52: #{transformer_forward.11} parent=11 // pred_fallthru
          _
      $region12: #{transformer_forward.11} parent=5 // pred_fallthru
        _
      %p469 = scmp.lt.s32.totalorder %s32, 2
      // Predicated region
      $region53: #{transformer_forward.11} parent=5 // pred_check
        %p470 = pneg %p469
      $region54: #{transformer_forward.11} parent=5 // pred_check_branch
        %472 = sbr.rel (%p470) target = $region56
      $region55: #{transformer_forward.11} parent=5 // pred_region
        // Predicated region
        $region57: #{transformer_forward.11} parent=55 // pred_check
          %p473 = pneg %p66
        $region58: #{transformer_forward.11} parent=55 // pred_check_branch
          %475 = sbr.rel (%p473) target = $region60
        $region59: #{transformer_forward.11} parent=55 // pred_region
          %s476 = sand.u32 %s56, 1
          %s477 = scalar_lea.sflag [#allocation3], %s476
          %s478 = sand.u32 %s56, 1
          %s479 = smul.addr %s478, 8
          %s480 = scalar_lea.vmem [#allocation2], %s479
          %s482 = ssub.s32 128, 128
          %483 = vsyncadd %s477, %s482
          %s484 = sadd.s32 %s40, %s39
          %s485 = smul.addr %s484, 128
          %s486 = scalar_lea.hbm %s0, %s485
          %s488 = sshll.u32 %s480, 4
          %s489 = int_to_ptr.vmem [resolvable:$true] %s488
          %491 = dma.hbm_to_vmem [thread:$0]  %s486, 128, %s489, %s477
        $region60: #{transformer_forward.11} parent=55 // pred_fallthru
          _
        // Predicated region
        $region61: #{transformer_forward.11} parent=55 // pred_check
          %p492 = pneg %p94
        $region62: #{transformer_forward.11} parent=55 // pred_check_branch
          %494 = sbr.rel (%p492) target = $region64
        $region63: #{transformer_forward.11} parent=55 // pred_region
          %s495 = sand.u32 %s32, 1
          %s496 = scalar_lea.sflag [#allocation6], %s495
          %s497 = sand.u32 %s84, 1
          %s498 = smul.addr %s497, 4
          %s499 = scalar_lea.vmem [#allocation5], %s498
          %s501 = ssub.s32 64, 64
          %502 = vsyncadd %s496, %s501
          %s503 = sadd.s32 %s40, %s39
          %s504 = smul.addr %s503, 64
          %s505 = scalar_lea.hbm %s1, %s504
          %s507 = sshll.u32 %s499, 4
          %s508 = int_to_ptr.vmem [resolvable:$true] %s507
          %510 = dma.hbm_to_vmem [thread:$0]  %s505, 64, %s508, %s496
        $region64: #{transformer_forward.11} parent=55 // pred_fallthru
          _
      $region56: #{transformer_forward.11} parent=5 // pred_fallthru
        _
      %p511 = scmp.le.s32.totalorder 1, %s32
      %p512 = scmp.lt.s32.totalorder %s32, 3
      %p513 = pnand %p511, %p512
      %p514 = pneg %p513
      // Predicated region
      $region65: #{transformer_forward.11} parent=5 // pred_check
        _
      $region66: #{transformer_forward.11} parent=5 // pred_check_branch
        %516 = sbr.rel (%p513) target = $region68
      $region67: #{transformer_forward.11} parent=5 // pred_region
        %s517 = ssub.s32 %s32, 1
        %s518 = sand.u32 %s59, 1
        %s519 = scalar_lea.sflag [#allocation3], %s518
        %s520 = sand.u32 %s59, 1
        %s521 = smul.addr %s520, 8
        %s522 = scalar_lea.vmem [#allocation2], %s521
        // Predicated region
        $region69: #{transformer_forward.11} parent=67 // pred_check
          %p523 = pneg %p72
        $region70: #{transformer_forward.11} parent=67 // pred_check_branch
          %525 = sbr.rel (%p523) target = $region72
        $region71: #{transformer_forward.11} parent=67 // pred_region
          %526 = dma.done %s519, 128
        $region72: #{transformer_forward.11} parent=67 // pred_fallthru
          _
        %s527 = sand.u32 %s37, 1
        %s528 = scalar_lea.sflag [#allocation6], %s527
        %s529 = sand.u32 %s87, 1
        %s530 = smul.addr %s529, 4
        %s531 = scalar_lea.vmem [#allocation5], %s530
        // Predicated region
        $region73: #{transformer_forward.11} parent=67 // pred_check
          %p532 = pneg %p100
        $region74: #{transformer_forward.11} parent=67 // pred_check_branch
          %534 = sbr.rel (%p532) target = $region76
        $region75: #{transformer_forward.11} parent=67 // pred_region
          %535 = dma.done %s528, 64
        $region76: #{transformer_forward.11} parent=67 // pred_fallthru
          _
        // Predicated region
        $region77: #{transformer_forward.11} parent=67 // pred_check
          %p536 = pneg %p121
        $region78: #{transformer_forward.11} parent=67 // pred_check_branch
          %538 = sbr.rel (%p536) target = $region80
        $region79: #{transformer_forward.11} parent=67 // pred_region
          %539 = dma.done [#allocation6], 256
        $region80: #{transformer_forward.11} parent=67 // pred_fallthru
          _
        // Predicated region
        $region81: #{transformer_forward.11} parent=67 // pred_check
          %p540 = pneg %p142
        $region82: #{transformer_forward.11} parent=67 // pred_check_branch
          %542 = sbr.rel (%p540) target = $region84
        $region83: #{transformer_forward.11} parent=67 // pred_region
          %543 = dma.done [#allocation9], 16
        $region84: #{transformer_forward.11} parent=67 // pred_fallthru
          _
        // Predicated region
        $region85: #{transformer_forward.11} parent=67 // pred_check
          %p544 = pneg %p163
        $region86: #{transformer_forward.11} parent=67 // pred_check_branch
          %546 = sbr.rel (%p544) target = $region88
        $region87: #{transformer_forward.11} parent=67 // pred_region
          %547 = dma.done [#allocation9], 16
        $region88: #{transformer_forward.11} parent=67 // pred_fallthru
          _
        // Predicated region
        $region89: #{transformer_forward.11} parent=67 // pred_check
          %p548 = pneg %p184
        $region90: #{transformer_forward.11} parent=67 // pred_check_branch
          %550 = sbr.rel (%p548) target = $region92
        $region91: #{transformer_forward.11} parent=67 // pred_region
          %551 = dma.done [#allocation12], 16
        $region92: #{transformer_forward.11} parent=67 // pred_fallthru
          _
        // Predicated region
        $region93: #{transformer_forward.11} parent=67 // pred_check
          %p552 = pneg %p205
        $region94: #{transformer_forward.11} parent=67 // pred_check_branch
          %554 = sbr.rel (%p552) target = $region96
        $region95: #{transformer_forward.11} parent=67 // pred_region
          %555 = dma.done [#allocation12], 256
        $region96: #{transformer_forward.11} parent=67 // pred_fallthru
          _
        // Predicated region
        $region97: #{transformer_forward.11} parent=67 // pred_check
          %p556 = pneg %p226
        $region98: #{transformer_forward.11} parent=67 // pred_check_branch
          %558 = sbr.rel (%p556) target = $region100
        $region99: #{transformer_forward.11} parent=67 // pred_region
          %559 = dma.done [#allocation15], 16
        $region100: #{transformer_forward.11} parent=67 // pred_fallthru
          _
        // Predicated region
        $region101: #{transformer_forward.11} parent=67 // pred_check
          %p560 = pneg %p247
        $region102: #{transformer_forward.11} parent=67 // pred_check_branch
          %562 = sbr.rel (%p560) target = $region104
        $region103: #{transformer_forward.11} parent=67 // pred_region
          %563 = dma.done [#allocation15], 512
        $region104: #{transformer_forward.11} parent=67 // pred_fallthru
          _
        // Predicated region
        $region105: #{transformer_forward.11} parent=67 // pred_check
          %p564 = pneg %p268
        $region106: #{transformer_forward.11} parent=67 // pred_check_branch
          %566 = sbr.rel (%p564) target = $region108
        $region107: #{transformer_forward.11} parent=67 // pred_region
          %567 = dma.done [#allocation18], 16
        $region108: #{transformer_forward.11} parent=67 // pred_fallthru
          _
        // Predicated region
        $region109: #{transformer_forward.11} parent=67 // pred_check
          %p568 = pneg %p289
        $region110: #{transformer_forward.11} parent=67 // pred_check_branch
          %570 = sbr.rel (%p568) target = $region112
        $region111: #{transformer_forward.11} parent=67 // pred_region
          %571 = dma.done [#allocation18], 16
        $region112: #{transformer_forward.11} parent=67 // pred_fallthru
          _
        // Predicated region
        $region113: #{transformer_forward.11} parent=67 // pred_check
          %p572 = pneg %p310
        $region114: #{transformer_forward.11} parent=67 // pred_check_branch
          %574 = sbr.rel (%p572) target = $region116
        $region115: #{transformer_forward.11} parent=67 // pred_region
          %575 = dma.done [#allocation21], 16
        $region116: #{transformer_forward.11} parent=67 // pred_fallthru
          _
        %s576 = sand.u32 %s59, 1
        %s577 = scalar_lea.sflag [#allocation3], %s576
        %s578 = sand.u32 %s59, 1
        %s579 = smul.addr %s578, 8
        %s580 = scalar_lea.vmem [#allocation2], %s579
        %p581 = pneg %p72
        %p582 = pneg %p69
        %s583 = sand.u32 %s37, 1
        %s584 = scalar_lea.sflag [#allocation6], %s583
        %s585 = sand.u32 %s87, 1
        %s586 = smul.addr %s585, 4
        %s587 = scalar_lea.vmem [#allocation5], %s586
        %p588 = pneg %p100
        %p589 = pneg %p97
        %p590 = pneg %p121
        %p591 = pneg %p118
        %p592 = pneg %p142
        %p593 = pneg %p139
        %p594 = pneg %p163
        %p595 = pneg %p160
        %p596 = pneg %p184
        %p597 = pneg %p181
        %p598 = pneg %p205
        %p599 = pneg %p202
        %p600 = pneg %p226
        %p601 = pneg %p223
        %p602 = pneg %p247
        %p603 = pneg %p244
        %p604 = pneg %p268
        %p605 = pneg %p265
        %p606 = pneg %p289
        %p607 = pneg %p286
        %p608 = pneg %p310
        %p609 = pneg %p307
        %p610 = pneg %p338
        %p611 = pneg %p335
        %s612 = sand.u32 %s325, 1
        %s613 = scalar_lea.sflag [#allocation4], %s612
        %s614 = sand.u32 %s325, 1
        %s615 = smul.addr %s614, 8
        %s616 = scalar_lea.vmem [#allocation22], %s615
        %v618 = vld [vmem:[%s531] sm:$0xf]
        %v619 = vld [vmem:[#allocation7] sm:$0xf]
        %v620 = vld [vmem:[#allocation7 + $0x4] sm:$0xf]
        %v621 = vld [vmem:[#allocation7 + $0x8] sm:$0xf]
        %v622 = vld [vmem:[#allocation7 + $0xc] sm:$0xf]
        %v623 = vld [vmem:[#allocation8] sm:$0x1]
        %v625 = vlaneseq
        %v626 = vshrl.u32 %v625, 7
        %v627 = vsub.s32 0, %v626
        %v628 = vrot.slane %v623, %v627
        %v634 = vunpack.c.l.b16 %v619
        %v635 = vunpack.c.l.b16 %v620
        %v636 = vunpack.c.l.b16 %v621
        %v637 = vunpack.c.l.b16 %v622
        %v638 = vpack.c.b16 %v635, %v634
        %v639 = vpack.c.b16 %v637, %v636
        %vm642 = vcmask 261120
        %v644 = vsel %vm642, %v618, 0
        %646 = vmatprep.subr.bf16.mxu0 0
        %647 = vmatpush1.bf16.msra.mxu0 %v638
        %648 = vmatprep.subr.bf16.mxu0 0
        %649 = vmatpush1.bf16.msra.mxu0 %v639
        %650 = vmatprep.subr.bf16.mxu0 0
        %651 = vmatpush1.bf16.msra.mxu0 0
        %652 = vmatprep.subr.bf16.mxu0 0
        %653 = vmatpush1.bf16.msra.mxu0 0
        %654 = vmatprep.subr.bf16.mxu0 0
        %655 = vmatpush1.bf16.msra.mxu0 0
        %656 = vmatprep.subr.bf16.mxu0 0
        %657 = vmatpush1.bf16.msra.mxu0 0
        %658 = vmatprep.subr.bf16.mxu0 0
        %659 = vmatpush1.bf16.msra.mxu0 0
        %660 = vmatprep.subr.bf16.mxu0 0
        %661 = vmatpush1.bf16.msra.mxu0 0
        %662 = vmatprep.subr.bf16.mxu0 0
        %663 = vmatpush1.bf16.msra.mxu0 0
        %664 = vmatprep.subr.bf16.mxu0 0
        %665 = vmatpush1.bf16.msra.mxu0 0
        %666 = vmatprep.subr.bf16.mxu0 0
        %667 = vmatpush1.bf16.msra.mxu0 0
        %668 = vmatprep.subr.bf16.mxu0 0
        %669 = vmatpush1.bf16.msra.mxu0 0
        %670 = vmatprep.subr.bf16.mxu0 0
        %671 = vmatpush1.bf16.msra.mxu0 0
        %672 = vmatprep.subr.bf16.mxu0 0
        %673 = vmatpush1.bf16.msra.mxu0 0
        %674 = vmatprep.subr.bf16.mxu0 0
        %675 = vmatpush1.bf16.msra.mxu0 0
        %676 = vmatprep.subr.bf16.mxu0 0
        %677 = vmatpush1.bf16.msra.mxu0 0
        %678 = vmatprep.mubr.bf16.mxu0 0
        %679 = vmatmul.mubr.bf16.gmra.mrb[0].mxu0 %v644
        %v680 = vpop.f32.mrb[0].mxu0
        %v681 = vadd.f32 %v628, %v680
        %v682 = vpop.f32.mrb[0].mxu0
        %v683 = vpop.f32.mrb[0].mxu0
        %v684 = vpop.f32.mrb[0].mxu0
        %685 = vdwg.mxu0
        %v686 = vld [vmem:[%s522] sm:$0xff]
        %v687 = vadd.f32 %v686, %v681
        %v688 = vld [vmem:[#allocation10] sm:$0x1]
        %v689 = vld [vmem:[#allocation11] sm:$0x1]
        %v690 = vsel %vm642, %v687, 0.0
        %691 = vadd.xlane.f32.xlu0 %v690
        %v692 = vpop.xlane.xlu0 %691
        %v693 = vrcp.pop 32.0
        %v694 = vmul.f32 %v692, %v693
        %v695 = vsub.f32 %v687, %v694
        %v696 = vmul.f32 %v695, %v695
        %v697 = vsel %vm642, %v696, 0.0
        %698 = vadd.xlane.f32.xlu0 %v697
        %v699 = vpop.xlane.xlu0 %698
        %v700 = vmul.f32 %v699, %v693
        %v701 = vadd.f32 %v700, 1e-05
        %v702 = vrsqrt.pop %v701
        %v703 = vmul.f32 %v695, %v702
        %v705 = vlaneseq
        %v706 = vshrl.u32 %v705, 7
        %v707 = vsub.s32 0, %v706
        %v708 = vrot.slane %v688, %v707
        %v710 = vmul.f32 %v703, %v708
        %v712 = vlaneseq
        %v713 = vshrl.u32 %v712, 7
        %v714 = vsub.s32 0, %v713
        %v715 = vrot.slane %v689, %v714
        %v717 = vadd.f32 %v710, %v715
        %v718 = vpack.c.bf16 %v717, %v717
        %v719 = vld [vmem:[#allocation13] sm:$0xf]
        %v720 = vld [vmem:[#allocation13 + $0x4] sm:$0xf]
        %v721 = vld [vmem:[#allocation13 + $0x8] sm:$0xf]
        %v722 = vld [vmem:[#allocation13 + $0xc] sm:$0xf]
        %v723 = vld [vmem:[#allocation14] sm:$0x1]
        %v725 = vlaneseq
        %v726 = vshrl.u32 %v725, 7
        %v727 = vsub.s32 0, %v726
        %v728 = vrot.slane %v723, %v727
        %v734 = vunpack.c.l.b16 %v719
        %v735 = vunpack.c.l.b16 %v720
        %v736 = vunpack.c.l.b16 %v721
        %v737 = vunpack.c.l.b16 %v722
        %v738 = vpack.c.b16 %v735, %v734
        %v739 = vpack.c.b16 %v737, %v736
        %v743 = vsel %vm642, %v718, 0
        %745 = vmatprep.subr.bf16.mxu0 0
        %746 = vmatpush1.bf16.msra.mxu0 %v738
        %747 = vmatprep.subr.bf16.mxu0 0
        %748 = vmatpush1.bf16.msra.mxu0 %v739
        %749 = vmatprep.subr.bf16.mxu0 0
        %750 = vmatpush1.bf16.msra.mxu0 0
        %751 = vmatprep.subr.bf16.mxu0 0
        %752 = vmatpush1.bf16.msra.mxu0 0
        %753 = vmatprep.subr.bf16.mxu0 0
        %754 = vmatpush1.bf16.msra.mxu0 0
        %755 = vmatprep.subr.bf16.mxu0 0
        %756 = vmatpush1.bf16.msra.mxu0 0
        %757 = vmatprep.subr.bf16.mxu0 0
        %758 = vmatpush1.bf16.msra.mxu0 0
        %759 = vmatprep.subr.bf16.mxu0 0
        %760 = vmatpush1.bf16.msra.mxu0 0
        %761 = vmatprep.subr.bf16.mxu0 0
        %762 = vmatpush1.bf16.msra.mxu0 0
        %763 = vmatprep.subr.bf16.mxu0 0
        %764 = vmatpush1.bf16.msra.mxu0 0
        %765 = vmatprep.subr.bf16.mxu0 0
        %766 = vmatpush1.bf16.msra.mxu0 0
        %767 = vmatprep.subr.bf16.mxu0 0
        %768 = vmatpush1.bf16.msra.mxu0 0
        %769 = vmatprep.subr.bf16.mxu0 0
        %770 = vmatpush1.bf16.msra.mxu0 0
        %771 = vmatprep.subr.bf16.mxu0 0
        %772 = vmatpush1.bf16.msra.mxu0 0
        %773 = vmatprep.subr.bf16.mxu0 0
        %774 = vmatpush1.bf16.msra.mxu0 0
        %775 = vmatprep.subr.bf16.mxu0 0
        %776 = vmatpush1.bf16.msra.mxu0 0
        %777 = vmatprep.mubr.bf16.mxu0 0
        %778 = vmatmul.mubr.bf16.gmra.mrb[0].mxu0 %v743
        %v779 = vpop.f32.mrb[0].mxu0
        %v780 = vadd.f32 %v728, %v779
        %v781 = vpop.f32.mrb[0].mxu0
        %v782 = vpop.f32.mrb[0].mxu0
        %v783 = vpop.f32.mrb[0].mxu0
        %784 = vdwg.mxu0
        %v785 = vmul.f32 %v780, 1.702
        %v786 = vxor.u32 %v785, 2147483648
        %v787 = vmul.f32 %v786, 1.442695
        %v788 = vpow.pop %v787
        %v789 = vadd.f32 %v788, 1.0
        %v790 = vrcp.pop %v789
        %v791 = vmul.f32 1.0, %v790
        %v792 = vmul.f32 %v780, %v791
        %v793 = vpack.c.bf16 %v792, %v792
        %v794 = vld [vmem:[#allocation16] sm:$0xf]
        %v795 = vld [vmem:[#allocation16 + $0x4] sm:$0xf]
        %v796 = vld [vmem:[#allocation16 + $0x8] sm:$0xf]
        %v797 = vld [vmem:[#allocation16 + $0xc] sm:$0xf]
        %v798 = vld [vmem:[#allocation16 + $0x10] sm:$0xf]
        %v799 = vld [vmem:[#allocation16 + $0x14] sm:$0xf]
        %v800 = vld [vmem:[#allocation16 + $0x18] sm:$0xf]
        %v801 = vld [vmem:[#allocation16 + $0x1c] sm:$0xf]
        %v802 = vld [vmem:[#allocation17] sm:$0x1]
        %v804 = vlaneseq
        %v805 = vshrl.u32 %v804, 7
        %v806 = vsub.s32 0, %v805
        %v807 = vrot.slane %v802, %v806
        %v817 = vunpack.c.l.b16 %v794
        %v818 = vunpack.c.l.b16 %v795
        %v819 = vunpack.c.l.b16 %v796
        %v820 = vunpack.c.l.b16 %v797
        %v821 = vunpack.c.l.b16 %v798
        %v822 = vunpack.c.l.b16 %v799
        %v823 = vunpack.c.l.b16 %v800
        %v824 = vunpack.c.l.b16 %v801
        %v825 = vpack.c.b16 %v818, %v817
        %v826 = vpack.c.b16 %v820, %v819
        %v827 = vpack.c.b16 %v822, %v821
        %v828 = vpack.c.b16 %v824, %v823
        %vm833 = vcmask 523264
        %v835 = vsel %vm833, %v793, 0
        %837 = vmatprep.subr.bf16.mxu0 0
        %838 = vmatpush1.bf16.msra.mxu0 %v825
        %839 = vmatprep.subr.bf16.mxu0 0
        %840 = vmatpush1.bf16.msra.mxu0 %v826
        %841 = vmatprep.subr.bf16.mxu0 0
        %842 = vmatpush1.bf16.msra.mxu0 %v827
        %843 = vmatprep.subr.bf16.mxu0 0
        %844 = vmatpush1.bf16.msra.mxu0 %v828
        %845 = vmatprep.subr.bf16.mxu0 0
        %846 = vmatpush1.bf16.msra.mxu0 0
        %847 = vmatprep.subr.bf16.mxu0 0
        %848 = vmatpush1.bf16.msra.mxu0 0
        %849 = vmatprep.subr.bf16.mxu0 0
        %850 = vmatpush1.bf16.msra.mxu0 0
        %851 = vmatprep.subr.bf16.mxu0 0
        %852 = vmatpush1.bf16.msra.mxu0 0
        %853 = vmatprep.subr.bf16.mxu0 0
        %854 = vmatpush1.bf16.msra.mxu0 0
        %855 = vmatprep.subr.bf16.mxu0 0
        %856 = vmatpush1.bf16.msra.mxu0 0
        %857 = vmatprep.subr.bf16.mxu0 0
        %858 = vmatpush1.bf16.msra.mxu0 0
        %859 = vmatprep.subr.bf16.mxu0 0
        %860 = vmatpush1.bf16.msra.mxu0 0
        %861 = vmatprep.subr.bf16.mxu0 0
        %862 = vmatpush1.bf16.msra.mxu0 0
        %863 = vmatprep.subr.bf16.mxu0 0
        %864 = vmatpush1.bf16.msra.mxu0 0
        %865 = vmatprep.subr.bf16.mxu0 0
        %866 = vmatpush1.bf16.msra.mxu0 0
        %867 = vmatprep.subr.bf16.mxu0 0
        %868 = vmatpush1.bf16.msra.mxu0 0
        %869 = vmatprep.mubr.bf16.mxu0 0
        %870 = vmatmul.mubr.bf16.gmra.mrb[0].mxu0 %v835
        %v871 = vpop.f32.mrb[0].mxu0
        %v872 = vadd.f32 %v807, %v871
        %v873 = vpop.f32.mrb[0].mxu0
        %v874 = vpop.f32.mrb[0].mxu0
        %v875 = vpop.f32.mrb[0].mxu0
        %876 = vdwg.mxu0
        %v877 = vadd.f32 %v687, %v872
        %v878 = vld [vmem:[#allocation19] sm:$0x1]
        %v879 = vld [vmem:[#allocation20] sm:$0x1]
        %v880 = vsel %vm642, %v877, 0.0
        %881 = vadd.xlane.f32.xlu0 %v880
        %v882 = vpop.xlane.xlu0 %881
        %v883 = vmul.f32 %v882, %v693
        %v884 = vsub.f32 %v877, %v883
        %v885 = vmul.f32 %v884, %v884
        %v886 = vsel %vm642, %v885, 0.0
        %887 = vadd.xlane.f32.xlu0 %v886
        %v888 = vpop.xlane.xlu0 %887
        %v889 = vmul.f32 %v888, %v693
        %v890 = vadd.f32 %v889, 1e-05
        %v891 = vrsqrt.pop %v890
        %v892 = vmul.f32 %v884, %v891
        %v894 = vlaneseq
        %v895 = vshrl.u32 %v894, 7
        %v896 = vsub.s32 0, %v895
        %v897 = vrot.slane %v878, %v896
        %v899 = vmul.f32 %v892, %v897
        %v901 = vlaneseq
        %v902 = vshrl.u32 %v901, 7
        %v903 = vsub.s32 0, %v902
        %v904 = vrot.slane %v879, %v903
        %v906 = vadd.f32 %v899, %v904
        %907 = vst.msk [vmem:[%s616] sm:$0xff] %vm642, %v906
        %s908 = sand.u32 %s325, 1
        %s909 = scalar_lea.sflag [#allocation4], %s908
        %s910 = sand.u32 %s325, 1
        %s911 = smul.addr %s910, 8
        %s912 = scalar_lea.vmem [#allocation22], %s911
        // Predicated region
        $region117: #{transformer_forward.11} parent=67 // pred_check
          %p913 = pneg %p335
        $region118: #{transformer_forward.11} parent=67 // pred_check_branch
          %915 = sbr.rel (%p913) target = $region120
        $region119: #{transformer_forward.11} parent=67 // pred_region
          %s917 = ssub.s32 128, 128
          %918 = vsyncadd %s909, %s917
          %s919 = sadd.s32 %s42, %s41
          %s920 = smul.addr %s919, 128
          %s921 = scalar_lea.hbm %s12, %s920
          %s923 = sshll.u32 %s912, 4
          %s924 = int_to_ptr.vmem [resolvable:$true] %s923
          %926 = dma.vmem_to_hbm [thread:$0]  %s924, 128, %s921, %s909
        $region120: #{transformer_forward.11} parent=67 // pred_fallthru
          _
      $region68: #{transformer_forward.11} parent=5 // pred_fallthru
        _
      %p927 = scmp.le.s32.totalorder 2, %s32
      // Predicated region
      $region121: #{transformer_forward.11} parent=5 // pred_check
        %p928 = pneg %p927
      $region122: #{transformer_forward.11} parent=5 // pred_check_branch
        %930 = sbr.rel (%p928) target = $region124
      $region123: #{transformer_forward.11} parent=5 // pred_region
        %s931 = ssub.s32 %s32, 2
        // Predicated region
        $region125: #{transformer_forward.11} parent=123 // pred_check
          %p932 = pneg %p341
        $region126: #{transformer_forward.11} parent=123 // pred_check_branch
          %934 = sbr.rel (%p932) target = $region128
        $region127: #{transformer_forward.11} parent=123 // pred_region
          %s935 = sand.u32 %s326, 1
          %s936 = scalar_lea.sflag [#allocation4], %s935
          %s937 = sand.u32 %s326, 1
          %s938 = smul.addr %s937, 8
          %s939 = scalar_lea.vmem [#allocation22], %s938
          %940 = dma.done %s936, 128
        $region128: #{transformer_forward.11} parent=123 // pred_fallthru
          _
      $region124: #{transformer_forward.11} parent=5 // pred_fallthru
        _
    $region6: #{transformer_forward.11} parent=1 // loop_footer
      %s36 = sadd.s32 1, %s32
    $region7: #{transformer_forward.11} parent=1 // loop_footer_branch
      %31 = sbr.rel target = $region3
    $region8: #{transformer_forward.11} parent=1 // loop_exit
      _
    %941 = vsyncpa [#allocation3], 1
    %s942 = scalar_lea.sflag [#allocation3], 1
    %943 = vsyncpa %s942, 1
    %944 = vsyncpa [#allocation6], 1
    %s945 = scalar_lea.sflag [#allocation6], 1
    %946 = vsyncpa %s945, 1
    %947 = vsyncpa [#allocation9], 1
    %948 = vsyncpa [#allocation12], 1
    %949 = vsyncpa [#allocation15], 1
    %950 = vsyncpa [#allocation18], 1
    %951 = vsyncpa [#allocation21], 1
    %952 = vsyncpa [#allocation4], 1
    %s953 = scalar_lea.sflag [#allocation4], 1
    %954 = vsyncpa %s953, 1

// kernel: transformer_forward.7
$region0: #{transformer_forward.7}
  #allocation0 [shape = 'u32[]', space=smem, size = 0x4, offset = 0x4, fixed_abs, tag = 'smem constant byte address 0x4 - core index']
  #allocation1 [shape = 'u32[144,128]{1,0:T(1,128)}', space=vmem, size = 0x12000, scoped, tag = 'internal scratch']
  #allocation2 [shape = 'f32[4,8,1]{2,1,0:T(8,128)}', space=vmem, size = 0x4000, scoped, tag = 'scratch operand']
  #allocation3 [shape = 'f32[4,8,1]{2,1,0:T(8,128)}', space=vmem, size = 0x4000, scoped, tag = 'scratch operand']
  #allocation4 [shape = 'f32[4,8,8]{2,1,0:T(8,128)}', space=vmem, size = 0x4000, scoped, tag = 'scratch operand']
  %s0 = inlined_call_operand.hbm [shape: bf16[2,4,8,8], index: 0, kind: input, shape index: {}]
  %s1 = inlined_call_operand.hbm [shape: bf16[2,4,8,8], index: 1, kind: input, shape index: {}]
  %s2 = inlined_call_operand.hbm [shape: bf16[2,4,8,8], index: 2, kind: input, shape index: {}]
  %s3 = inlined_call_operand.hbm [shape: bf16[2,8,32], index: 3, kind: output, shape index: {}]
  %s4 = sld [smem:[#allocation0]]
  $region65: #{transformer_forward.7} parent=0
    _
  %s6 = ssub.s32 1, %s4
  %s7 = scalar_select 0, %s6, %s4
  $region1: #{transformer_forward.7} parent=0
    #allocation5 [shape = 'u8[16384]{0}', space=vmem, size = 0x4000, scoped, tag = 'input window, operand 0']
    #allocation6 [shape = 's32[2]{0}', space=sflag, size = 0x8, scoped, tag = 'scoped memory for transformer_forward.7']
    #allocation7 [shape = 's32[2]{0}', space=sflag, size = 0x8, scoped, tag = 'scoped memory for transformer_forward.7']
    #allocation8 [shape = 'u8[16384]{0}', space=vmem, size = 0x4000, scoped, tag = 'input window, operand 1']
    #allocation9 [shape = 's32[2]{0}', space=sflag, size = 0x8, scoped, tag = 'scoped memory for transformer_forward.7']
    #allocation10 [shape = 'u8[16384]{0}', space=vmem, size = 0x4000, scoped, tag = 'input window, operand 2']
    #allocation11 [shape = 'u8[4096]{0}', space=vmem, size = 0x1000, scoped, tag = 'output window, operand 0']
    %8 = vsyncpa [#allocation6], 0
    %s9 = scalar_lea.sflag [#allocation6], 1
    %10 = vsyncpa %s9, 0
    %11 = vsyncpa [#allocation9], 0
    %s12 = scalar_lea.sflag [#allocation9], 1
    %13 = vsyncpa %s12, 0
    %14 = vsyncpa [#allocation7], 0
    %s15 = scalar_lea.sflag [#allocation7], 1
    %16 = vsyncpa %s15, 0
    loop: start=0, step=1, limit=4
    $region2: #{transformer_forward.7} parent=1 // loop_pre_header
      _
    $region3: #{transformer_forward.7} parent=1 // loop_header
      %s18 = sphi 0, %s22
      %p19 = scmp.ge.s32.totalorder %s18, 4
      %s25 = sphi 0, %s44
      %s26 = sphi 0, %s40
      %s27 = sphi 0, %s36
      %s28 = sphi 0, %s25
      %s29 = sphi 0, %s26
      %s30 = sphi 0, %s27
      %s31 = sphi 0, %s28
      %s32 = sphi 0, %s29
      %s33 = sphi 0, %s30
      %s49 = sphi 0, %s51
      %s52 = sphi 0, %s49
      %s53 = sphi 0, %s52
      %s69 = sphi 0, %s53
      %s77 = sphi 0, %s79
      %s80 = sphi 0, %s77
      %s81 = sphi 0, %s80
      %s97 = sphi 0, %s81
      %s105 = sphi 0, %s107
      %s108 = sphi 0, %s105
      %s109 = sphi 0, %s108
      %s125 = sphi 0, %s109
      %s133 = sphi 0, %s135
      %s136 = sphi 0, %s133
      %s137 = sphi 0, %s136
      %s153 = sphi 0, %s137
    $region4: #{transformer_forward.7} parent=1 // loop_header_branch
      %21 = sbr.rel (%p19) target = $region8
    $region5: #{transformer_forward.7} parent=1 // loop_body
      %s23 = ssub.s32 %s18, 1
      %s24 = ssub.s32 %s18, 2
      %s34 = sadd.s32 1, %s27
      %p35 = scmp.ge.s32.totalorder %s34, 1
      %s36 = scalar_select %p35, 0, %s34
      %s37 = sadd.s32 1, %s26
      %s38 = scalar_select %p35, %s37, %s26
      %p39 = scmp.ge.s32.totalorder %s38, 1
      %s40 = scalar_select %p39, 0, %s38
      %s41 = sadd.s32 1, %s25
      %s42 = scalar_select %p39, %s41, %s25
      %p43 = scmp.ge.s32.totalorder %s42, 2
      %s44 = scalar_select %p43, 0, %s42
      %s45 = ssub.s32 %s25, %s44
      %s46 = ssub.s32 %s26, %s40
      %s47 = sor.u32 %s45, %s46
      %p48 = scmp.eq.s32.totalorder %s47, 0
      %s50 = sadd.s32 %s49, 1
      %s51 = scalar_select %p48, %s49, %s50
      %p54 = pneg %p48
      %p55 = scmp.eq.s32.totalorder %s18, 1
      %p56 = por %p54, %p55
      %p57 = scmp.ne.s32.totalorder %s49, %s52
      %p58 = scmp.eq.s32.totalorder %s18, 0
      %p59 = por %p57, %p58
      %p60 = scmp.ne.s32.totalorder %s49, %s52
      %p61 = scmp.eq.s32.totalorder %s23, 1
      %p62 = por %p60, %p61
      %p63 = scmp.ne.s32.totalorder %s52, %s53
      %p64 = scmp.eq.s32.totalorder %s23, 0
      %p65 = por %p63, %p64
      %p66 = scmp.ne.s32.totalorder %s52, %s53
      %p67 = scmp.eq.s32.totalorder %s24, 1
      %p68 = por %p66, %p67
      %p70 = scmp.ne.s32.totalorder %s53, %s69
      %p71 = scmp.eq.s32.totalorder %s24, 0
      %p72 = por %p70, %p71
      %s73 = ssub.s32 %s25, %s44
      %s74 = ssub.s32 %s27, %s36
      %s75 = sor.u32 %s73, %s74
      %p76 = scmp.eq.s32.totalorder %s75, 0
      %s78 = sadd.s32 %s77, 1
      %s79 = scalar_select %p76, %s77, %s78
      %p82 = pneg %p76
      %p83 = scmp.eq.s32.totalorder %s18, 1
      %p84 = por %p82, %p83
      %p85 = scmp.ne.s32.totalorder %s77, %s80
      %p86 = scmp.eq.s32.totalorder %s18, 0
      %p87 = por %p85, %p86
      %p88 = scmp.ne.s32.totalorder %s77, %s80
      %p89 = scmp.eq.s32.totalorder %s23, 1
      %p90 = por %p88, %p89
      %p91 = scmp.ne.s32.totalorder %s80, %s81
      %p92 = scmp.eq.s32.totalorder %s23, 0
      %p93 = por %p91, %p92
      %p94 = scmp.ne.s32.totalorder %s80, %s81
      %p95 = scmp.eq.s32.totalorder %s24, 1
      %p96 = por %p94, %p95
      %p98 = scmp.ne.s32.totalorder %s81, %s97
      %p99 = scmp.eq.s32.totalorder %s24, 0
      %p100 = por %p98, %p99
      %s101 = ssub.s32 %s25, %s44
      %s102 = ssub.s32 %s27, %s36
      %s103 = sor.u32 %s101, %s102
      %p104 = scmp.eq.s32.totalorder %s103, 0
      %s106 = sadd.s32 %s105, 1
      %s107 = scalar_select %p104, %s105, %s106
      %p110 = pneg %p104
      %p111 = scmp.eq.s32.totalorder %s18, 1
      %p112 = por %p110, %p111
      %p113 = scmp.ne.s32.totalorder %s105, %s108
      %p114 = scmp.eq.s32.totalorder %s18, 0
      %p115 = por %p113, %p114
      %p116 = scmp.ne.s32.totalorder %s105, %s108
      %p117 = scmp.eq.s32.totalorder %s23, 1
      %p118 = por %p116, %p117
      %p119 = scmp.ne.s32.totalorder %s108, %s109
      %p120 = scmp.eq.s32.totalorder %s23, 0
      %p121 = por %p119, %p120
      %p122 = scmp.ne.s32.totalorder %s108, %s109
      %p123 = scmp.eq.s32.totalorder %s24, 1
      %p124 = por %p122, %p123
      %p126 = scmp.ne.s32.totalorder %s109, %s125
      %p127 = scmp.eq.s32.totalorder %s24, 0
      %p128 = por %p126, %p127
      %s129 = ssub.s32 %s25, %s44
      %s130 = ssub.s32 %s26, %s40
      %s131 = sor.u32 %s129, %s130
      %p132 = scmp.eq.s32.totalorder %s131, 0
      %s134 = sadd.s32 %s133, 1
      %s135 = scalar_select %p132, %s133, %s134
      %p138 = pneg %p132
      %p139 = scmp.eq.s32.totalorder %s18, 1
      %p140 = por %p138, %p139
      %p141 = scmp.ne.s32.totalorder %s133, %s136
      %p142 = scmp.eq.s32.totalorder %s18, 0
      %p143 = por %p141, %p142
      %p144 = scmp.ne.s32.totalorder %s133, %s136
      %p145 = scmp.eq.s32.totalorder %s23, 1
      %p146 = por %p144, %p145
      %p147 = scmp.ne.s32.totalorder %s136, %s137
      %p148 = scmp.eq.s32.totalorder %s23, 0
      %p149 = por %p147, %p148
      %p150 = scmp.ne.s32.totalorder %s136, %s137
      %p151 = scmp.eq.s32.totalorder %s24, 1
      %p152 = por %p150, %p151
      %p154 = scmp.ne.s32.totalorder %s137, %s153
      %p155 = scmp.eq.s32.totalorder %s24, 0
      %p156 = por %p154, %p155
      %p157 = scmp.le.s32.totalorder 1, %s18
      %p158 = scmp.lt.s32.totalorder %s18, 3
      %p159 = pnand %p157, %p158
      %p160 = pneg %p159
      // Predicated region
      $region9: #{transformer_forward.7} parent=5 // pred_check
        _
      $region10: #{transformer_forward.7} parent=5 // pred_check_branch
        %162 = sbr.rel (%p159) target = $region12
      $region11: #{transformer_forward.7} parent=5 // pred_region
        %s163 = ssub.s32 %s18, 1
      $region12: #{transformer_forward.7} parent=5 // pred_fallthru
        _
      %p164 = scmp.lt.s32.totalorder %s18, 2
      // Predicated region
      $region13: #{transformer_forward.7} parent=5 // pred_check
        %p165 = pneg %p164
      $region14: #{transformer_forward.7} parent=5 // pred_check_branch
        %167 = sbr.rel (%p165) target = $region16
      $region15: #{transformer_forward.7} parent=5 // pred_region
        // Predicated region
        $region17: #{transformer_forward.7} parent=15 // pred_check
          %p168 = pneg %p59
        $region18: #{transformer_forward.7} parent=15 // pred_check_branch
          %170 = sbr.rel (%p168) target = $region20
        $region19: #{transformer_forward.7} parent=15 // pred_region
          %s171 = sand.u32 %s49, 1
          %s172 = scalar_lea.sflag [#allocation6], %s171
          %s173 = sand.u32 %s49, 1
          %s174 = smul.addr %s173, 16
          %s175 = scalar_lea.vmem [#allocation5], %s174
          %s177 = ssub.s32 256, 256
          %178 = vsyncadd %s172, %s177
          %s179 = smul.addr %s25, 4
          %s180 = sadd.s32 %s26, %s179
          %s181 = smul.addr %s180, 64
          %s182 = scalar_lea.hbm %s0, %s181
          %s183 = sshll.u32 %s175, 4
          %s184 = int_to_ptr.vmem [resolvable:$true] %s183
          %189 = dma.hbm_to_vmem [thread:$0]  %s182, 256, %s184, %s172, 64, 64, 4
        $region20: #{transformer_forward.7} parent=15 // pred_fallthru
          _
        // Predicated region
        $region21: #{transformer_forward.7} parent=15 // pred_check
          %p190 = pneg %p87
        $region22: #{transformer_forward.7} parent=15 // pred_check_branch
          %192 = sbr.rel (%p190) target = $region24
        $region23: #{transformer_forward.7} parent=15 // pred_region
          %s193 = sand.u32 %s18, 1
          %s194 = scalar_lea.sflag [#allocation9], %s193
          %s195 = sand.u32 %s77, 1
          %s196 = smul.addr %s195, 16
          %s197 = scalar_lea.vmem [#allocation8], %s196
          %s199 = ssub.s32 256, 256
          %200 = vsyncadd %s194, %s199
          %s201 = smul.addr %s25, 4
          %s202 = sadd.s32 %s27, %s201
          %s203 = smul.addr %s202, 64
          %s204 = scalar_lea.hbm %s1, %s203
          %s205 = sshll.u32 %s197, 4
          %s206 = int_to_ptr.vmem [resolvable:$true] %s205
          %211 = dma.hbm_to_vmem [thread:$0]  %s204, 256, %s206, %s194, 64, 64, 4
        $region24: #{transformer_forward.7} parent=15 // pred_fallthru
          _
        // Predicated region
        $region25: #{transformer_forward.7} parent=15 // pred_check
          %p212 = pneg %p115
        $region26: #{transformer_forward.7} parent=15 // pred_check_branch
          %214 = sbr.rel (%p212) target = $region28
        $region27: #{transformer_forward.7} parent=15 // pred_region
          %s215 = sand.u32 %s18, 1
          %s216 = scalar_lea.sflag [#allocation9], %s215
          %s217 = sand.u32 %s105, 1
          %s218 = smul.addr %s217, 16
          %s219 = scalar_lea.vmem [#allocation10], %s218
          %s221 = ssub.s32 256, 256
          %222 = vsyncadd %s216, %s221
          %s223 = smul.addr %s25, 4
          %s224 = sadd.s32 %s27, %s223
          %s225 = smul.addr %s224, 64
          %s226 = scalar_lea.hbm %s2, %s225
          %s227 = sshll.u32 %s219, 4
          %s228 = int_to_ptr.vmem [resolvable:$true] %s227
          %233 = dma.hbm_to_vmem [thread:$0]  %s226, 256, %s228, %s216, 64, 64, 4
        $region28: #{transformer_forward.7} parent=15 // pred_fallthru
          _
      $region16: #{transformer_forward.7} parent=5 // pred_fallthru
        _
      %p234 = scmp.le.s32.totalorder 1, %s18
      %p235 = scmp.lt.s32.totalorder %s18, 3
      %p236 = pnand %p234, %p235
      %p237 = pneg %p236
      // Predicated region
      $region29: #{transformer_forward.7} parent=5 // pred_check
        _
      $region30: #{transformer_forward.7} parent=5 // pred_check_branch
        %239 = sbr.rel (%p236) target = $region32
      $region31: #{transformer_forward.7} parent=5 // pred_region
        %s240 = ssub.s32 %s18, 1
        %s241 = sand.u32 %s52, 1
        %s242 = scalar_lea.sflag [#allocation6], %s241
        %s243 = sand.u32 %s52, 1
        %s244 = smul.addr %s243, 16
        %s245 = scalar_lea.vmem [#allocation5], %s244
        // Predicated region
        $region33: #{transformer_forward.7} parent=31 // pred_check
          %p246 = pneg %p65
        $region34: #{transformer_forward.7} parent=31 // pred_check_branch
          %248 = sbr.rel (%p246) target = $region36
        $region35: #{transformer_forward.7} parent=31 // pred_region
          %249 = dma.done %s242, 256
        $region36: #{transformer_forward.7} parent=31 // pred_fallthru
          _
        %s250 = sand.u32 %s23, 1
        %s251 = scalar_lea.sflag [#allocation9], %s250
        %s252 = sand.u32 %s80, 1
        %s253 = smul.addr %s252, 16
        %s254 = scalar_lea.vmem [#allocation8], %s253
        // Predicated region
        $region37: #{transformer_forward.7} parent=31 // pred_check
          %p255 = pneg %p93
        $region38: #{transformer_forward.7} parent=31 // pred_check_branch
          %257 = sbr.rel (%p255) target = $region40
        $region39: #{transformer_forward.7} parent=31 // pred_region
          %258 = dma.done %s251, 256
        $region40: #{transformer_forward.7} parent=31 // pred_fallthru
          _
        %s259 = sand.u32 %s23, 1
        %s260 = scalar_lea.sflag [#allocation9], %s259
        %s261 = sand.u32 %s108, 1
        %s262 = smul.addr %s261, 16
        %s263 = scalar_lea.vmem [#allocation10], %s262
        // Predicated region
        $region41: #{transformer_forward.7} parent=31 // pred_check
          %p264 = pneg %p121
        $region42: #{transformer_forward.7} parent=31 // pred_check_branch
          %266 = sbr.rel (%p264) target = $region44
        $region43: #{transformer_forward.7} parent=31 // pred_region
          %267 = dma.done %s260, 256
        $region44: #{transformer_forward.7} parent=31 // pred_fallthru
          _
        %s268 = sand.u32 %s52, 1
        %s269 = scalar_lea.sflag [#allocation6], %s268
        %s270 = sand.u32 %s52, 1
        %s271 = smul.addr %s270, 16
        %s272 = scalar_lea.vmem [#allocation5], %s271
        %p273 = pneg %p65
        %p274 = pneg %p62
        %s275 = sand.u32 %s23, 1
        %s276 = scalar_lea.sflag [#allocation9], %s275
        %s277 = sand.u32 %s80, 1
        %s278 = smul.addr %s277, 16
        %s279 = scalar_lea.vmem [#allocation8], %s278
        %p280 = pneg %p93
        %p281 = pneg %p90
        %s282 = sand.u32 %s23, 1
        %s283 = scalar_lea.sflag [#allocation9], %s282
        %s284 = sand.u32 %s108, 1
        %s285 = smul.addr %s284, 16
        %s286 = scalar_lea.vmem [#allocation10], %s285
        %p287 = pneg %p121
        %p288 = pneg %p118
        %p289 = pneg %p149
        %p290 = pneg %p146
        %s291 = sand.u32 %s136, 1
        %s292 = scalar_lea.sflag [#allocation7], %s291
        %s293 = sand.u32 %s136, 1
        %s294 = smul.addr %s293, 4
        %s295 = scalar_lea.vmem [#allocation11], %s294
        %p297 = scmp.eq.s32.totalorder %s30, 0
        // Predicated region
        $region45: #{transformer_forward.7} parent=31 // pred_check
          %p298 = pneg %p297
        $region46: #{transformer_forward.7} parent=31 // pred_check_branch
          %300 = sbr.rel (%p298) target = $region48
        $region47: #{transformer_forward.7} parent=31 // pred_region
          %vm301 = vcmask 7168
          %302 = vst.msk [vmem:[#allocation2] sm:$0xff] %vm301, -inf
          %303 = vst.msk [vmem:[#allocation2 + $0x8] sm:$0xff] %vm301, -inf
          %304 = vst.msk [vmem:[#allocation2 + $0x10] sm:$0xff] %vm301, -inf
          %305 = vst.msk [vmem:[#allocation2 + $0x18] sm:$0xff] %vm301, -inf
          %306 = vst.msk [vmem:[#allocation3] sm:$0xff] %vm301, 0.0
          %307 = vst.msk [vmem:[#allocation3 + $0x8] sm:$0xff] %vm301, 0.0
          %308 = vst.msk [vmem:[#allocation3 + $0x10] sm:$0xff] %vm301, 0.0
          %309 = vst.msk [vmem:[#allocation3 + $0x18] sm:$0xff] %vm301, 0.0
          %vm310 = vcmask 64512
          %311 = vst.msk [vmem:[#allocation4] sm:$0xff] %vm310, 0.0
          %312 = vst.msk [vmem:[#allocation4 + $0x8] sm:$0xff] %vm310, 0.0
          %313 = vst.msk [vmem:[#allocation4 + $0x10] sm:$0xff] %vm310, 0.0
          %314 = vst.msk [vmem:[#allocation4 + $0x18] sm:$0xff] %vm310, 0.0
        $region48: #{transformer_forward.7} parent=31 // pred_fallthru
          _
        %v315 = vld [vmem:[%s245] sm:$0xf]
        %v316 = vld [vmem:[%s245 + $0x4] sm:$0xf]
        %v317 = vld [vmem:[%s245 + $0x8] sm:$0xf]
        %v318 = vld [vmem:[%s245 + $0xc] sm:$0xf]
        %v319 = vld [vmem:[%s254] sm:$0xf]
        %v320 = vld [vmem:[%s254 + $0x4] sm:$0xf]
        %v321 = vld [vmem:[%s254 + $0x8] sm:$0xf]
        %v322 = vld [vmem:[%s254 + $0xc] sm:$0xf]
        %v323 = vld [vmem:[%s263] sm:$0xf]
        %v324 = vld [vmem:[%s263 + $0x4] sm:$0xf]
        %v325 = vld [vmem:[%s263 + $0x8] sm:$0xf]
        %v326 = vld [vmem:[%s263 + $0xc] sm:$0xf]
        %vm327 = vcmask 64512
        %v329 = vsel %vm327, %v315, 0
        %v332 = vsel %vm327, %v319, 0
        %334 = vmatprep.subr.bf16.mxu0 0
        %335 = vmatpush1.bf16.xpose.msra.mxu0 %v332
        %336 = vmatprep.subr.bf16.mxu0 0
        %337 = vmatpush1.bf16.xpose.msra.mxu0 0
        %338 = vmatprep.subr.bf16.mxu0 0
        %339 = vmatpush1.bf16.xpose.msra.mxu0 0
        %340 = vmatprep.subr.bf16.mxu0 0
        %341 = vmatpush1.bf16.xpose.msra.mxu0 0
        %342 = vmatprep.subr.bf16.mxu0 0
        %343 = vmatpush1.bf16.xpose.msra.mxu0 0
        %344 = vmatprep.subr.bf16.mxu0 0
        %345 = vmatpush1.bf16.xpose.msra.mxu0 0
        %346 = vmatprep.subr.bf16.mxu0 0
        %347 = vmatpush1.bf16.xpose.msra.mxu0 0
        %348 = vmatprep.subr.bf16.mxu0 0
        %349 = vmatpush1.bf16.xpose.msra.mxu0 0
        %350 = vmatprep.subr.bf16.mxu0 0
        %351 = vmatpush1.bf16.xpose.msra.mxu0 0
        %352 = vmatprep.subr.bf16.mxu0 0
        %353 = vmatpush1.bf16.xpose.msra.mxu0 0
        %354 = vmatprep.subr.bf16.mxu0 0
        %355 = vmatpush1.bf16.xpose.msra.mxu0 0
        %356 = vmatprep.subr.bf16.mxu0 0
        %357 = vmatpush1.bf16.xpose.msra.mxu0 0
        %358 = vmatprep.subr.bf16.mxu0 0
        %359 = vmatpush1.bf16.xpose.msra.mxu0 0
        %360 = vmatprep.subr.bf16.mxu0 0
        %361 = vmatpush1.bf16.xpose.msra.mxu0 0
        %362 = vmatprep.subr.bf16.mxu0 0
        %363 = vmatpush1.bf16.xpose.msra.mxu0 0
        %364 = vmatprep.subr.bf16.mxu0 0
        %365 = vmatpush1.bf16.xpose.msra.mxu0 0
        %366 = vmatprep.mubr.bf16.mxu0 0
        %367 = vmatmul.mubr.bf16.gmra.mrb[0].mxu0 %v329
        %v368 = vpop.f32.mrb[0].mxu0
        %v369 = vadd.f32 0.0, %v368
        %v370 = vpop.f32.mrb[0].mxu0
        %v371 = vpop.f32.mrb[0].mxu0
        %v372 = vpop.f32.mrb[0].mxu0
        %373 = vdwg.mxu0
        %v375 = vsel %vm327, %v316, 0
        %v378 = vsel %vm327, %v320, 0
        %380 = vmatprep.subr.bf16.mxu0 0
        %381 = vmatpush1.bf16.xpose.msra.mxu0 %v378
        %382 = vmatprep.subr.bf16.mxu0 0
        %383 = vmatpush1.bf16.xpose.msra.mxu0 0
        %384 = vmatprep.subr.bf16.mxu0 0
        %385 = vmatpush1.bf16.xpose.msra.mxu0 0
        %386 = vmatprep.subr.bf16.mxu0 0
        %387 = vmatpush1.bf16.xpose.msra.mxu0 0
        %388 = vmatprep.subr.bf16.mxu0 0
        %389 = vmatpush1.bf16.xpose.msra.mxu0 0
        %390 = vmatprep.subr.bf16.mxu0 0
        %391 = vmatpush1.bf16.xpose.msra.mxu0 0
        %392 = vmatprep.subr.bf16.mxu0 0
        %393 = vmatpush1.bf16.xpose.msra.mxu0 0
        %394 = vmatprep.subr.bf16.mxu0 0
        %395 = vmatpush1.bf16.xpose.msra.mxu0 0
        %396 = vmatprep.subr.bf16.mxu0 0
        %397 = vmatpush1.bf16.xpose.msra.mxu0 0
        %398 = vmatprep.subr.bf16.mxu0 0
        %399 = vmatpush1.bf16.xpose.msra.mxu0 0
        %400 = vmatprep.subr.bf16.mxu0 0
        %401 = vmatpush1.bf16.xpose.msra.mxu0 0
        %402 = vmatprep.subr.bf16.mxu0 0
        %403 = vmatpush1.bf16.xpose.msra.mxu0 0
        %404 = vmatprep.subr.bf16.mxu0 0
        %405 = vmatpush1.bf16.xpose.msra.mxu0 0
        %406 = vmatprep.subr.bf16.mxu0 0
        %407 = vmatpush1.bf16.xpose.msra.mxu0 0
        %408 = vmatprep.subr.bf16.mxu0 0
        %409 = vmatpush1.bf16.xpose.msra.mxu0 0
        %410 = vmatprep.subr.bf16.mxu0 0
        %411 = vmatpush1.bf16.xpose.msra.mxu0 0
        %412 = vmatprep.mubr.bf16.mxu0 0
        %413 = vmatmul.mubr.bf16.gmra.mrb[0].mxu0 %v375
        %v414 = vpop.f32.mrb[0].mxu0
        %v415 = vadd.f32 0.0, %v414
        %v416 = vpop.f32.mrb[0].mxu0
        %v417 = vpop.f32.mrb[0].mxu0
        %v418 = vpop.f32.mrb[0].mxu0
        %419 = vdwg.mxu0
        %v421 = vsel %vm327, %v317, 0
        %v424 = vsel %vm327, %v321, 0
        %426 = vmatprep.subr.bf16.mxu0 0
        %427 = vmatpush1.bf16.xpose.msra.mxu0 %v424
        %428 = vmatprep.subr.bf16.mxu0 0
        %429 = vmatpush1.bf16.xpose.msra.mxu0 0
        %430 = vmatprep.subr.bf16.mxu0 0
        %431 = vmatpush1.bf16.xpose.msra.mxu0 0
        %432 = vmatprep.subr.bf16.mxu0 0
        %433 = vmatpush1.bf16.xpose.msra.mxu0 0
        %434 = vmatprep.subr.bf16.mxu0 0
        %435 = vmatpush1.bf16.xpose.msra.mxu0 0
        %436 = vmatprep.subr.bf16.mxu0 0
        %437 = vmatpush1.bf16.xpose.msra.mxu0 0
        %438 = vmatprep.subr.bf16.mxu0 0
        %439 = vmatpush1.bf16.xpose.msra.mxu0 0
        %440 = vmatprep.subr.bf16.mxu0 0
        %441 = vmatpush1.bf16.xpose.msra.mxu0 0
        %442 = vmatprep.subr.bf16.mxu0 0
        %443 = vmatpush1.bf16.xpose.msra.mxu0 0
        %444 = vmatprep.subr.bf16.mxu0 0
        %445 = vmatpush1.bf16.xpose.msra.mxu0 0
        %446 = vmatprep.subr.bf16.mxu0 0
        %447 = vmatpush1.bf16.xpose.msra.mxu0 0
        %448 = vmatprep.subr.bf16.mxu0 0
        %449 = vmatpush1.bf16.xpose.msra.mxu0 0
        %450 = vmatprep.subr.bf16.mxu0 0
        %451 = vmatpush1.bf16.xpose.msra.mxu0 0
        %452 = vmatprep.subr.bf16.mxu0 0
        %453 = vmatpush1.bf16.xpose.msra.mxu0 0
        %454 = vmatprep.subr.bf16.mxu0 0
        %455 = vmatpush1.bf16.xpose.msra.mxu0 0
        %456 = vmatprep.subr.bf16.mxu0 0
        %457 = vmatpush1.bf16.xpose.msra.mxu0 0
        %458 = vmatprep.mubr.bf16.mxu0 0
        %459 = vmatmul.mubr.bf16.gmra.mrb[0].mxu0 %v421
        %v460 = vpop.f32.mrb[0].mxu0
        %v461 = vadd.f32 0.0, %v460
        %v462 = vpop.f32.mrb[0].mxu0
        %v463 = vpop.f32.mrb[0].mxu0
        %v464 = vpop.f32.mrb[0].mxu0
        %465 = vdwg.mxu0
        %v467 = vsel %vm327, %v318, 0
        %v470 = vsel %vm327, %v322, 0
        %472 = vmatprep.subr.bf16.mxu0 0
        %473 = vmatpush1.bf16.xpose.msra.mxu0 %v470
        %474 = vmatprep.subr.bf16.mxu0 0
        %475 = vmatpush1.bf16.xpose.msra.mxu0 0
        %476 = vmatprep.subr.bf16.mxu0 0
        %477 = vmatpush1.bf16.xpose.msra.mxu0 0
        %478 = vmatprep.subr.bf16.mxu0 0
        %479 = vmatpush1.bf16.xpose.msra.mxu0 0
        %480 = vmatprep.subr.bf16.mxu0 0
        %481 = vmatpush1.bf16.xpose.msra.mxu0 0
        %482 = vmatprep.subr.bf16.mxu0 0
        %483 = vmatpush1.bf16.xpose.msra.mxu0 0
        %484 = vmatprep.subr.bf16.mxu0 0
        %485 = vmatpush1.bf16.xpose.msra.mxu0 0
        %486 = vmatprep.subr.bf16.mxu0 0
        %487 = vmatpush1.bf16.xpose.msra.mxu0 0
        %488 = vmatprep.subr.bf16.mxu0 0
        %489 = vmatpush1.bf16.xpose.msra.mxu0 0
        %490 = vmatprep.subr.bf16.mxu0 0
        %491 = vmatpush1.bf16.xpose.msra.mxu0 0
        %492 = vmatprep.subr.bf16.mxu0 0
        %493 = vmatpush1.bf16.xpose.msra.mxu0 0
        %494 = vmatprep.subr.bf16.mxu0 0
        %495 = vmatpush1.bf16.xpose.msra.mxu0 0
        %496 = vmatprep.subr.bf16.mxu0 0
        %497 = vmatpush1.bf16.xpose.msra.mxu0 0
        %498 = vmatprep.subr.bf16.mxu0 0
        %499 = vmatpush1.bf16.xpose.msra.mxu0 0
        %500 = vmatprep.subr.bf16.mxu0 0
        %501 = vmatpush1.bf16.xpose.msra.mxu0 0
        %502 = vmatprep.subr.bf16.mxu0 0
        %503 = vmatpush1.bf16.xpose.msra.mxu0 0
        %504 = vmatprep.mubr.bf16.mxu0 0
        %505 = vmatmul.mubr.bf16.gmra.mrb[0].mxu0 %v467
        %v506 = vpop.f32.mrb[0].mxu0
        %v507 = vadd.f32 0.0, %v506
        %v508 = vpop.f32.mrb[0].mxu0
        %v509 = vpop.f32.mrb[0].mxu0
        %v510 = vpop.f32.mrb[0].mxu0
        %511 = vdwg.mxu0
        %v512 = vld [vmem:[#allocation2] sm:$0xff]
        %v513 = vld [vmem:[#allocation2 + $0x8] sm:$0xff]
        %v514 = vld [vmem:[#allocation2 + $0x10] sm:$0xff]
        %v515 = vld [vmem:[#allocation2 + $0x18] sm:$0xff]
        %v516 = vsel %vm327, %v369, -inf
        %517 = vmax.xlane.f32.xlu0 %v516
        %v518 = vpop.xlane.xlu0 %517
        %v519 = vsel %vm327, %v415, -inf
        %520 = vmax.xlane.f32.xlu0 %v519
        %v521 = vpop.xlane.xlu0 %520
        %v522 = vsel %vm327, %v461, -inf
        %523 = vmax.xlane.f32.xlu0 %v522
        %v524 = vpop.xlane.xlu0 %523
        %v525 = vsel %vm327, %v507, -inf
        %526 = vmax.xlane.f32.xlu0 %v525
        %v527 = vpop.xlane.xlu0 %526
        %v528 = vmax.f32 %v512, %v518
        %v529 = vmax.f32 %v513, %v521
        %v530 = vmax.f32 %v514, %v524
        %v531 = vmax.f32 %v515, %v527
        %v532 = vsub.f32 %v512, %v528
        %v533 = vsub.f32 %v513, %v529
        %v534 = vsub.f32 %v514, %v530
        %v535 = vsub.f32 %v515, %v531
        %v536 = vmul.f32 %v532, 1.442695
        %v537 = vpow.pop %v536
        %v538 = vmul.f32 %v533, 1.442695
        %v539 = vpow.pop %v538
        %v540 = vmul.f32 %v534, 1.442695
        %v541 = vpow.pop %v540
        %v542 = vmul.f32 %v535, 1.442695
        %v543 = vpow.pop %v542
        %545 = vset.pattern.permute.xlu0 0
        %546 = vperm.xlu0 %545, %v528
        %v547 = vpop.permute.xlu0 %546
        %550 = vset.pattern.permute.xlu0 0
        %551 = vperm.xlu0 %550, %v529
        %v552 = vpop.permute.xlu0 %551
        %555 = vset.pattern.permute.xlu0 0
        %556 = vperm.xlu0 %555, %v530
        %v557 = vpop.permute.xlu0 %556
        %560 = vset.pattern.permute.xlu0 0
        %561 = vperm.xlu0 %560, %v531
        %v562 = vpop.permute.xlu0 %561
        %v564 = vsub.f32 %v369, %v547
        %v565 = vsub.f32 %v415, %v552
        %v566 = vsub.f32 %v461, %v557
        %v567 = vsub.f32 %v507, %v562
        %v568 = vmul.f32 %v564, 1.442695
        %v569 = vpow.pop %v568
        %v570 = vmul.f32 %v565, 1.442695
        %v571 = vpow.pop %v570
        %v572 = vmul.f32 %v566, 1.442695
        %v573 = vpow.pop %v572
        %v574 = vmul.f32 %v567, 1.442695
        %v575 = vpow.pop %v574
        %v576 = vld [vmem:[#allocation3] sm:$0xff]
        %v577 = vld [vmem:[#allocation3 + $0x8] sm:$0xff]
        %v578 = vld [vmem:[#allocation3 + $0x10] sm:$0xff]
        %v579 = vld [vmem:[#allocation3 + $0x18] sm:$0xff]
        %v580 = vmul.f32 %v537, %v576
        %v581 = vmul.f32 %v539, %v577
        %v582 = vmul.f32 %v541, %v578
        %v583 = vmul.f32 %v543, %v579
        %v584 = vsel %vm327, %v569, 0.0
        %585 = vadd.xlane.f32.xlu0 %v584
        %v586 = vpop.xlane.xlu0 %585
        %v587 = vsel %vm327, %v571, 0.0
        %588 = vadd.xlane.f32.xlu0 %v587
        %v589 = vpop.xlane.xlu0 %588
        %v590 = vsel %vm327, %v573, 0.0
        %591 = vadd.xlane.f32.xlu0 %v590
        %v592 = vpop.xlane.xlu0 %591
        %v593 = vsel %vm327, %v575, 0.0
        %594 = vadd.xlane.f32.xlu0 %v593
        %v595 = vpop.xlane.xlu0 %594
        %v596 = vadd.f32 %v580, %v586
        %v597 = vadd.f32 %v581, %v589
        %v598 = vadd.f32 %v582, %v592
        %v599 = vadd.f32 %v583, %v595
        %vm600 = vcmask 7168
        %601 = vst.msk [vmem:[#allocation3] sm:$0xff] %vm600, %v596
        %602 = vst.msk [vmem:[#allocation3 + $0x8] sm:$0xff] %vm600, %v597
        %603 = vst.msk [vmem:[#allocation3 + $0x10] sm:$0xff] %vm600, %v598
        %604 = vst.msk [vmem:[#allocation3 + $0x18] sm:$0xff] %vm600, %v599
        %v605 = vld [vmem:[#allocation4] sm:$0xff]
        %v606 = vld [vmem:[#allocation4 + $0x8] sm:$0xff]
        %v607 = vld [vmem:[#allocation4 + $0x10] sm:$0xff]
        %v608 = vld [vmem:[#allocation4 + $0x18] sm:$0xff]
        %610 = vset.pattern.permute.xlu0 0
        %611 = vperm.xlu0 %610, %v537
        %v612 = vpop.permute.xlu0 %611
        %615 = vset.pattern.permute.xlu0 0
        %616 = vperm.xlu0 %615, %v539
        %v617 = vpop.permute.xlu0 %616
        %620 = vset.pattern.permute.xlu0 0
        %621 = vperm.xlu0 %620, %v541
        %v622 = vpop.permute.xlu0 %621
        %625 = vset.pattern.permute.xlu0 0
        %626 = vperm.xlu0 %625, %v543
        %v627 = vpop.permute.xlu0 %626
        %v629 = vmul.f32 %v612, %v605
        %v630 = vmul.f32 %v617, %v606
        %v631 = vmul.f32 %v622, %v607
        %v632 = vmul.f32 %v627, %v608
        %v633 = vpack.c.bf16 %v569, %v569
        %v634 = vpack.c.bf16 %v571, %v571
        %v635 = vpack.c.bf16 %v573, %v573
        %v636 = vpack.c.bf16 %v575, %v575
        %v638 = vsel %vm327, %v633, 0
        %vm640 = vcmask 1043456
        %v642 = vsel %vm640, %v323, 0
        %644 = vmatprep.subr.bf16.mxu0 0
        %645 = vmatpush1.bf16.msra.mxu0 %v642
        %646 = vmatprep.subr.bf16.mxu0 0
        %647 = vmatpush1.bf16.msra.mxu0 0
        %648 = vmatprep.subr.bf16.mxu0 0
        %649 = vmatpush1.bf16.msra.mxu0 0
        %650 = vmatprep.subr.bf16.mxu0 0
        %651 = vmatpush1.bf16.msra.mxu0 0
        %652 = vmatprep.subr.bf16.mxu0 0
        %653 = vmatpush1.bf16.msra.mxu0 0
        %654 = vmatprep.subr.bf16.mxu0 0
        %655 = vmatpush1.bf16.msra.mxu0 0
        %656 = vmatprep.subr.bf16.mxu0 0
        %657 = vmatpush1.bf16.msra.mxu0 0
        %658 = vmatprep.subr.bf16.mxu0 0
        %659 = vmatpush1.bf16.msra.mxu0 0
        %660 = vmatprep.subr.bf16.mxu0 0
        %661 = vmatpush1.bf16.msra.mxu0 0
        %662 = vmatprep.subr.bf16.mxu0 0
        %663 = vmatpush1.bf16.msra.mxu0 0
        %664 = vmatprep.subr.bf16.mxu0 0
        %665 = vmatpush1.bf16.msra.mxu0 0
        %666 = vmatprep.subr.bf16.mxu0 0
        %667 = vmatpush1.bf16.msra.mxu0 0
        %668 = vmatprep.subr.bf16.mxu0 0
        %669 = vmatpush1.bf16.msra.mxu0 0
        %670 = vmatprep.subr.bf16.mxu0 0
        %671 = vmatpush1.bf16.msra.mxu0 0
        %672 = vmatprep.subr.bf16.mxu0 0
        %673 = vmatpush1.bf16.msra.mxu0 0
        %674 = vmatprep.subr.bf16.mxu0 0
        %675 = vmatpush1.bf16.msra.mxu0 0
        %676 = vmatprep.mubr.bf16.mxu0 0
        %677 = vmatmul.mubr.bf16.gmra.mrb[0].mxu0 %v638
        %v678 = vpop.f32.mrb[0].mxu0
        %v679 = vadd.f32 0.0, %v678
        %v680 = vpop.f32.mrb[0].mxu0
        %v681 = vpop.f32.mrb[0].mxu0
        %v682 = vpop.f32.mrb[0].mxu0
        %683 = vdwg.mxu0
        %v685 = vsel %vm327, %v634, 0
        %v688 = vsel %vm640, %v324, 0
        %690 = vmatprep.subr.bf16.mxu0 0
        %691 = vmatpush1.bf16.msra.mxu0 %v688
        %692 = vmatprep.subr.bf16.mxu0 0
        %693 = vmatpush1.bf16.msra.mxu0 0
        %694 = vmatprep.subr.bf16.mxu0 0
        %695 = vmatpush1.bf16.msra.mxu0 0
        %696 = vmatprep.subr.bf16.mxu0 0
        %697 = vmatpush1.bf16.msra.mxu0 0
        %698 = vmatprep.subr.bf16.mxu0 0
        %699 = vmatpush1.bf16.msra.mxu0 0
        %700 = vmatprep.subr.bf16.mxu0 0
        %701 = vmatpush1.bf16.msra.mxu0 0
        %702 = vmatprep.subr.bf16.mxu0 0
        %703 = vmatpush1.bf16.msra.mxu0 0
        %704 = vmatprep.subr.bf16.mxu0 0
        %705 = vmatpush1.bf16.msra.mxu0 0
        %706 = vmatprep.subr.bf16.mxu0 0
        %707 = vmatpush1.bf16.msra.mxu0 0
        %708 = vmatprep.subr.bf16.mxu0 0
        %709 = vmatpush1.bf16.msra.mxu0 0
        %710 = vmatprep.subr.bf16.mxu0 0
        %711 = vmatpush1.bf16.msra.mxu0 0
        %712 = vmatprep.subr.bf16.mxu0 0
        %713 = vmatpush1.bf16.msra.mxu0 0
        %714 = vmatprep.subr.bf16.mxu0 0
        %715 = vmatpush1.bf16.msra.mxu0 0
        %716 = vmatprep.subr.bf16.mxu0 0
        %717 = vmatpush1.bf16.msra.mxu0 0
        %718 = vmatprep.subr.bf16.mxu0 0
        %719 = vmatpush1.bf16.msra.mxu0 0
        %720 = vmatprep.subr.bf16.mxu0 0
        %721 = vmatpush1.bf16.msra.mxu0 0
        %722 = vmatprep.mubr.bf16.mxu0 0
        %723 = vmatmul.mubr.bf16.gmra.mrb[0].mxu0 %v685
        %v724 = vpop.f32.mrb[0].mxu0
        %v725 = vadd.f32 0.0, %v724
        %v726 = vpop.f32.mrb[0].mxu0
        %v727 = vpop.f32.mrb[0].mxu0
        %v728 = vpop.f32.mrb[0].mxu0
        %729 = vdwg.mxu0
        %v731 = vsel %vm327, %v635, 0
        %v734 = vsel %vm640, %v325, 0
        %736 = vmatprep.subr.bf16.mxu0 0
        %737 = vmatpush1.bf16.msra.mxu0 %v734
        %738 = vmatprep.subr.bf16.mxu0 0
        %739 = vmatpush1.bf16.msra.mxu0 0
        %740 = vmatprep.subr.bf16.mxu0 0
        %741 = vmatpush1.bf16.msra.mxu0 0
        %742 = vmatprep.subr.bf16.mxu0 0
        %743 = vmatpush1.bf16.msra.mxu0 0
        %744 = vmatprep.subr.bf16.mxu0 0
        %745 = vmatpush1.bf16.msra.mxu0 0
        %746 = vmatprep.subr.bf16.mxu0 0
        %747 = vmatpush1.bf16.msra.mxu0 0
        %748 = vmatprep.subr.bf16.mxu0 0
        %749 = vmatpush1.bf16.msra.mxu0 0
        %750 = vmatprep.subr.bf16.mxu0 0
        %751 = vmatpush1.bf16.msra.mxu0 0
        %752 = vmatprep.subr.bf16.mxu0 0
        %753 = vmatpush1.bf16.msra.mxu0 0
        %754 = vmatprep.subr.bf16.mxu0 0
        %755 = vmatpush1.bf16.msra.mxu0 0
        %756 = vmatprep.subr.bf16.mxu0 0
        %757 = vmatpush1.bf16.msra.mxu0 0
        %758 = vmatprep.subr.bf16.mxu0 0
        %759 = vmatpush1.bf16.msra.mxu0 0
        %760 = vmatprep.subr.bf16.mxu0 0
        %761 = vmatpush1.bf16.msra.mxu0 0
        %762 = vmatprep.subr.bf16.mxu0 0
        %763 = vmatpush1.bf16.msra.mxu0 0
        %764 = vmatprep.subr.bf16.mxu0 0
        %765 = vmatpush1.bf16.msra.mxu0 0
        %766 = vmatprep.subr.bf16.mxu0 0
        %767 = vmatpush1.bf16.msra.mxu0 0
        %768 = vmatprep.mubr.bf16.mxu0 0
        %769 = vmatmul.mubr.bf16.gmra.mrb[0].mxu0 %v731
        %v770 = vpop.f32.mrb[0].mxu0
        %v771 = vadd.f32 0.0, %v770
        %v772 = vpop.f32.mrb[0].mxu0
        %v773 = vpop.f32.mrb[0].mxu0
        %v774 = vpop.f32.mrb[0].mxu0
        %775 = vdwg.mxu0
        %v777 = vsel %vm327, %v636, 0
        %v780 = vsel %vm640, %v326, 0
        %782 = vmatprep.subr.bf16.mxu0 0
        %783 = vmatpush1.bf16.msra.mxu0 %v780
        %784 = vmatprep.subr.bf16.mxu0 0
        %785 = vmatpush1.bf16.msra.mxu0 0
        %786 = vmatprep.subr.bf16.mxu0 0
        %787 = vmatpush1.bf16.msra.mxu0 0
        %788 = vmatprep.subr.bf16.mxu0 0
        %789 = vmatpush1.bf16.msra.mxu0 0
        %790 = vmatprep.subr.bf16.mxu0 0
        %791 = vmatpush1.bf16.msra.mxu0 0
        %792 = vmatprep.subr.bf16.mxu0 0
        %793 = vmatpush1.bf16.msra.mxu0 0
        %794 = vmatprep.subr.bf16.mxu0 0
        %795 = vmatpush1.bf16.msra.mxu0 0
        %796 = vmatprep.subr.bf16.mxu0 0
        %797 = vmatpush1.bf16.msra.mxu0 0
        %798 = vmatprep.subr.bf16.mxu0 0
        %799 = vmatpush1.bf16.msra.mxu0 0
        %800 = vmatprep.subr.bf16.mxu0 0
        %801 = vmatpush1.bf16.msra.mxu0 0
        %802 = vmatprep.subr.bf16.mxu0 0
        %803 = vmatpush1.bf16.msra.mxu0 0
        %804 = vmatprep.subr.bf16.mxu0 0
        %805 = vmatpush1.bf16.msra.mxu0 0
        %806 = vmatprep.subr.bf16.mxu0 0
        %807 = vmatpush1.bf16.msra.mxu0 0
        %808 = vmatprep.subr.bf16.mxu0 0
        %809 = vmatpush1.bf16.msra.mxu0 0
        %810 = vmatprep.subr.bf16.mxu0 0
        %811 = vmatpush1.bf16.msra.mxu0 0
        %812 = vmatprep.subr.bf16.mxu0 0
        %813 = vmatpush1.bf16.msra.mxu0 0
        %814 = vmatprep.mubr.bf16.mxu0 0
        %815 = vmatmul.mubr.bf16.gmra.mrb[0].mxu0 %v777
        %v816 = vpop.f32.mrb[0].mxu0
        %v817 = vadd.f32 0.0, %v816
        %v818 = vpop.f32.mrb[0].mxu0
        %v819 = vpop.f32.mrb[0].mxu0
        %v820 = vpop.f32.mrb[0].mxu0
        %821 = vdwg.mxu0
        %v822 = vadd.f32 %v629, %v679
        %v823 = vadd.f32 %v630, %v725
        %v824 = vadd.f32 %v631, %v771
        %v825 = vadd.f32 %v632, %v817
        %826 = vst.msk [vmem:[#allocation4] sm:$0xff] %vm327, %v822
        %827 = vst.msk [vmem:[#allocation4 + $0x8] sm:$0xff] %vm327, %v823
        %828 = vst.msk [vmem:[#allocation4 + $0x10] sm:$0xff] %vm327, %v824
        %829 = vst.msk [vmem:[#allocation4 + $0x18] sm:$0xff] %vm327, %v825
        %830 = vst.msk [vmem:[#allocation2] sm:$0xff] %vm600, %v528
        %831 = vst.msk [vmem:[#allocation2 + $0x8] sm:$0xff] %vm600, %v529
        %832 = vst.msk [vmem:[#allocation2 + $0x10] sm:$0xff] %vm600, %v530
        %833 = vst.msk [vmem:[#allocation2 + $0x18] sm:$0xff] %vm600, %v531
        // Predicated region
        $region49: #{transformer_forward.7} parent=31 // pred_check
          %p834 = pneg %p297
        $region50: #{transformer_forward.7} parent=31 // pred_check_branch
          %836 = sbr.rel (%p834) target = $region52
        $region51: #{transformer_forward.7} parent=31 // pred_region
          %v837 = vld [vmem:[#allocation4] sm:$0xff]
          %v838 = vld [vmem:[#allocation4 + $0x8] sm:$0xff]
          %v839 = vld [vmem:[#allocation4 + $0x10] sm:$0xff]
          %v840 = vld [vmem:[#allocation4 + $0x18] sm:$0xff]
          %v841 = vld [vmem:[#allocation3] sm:$0xff]
          %v842 = vld [vmem:[#allocation3 + $0x8] sm:$0xff]
          %v843 = vld [vmem:[#allocation3 + $0x10] sm:$0xff]
          %v844 = vld [vmem:[#allocation3 + $0x18] sm:$0xff]
          %846 = vset.pattern.permute.xlu0 0
          %847 = vperm.xlu0 %846, %v841
          %v848 = vpop.permute.xlu0 %847
          %851 = vset.pattern.permute.xlu0 0
          %852 = vperm.xlu0 %851, %v842
          %v853 = vpop.permute.xlu0 %852
          %856 = vset.pattern.permute.xlu0 0
          %857 = vperm.xlu0 %856, %v843
          %v858 = vpop.permute.xlu0 %857
          %861 = vset.pattern.permute.xlu0 0
          %862 = vperm.xlu0 %861, %v844
          %v863 = vpop.permute.xlu0 %862
          %v865 = vrcp.pop %v848
          %v866 = vmul.f32 %v837, %v865
          %v867 = vrcp.pop %v853
          %v868 = vmul.f32 %v838, %v867
          %v869 = vrcp.pop %v858
          %v870 = vmul.f32 %v839, %v869
          %v871 = vrcp.pop %v863
          %v872 = vmul.f32 %v840, %v871
          %v873 = vcombine.low %v866, %v870
          %v874 = vcombine.high %v866, %v870
          %v876 = vunpack.c.l.s4 1983009808
          %v877 = vunpack.c.0.s8 %v876
          %v878 = vlaneseq
          %v879 = vshrl.u32 %v878, 7
          %v880 = vsub.s32 %v877, %v879
          %v881 = vrot.slane %v873, %v880
          %v883 = vunpack.c.l.s4 1983009808
          %v884 = vunpack.c.0.s8 %v883
          %v885 = vlaneseq
          %v886 = vshrl.u32 %v885, 7
          %v887 = vsub.s32 %v884, %v886
          %v888 = vrot.slane %v874, %v887
          %v889 = vcombine.low %v868, %v872
          %v890 = vcombine.high %v868, %v872
          %v892 = vunpack.c.l.s4 1983009808
          %v893 = vunpack.c.0.s8 %v892
          %v894 = vlaneseq
          %v895 = vshrl.u32 %v894, 7
          %v896 = vsub.s32 %v893, %v895
          %v897 = vrot.slane %v889, %v896
          %v899 = vunpack.c.l.s4 1983009808
          %v900 = vunpack.c.0.s8 %v899
          %v901 = vlaneseq
          %v902 = vshrl.u32 %v901, 7
          %v903 = vsub.s32 %v900, %v902
          %v904 = vrot.slane %v890, %v903
          %v905 = vcombine.low %v881, %v897
          %v906 = vcombine.high %v881, %v897
          %v908 = vunpack.c.l.s4 1934713408
          %v909 = vunpack.c.0.s8 %v908
          %v910 = vlaneseq
          %v911 = vshrl.u32 %v910, 7
          %v912 = vsub.s32 %v909, %v911
          %v913 = vrot.slane %v905, %v912
          %v915 = vunpack.c.l.s4 1934713408
          %v916 = vunpack.c.0.s8 %v915
          %v917 = vlaneseq
          %v918 = vshrl.u32 %v917, 7
          %v919 = vsub.s32 %v916, %v918
          %v920 = vrot.slane %v906, %v919
          %v921 = vcombine.low %v888, %v904
          %v922 = vcombine.high %v888, %v904
          %v924 = vunpack.c.l.s4 1934713408
          %v925 = vunpack.c.0.s8 %v924
          %v926 = vlaneseq
          %v927 = vshrl.u32 %v926, 7
          %v928 = vsub.s32 %v925, %v927
          %v929 = vrot.slane %v921, %v928
          %v931 = vunpack.c.l.s4 1934713408
          %v932 = vunpack.c.0.s8 %v931
          %v933 = vlaneseq
          %v934 = vshrl.u32 %v933, 7
          %v935 = vsub.s32 %v932, %v934
          %v936 = vrot.slane %v922, %v935
          %v937 = vcombine.high %v913, 0.0
          %v938 = vcombine.high %v920, 0.0
          %v939 = vcombine.high %v929, 0.0
          %v940 = vcombine.high %v936, 0.0
          %v941 = vcombine.low %v913, %v920
          %v943 = vunpack.c.l.s4 1983009808
          %v944 = vunpack.c.0.s8 %v943
          %v945 = vlaneseq
          %v946 = vshrl.u32 %v945, 7
          %v947 = vsub.s32 %v944, %v946
          %v948 = vrot.slane %v941, %v947
          %v949 = vcombine.low %v937, %v938
          %v951 = vunpack.c.l.s4 1983009808
          %v952 = vunpack.c.0.s8 %v951
          %v953 = vlaneseq
          %v954 = vshrl.u32 %v953, 7
          %v955 = vsub.s32 %v952, %v954
          %v956 = vrot.slane %v949, %v955
          %v957 = vcombine.low %v929, %v936
          %v959 = vunpack.c.l.s4 1983009808
          %v960 = vunpack.c.0.s8 %v959
          %v961 = vlaneseq
          %v962 = vshrl.u32 %v961, 7
          %v963 = vsub.s32 %v960, %v962
          %v964 = vrot.slane %v957, %v963
          %v965 = vcombine.low %v939, %v940
          %v967 = vunpack.c.l.s4 1983009808
          %v968 = vunpack.c.0.s8 %v967
          %v969 = vlaneseq
          %v970 = vshrl.u32 %v969, 7
          %v971 = vsub.s32 %v968, %v970
          %v972 = vrot.slane %v965, %v971
          %v973 = vcombine.low %v948, %v956
          %v974 = vcombine.high %v948, %v956
          %v976 = vunpack.c.l.s4 1934713408
          %v977 = vunpack.c.0.s8 %v976
          %v978 = vlaneseq
          %v979 = vshrl.u32 %v978, 7
          %v980 = vsub.s32 %v977, %v979
          %v981 = vrot.slane %v973, %v980
          %v983 = vunpack.c.l.s4 1934713408
          %v984 = vunpack.c.0.s8 %v983
          %v985 = vlaneseq
          %v986 = vshrl.u32 %v985, 7
          %v987 = vsub.s32 %v984, %v986
          %v988 = vrot.slane %v974, %v987
          %v989 = vcombine.low %v964, %v972
          %v990 = vcombine.high %v964, %v972
          %v992 = vunpack.c.l.s4 1934713408
          %v993 = vunpack.c.0.s8 %v992
          %v994 = vlaneseq
          %v995 = vshrl.u32 %v994, 7
          %v996 = vsub.s32 %v993, %v995
          %v997 = vrot.slane %v989, %v996
          %v999 = vunpack.c.l.s4 1934713408
          %v1000 = vunpack.c.0.s8 %v999
          %v1001 = vlaneseq
          %v1002 = vshrl.u32 %v1001, 7
          %v1003 = vsub.s32 %v1000, %v1002
          %v1004 = vrot.slane %v990, %v1003
          %v1005 = vcombine.low %v981, %v997
          %v1006 = vcombine.high %v981, %v997
          %v1007 = vcombine.low %v988, %v1004
          %v1008 = vcombine.high %v988, %v1004
          %1010 = vrot.lane.b32.xlu0 %v1006, 8
          %v1011 = vpop.permute.xlu0 %1010
          %1014 = vrot.lane.b32.xlu0 %v1007, 16
          %v1015 = vpop.permute.xlu0 %1014
          %1018 = vrot.lane.b32.xlu0 %v1008, 24
          %v1019 = vpop.permute.xlu0 %1018
          %v1021 = vsel %vm327, %v1005, %v1011
          %vm1022 = vcmask 130048
          %v1023 = vsel %vm1022, %v1021, %v1015
          %vm1024 = vcmask 195584
          %v1025 = vsel %vm1024, %v1023, %v1019
          %v1026 = vpack.c.bf16 %v1025, %v1025
          %vm1027 = vcmask 257024
          %1028 = vst.msk [vmem:[%s295] sm:$0xf] %vm1027, %v1026
        $region52: #{transformer_forward.7} parent=31 // pred_fallthru
          _
        %s1029 = sand.u32 %s136, 1
        %s1030 = scalar_lea.sflag [#allocation7], %s1029
        %s1031 = sand.u32 %s136, 1
        %s1032 = smul.addr %s1031, 4
        %s1033 = scalar_lea.vmem [#allocation11], %s1032
        // Predicated region
        $region53: #{transformer_forward.7} parent=31 // pred_check
          %p1034 = pneg %p146
        $region54: #{transformer_forward.7} parent=31 // pred_check_branch
          %1036 = sbr.rel (%p1034) target = $region56
        $region55: #{transformer_forward.7} parent=31 // pred_region
          %s1038 = ssub.s32 64, 64
          %1039 = vsyncadd %s1030, %s1038
          %s1040 = sadd.s32 %s29, %s28
          %s1041 = smul.addr %s1040, 64
          %s1042 = scalar_lea.hbm %s3, %s1041
          %s1044 = sshll.u32 %s1033, 4
          %s1045 = int_to_ptr.vmem [resolvable:$true] %s1044
          %1047 = dma.vmem_to_hbm [thread:$0]  %s1045, 64, %s1042, %s1030
        $region56: #{transformer_forward.7} parent=31 // pred_fallthru
          _
      $region32: #{transformer_forward.7} parent=5 // pred_fallthru
        _
      %p1048 = scmp.le.s32.totalorder 2, %s18
      // Predicated region
      $region57: #{transformer_forward.7} parent=5 // pred_check
        %p1049 = pneg %p1048
      $region58: #{transformer_forward.7} parent=5 // pred_check_branch
        %1051 = sbr.rel (%p1049) target = $region60
      $region59: #{transformer_forward.7} parent=5 // pred_region
        %s1052 = ssub.s32 %s18, 2
        // Predicated region
        $region61: #{transformer_forward.7} parent=59 // pred_check
          %p1053 = pneg %p152
        $region62: #{transformer_forward.7} parent=59 // pred_check_branch
          %1055 = sbr.rel (%p1053) target = $region64
        $region63: #{transformer_forward.7} parent=59 // pred_region
          %s1056 = sand.u32 %s137, 1
          %s1057 = scalar_lea.sflag [#allocation7], %s1056
          %s1058 = sand.u32 %s137, 1
          %s1059 = smul.addr %s1058, 4
          %s1060 = scalar_lea.vmem [#allocation11], %s1059
          %1061 = dma.done %s1057, 64
        $region64: #{transformer_forward.7} parent=59 // pred_fallthru
          _
      $region60: #{transformer_forward.7} parent=5 // pred_fallthru
        _
    $region6: #{transformer_forward.7} parent=1 // loop_footer
      %s22 = sadd.s32 1, %s18
    $region7: #{transformer_forward.7} parent=1 // loop_footer_branch
      %17 = sbr.rel target = $region3
    $region8: #{transformer_forward.7} parent=1 // loop_exit
      _
    %1062 = vsyncpa [#allocation6], 1
    %s1063 = scalar_lea.sflag [#allocation6], 1
    %1064 = vsyncpa %s1063, 1
    %1065 = vsyncpa [#allocation9], 1
    %s1066 = scalar_lea.sflag [#allocation9], 1
    %1067 = vsyncpa %s1066, 1
    %1068 = vsyncpa [#allocation7], 1
    %s1069 = scalar_lea.sflag [#allocation7], 1
    %1070 = vsyncpa %s1069, 1

</llo_original>
